<compile_context>
chip_gen: v5e
topology: v5e:2x2
jax: 0.10.0
libtpu: 0.0.40
codegen_flags: <defaults>
</compile_context>

<pallas_src>
import math
from functools import partial

import jax
import jax.numpy as jnp
from jax.experimental import pallas as pl
from jax.experimental.pallas import tpu as pltpu

_HIGHEST = jax.lax.Precision.HIGHEST


# ----------------------------------------------------------------------------------
# 1) grouped / batched matmul: (G, M, K) @ (G, K, N) -> (G, M, N)
# ----------------------------------------------------------------------------------
def bmm_kernel(x_ref, w_ref, o_ref):
    o_ref[...] = jnp.dot(x_ref[...], w_ref[...],
                         preferred_element_type=jnp.float32).astype(o_ref.dtype)


def batched_matmul(x, w, tile_m=512):
    """Tiled over the token dim M; the (K, N) weight block stays resident in VMEM."""
    G, M, Kd = x.shape
    N = w.shape[-1]
    tm = min(tile_m, M)
    cost = pl.CostEstimate(flops=2 * G * M * Kd * N, transcendentals=0,
                           bytes_accessed=4 * G * (M * Kd + Kd * N + M * N))
    return pl.pallas_call(
        bmm_kernel,
        out_shape=jax.ShapeDtypeStruct((G, M, N), jnp.float32),
        grid_spec=pltpu.PrefetchScalarGridSpec(
            num_scalar_prefetch=0,
            grid=(G, pl.cdiv(M, tm)),
            in_specs=[
                pl.BlockSpec((None, tm, Kd), lambda g, i: (g, i, 0)),
                pl.BlockSpec((None, Kd, N), lambda g, i: (g, 0, 0)),
            ],
            out_specs=pl.BlockSpec((None, tm, N), lambda g, i: (g, i, 0)),
        ),
        compiler_params=pltpu.CompilerParams(
            dimension_semantics=("parallel", "parallel")),
        cost_estimate=cost,
    )(x, w)


# ----------------------------------------------------------------------------------
# 2) depthwise 3x3 conv + bias + SiLU (one padded image per grid step, no halo copies)
# ----------------------------------------------------------------------------------
def dwconv_silu_kernel(x_ref, w_ref, b_ref, o_ref):
    # x_ref: (H+2, W+2, C) padded image;  w_ref: (3, 3, 1, C);  b_ref: (1, C);  o_ref: (H, W, C)
    H, W, C = o_ref.shape
    acc = jnp.zeros((H, W, C), jnp.float32)
    for dy in range(3):
        for dx in range(3):
            acc = acc + x_ref[dy:dy + H, dx:dx + W, :] * w_ref[dy, dx]
    acc = acc + b_ref[...]
    o_ref[...] = (acc * (1.0 / (1.0 + jnp.exp(-acc)))).astype(o_ref.dtype)   # SiLU


def dwconv_silu(x, w, b):
    """x: (B, H, W, C) channels-last, depthwise 3x3, padding 1.
    TODO(synk): tile over H rows for large images (v7x VMEM)."""
    bsz, H, W, C = x.shape
    xp = jnp.pad(x, ((0, 0), (1, 1), (1, 1), (0, 0)))
    return pl.pallas_call(
        dwconv_silu_kernel,
        out_shape=jax.ShapeDtypeStruct((bsz, H, W, C), jnp.float32),
        grid_spec=pltpu.PrefetchScalarGridSpec(
            num_scalar_prefetch=0,
            grid=(bsz,),
            in_specs=[
                pl.BlockSpec((None, H + 2, W + 2, C), lambda i: (i, 0, 0, 0)),
                pl.BlockSpec((3, 3, 1, C), lambda i: (0, 0, 0, 0)),
                pl.BlockSpec((1, C), lambda i: (0, 0)),
            ],
            out_specs=pl.BlockSpec((None, H, W, C), lambda i: (i, 0, 0, 0)),
        ),
        compiler_params=pltpu.CompilerParams(dimension_semantics=("parallel",)),
    )(xp, w, b.reshape(1, C))


# ----------------------------------------------------------------------------------
# 3) selective scan: 4 directions lane-packed (DD = K*d_inner), grid over batch.
# ----------------------------------------------------------------------------------
def scan_kernel(u_ref, dt_ref, A_ref, B_ref, C_ref, D_ref, bias_ref, E_ref,
                o_ref, *, chunk):
    # u_ref, dt_ref, o_ref : (L, DD)    DD = K * d_inner  (lane = k*d_inner + j)
    # A_ref                : (n, DD)
    # B_ref, C_ref         : (L, n, K)  (no trailing singleton)
    # D_ref, bias_ref      : (1, DD)
    # E_ref                : (K, DD)    one-hot direction -> lane-group selector
    L, DD = u_ref.shape
    n, K = B_ref.shape[1], B_ref.shape[2]
    Lc = chunk
    A = A_ref[...]
    Dv = D_ref[...]
    bias = bias_ref[...]
    Ev = E_ref[...]

    def chunk_body(c, h):
        off = pl.multiple_of(c * Lc, Lc)
        # ---- vectorized prologue over the chunk (off the per-step dependency chain) ----
        u_c = u_ref[pl.ds(off, Lc), :]                                   # (Lc, DD)
        dt_c = dt_ref[pl.ds(off, Lc), :] + bias                          # (Lc, DD)
        # softplus (delta_softplus=True), numerically stable
        delta = jnp.maximum(dt_c, 0.0) + jnp.log(1.0 + jnp.exp(-jnp.abs(dt_c)))
        du = delta * u_c                                                 # (Lc, DD)
        dA = jnp.exp(delta[:, None, :] * A[None, :, :])                  # (Lc, n, DD)

        B_c = B_ref[pl.ds(off, Lc)]                                      # (Lc, n, K)
        C_c = C_ref[pl.ds(off, Lc)]                                      # (Lc, n, K)
        B_exp = jnp.zeros((Lc, n, DD), jnp.float32)
        C_exp = jnp.zeros((Lc, n, DD), jnp.float32)
        for k in range(K):                                               # static, K=4
            Ek = Ev[k:k + 1, :][None, :, :]                              # (1, 1, DD)
            B_exp = B_exp + B_c[:, :, k:k + 1] * Ek
            C_exp = C_exp + C_c[:, :, k:k + 1] * Ek
        dBu = B_exp * du[:, None, :]                                     # (Lc, n, DD)
        Du = Dv * u_c                                                    # (Lc, DD)

        # ---- sequential recurrence: 2 FMAs + 1 cross-sublane reduce per step ----
        ys = []
        for t in range(Lc):                                              # static unroll
            h = dA[t] * h + dBu[t]                                       # (n, DD)
            ys.append(jnp.sum(C_exp[t] * h, axis=0, keepdims=True)
                      + Du[t:t + 1, :])                                  # (1, DD)
        o_ref[pl.ds(off, Lc), :] = jnp.concatenate(ys, axis=0).astype(o_ref.dtype)
        return h

    jax.lax.fori_loop(0, L // Lc, chunk_body, jnp.zeros((n, DD), jnp.float32))


def selective_scan(u_pk, dt_pk, A_pk, B_s, C_s, D_pk, bias_pk, E, chunk):
    # TODO(synk): add an "arbitrary" L-chunk grid axis (h in scratch, pl.when init) for large L.
    bsz, L, DD = u_pk.shape
    n = A_pk.shape[0]
    K = B_s.shape[-1]
    return pl.pallas_call(
        partial(scan_kernel, chunk=chunk),
        out_shape=jax.ShapeDtypeStruct((bsz, L, DD), jnp.float32),
        grid_spec=pltpu.PrefetchScalarGridSpec(
            num_scalar_prefetch=0,
            grid=(bsz,),
            in_specs=[
                pl.BlockSpec((None, L, DD), lambda b: (b, 0, 0)),         # u
                pl.BlockSpec((None, L, DD), lambda b: (b, 0, 0)),         # dt
                pl.BlockSpec((n, DD), lambda b: (0, 0)),                  # A
                pl.BlockSpec((None, L, n, K), lambda b: (b, 0, 0, 0)),    # B
                pl.BlockSpec((None, L, n, K), lambda b: (b, 0, 0, 0)),    # C
                pl.BlockSpec((1, DD), lambda b: (0, 0)),                  # D
                pl.BlockSpec((1, DD), lambda b: (0, 0)),                  # dt bias
                pl.BlockSpec((K, DD), lambda b: (0, 0)),                  # direction selector
            ],
            out_specs=pl.BlockSpec((None, L, DD), lambda b: (b, 0, 0)),
        ),
        compiler_params=pltpu.CompilerParams(dimension_semantics=("parallel",)),
    )(u_pk, dt_pk, A_pk, B_s, C_s, D_pk, bias_pk, E)


# ----------------------------------------------------------------------------------
# 4) fused LayerNorm + SiLU(z) gate + out_proj
# ----------------------------------------------------------------------------------
def ln_gate_proj_kernel(y_ref, z_ref, g_ref, b_ref, w_ref, o_ref):
    y = y_ref[...]
    z = z_ref[...]
    mu = jnp.mean(y, axis=-1, keepdims=True)
    yc = y - mu
    var = jnp.mean(yc * yc, axis=-1, keepdims=True)
    yn = yc * jax.lax.rsqrt(var + 1e-5)
    yn = yn * g_ref[...] + b_ref[...]
    gate = z * (1.0 / (1.0 + jnp.exp(-z)))                               # SiLU(z)
    o_ref[...] = jnp.dot(yn * gate, w_ref[...],
                         preferred_element_type=jnp.float32).astype(o_ref.dtype)


def ln_gate_proj(y, z, gamma, beta, w_out, tile_m=512):
    M, d = y.shape
    dm = w_out.shape[-1]
    tm = min(tile_m, M)
    return pl.pallas_call(
        ln_gate_proj_kernel,
        out_shape=jax.ShapeDtypeStruct((M, dm), jnp.float32),
        grid_spec=pltpu.PrefetchScalarGridSpec(
            num_scalar_prefetch=0,
            grid=(pl.cdiv(M, tm),),
            in_specs=[
                pl.BlockSpec((tm, d), lambda i: (i, 0)),
                pl.BlockSpec((tm, d), lambda i: (i, 0)),
                pl.BlockSpec((1, d), lambda i: (0, 0)),
                pl.BlockSpec((1, d), lambda i: (0, 0)),
                pl.BlockSpec((d, dm), lambda i: (0, 0)),
            ],
            out_specs=pl.BlockSpec((tm, dm), lambda i: (i, 0)),
        ),
        compiler_params=pltpu.CompilerParams(dimension_semantics=("parallel",)),
    )(y, z, gamma.reshape(1, d), beta.reshape(1, d), w_out)


# ----------------------------------------------------------------------------------
# Full SS2D forward (Pallas path)
# ----------------------------------------------------------------------------------
def ss2d_forward(x, p):
    bsz, H, W, d_model = x.shape
    d_inner = p['w_in'].shape[1] // 2
    d_state = p['A_logs'].shape[1]
    Kdir = p['x_proj_w'].shape[0]
    dt_rank = p['dt_projs_w'].shape[2]
    L = H * W
    M = bsz * L
    DD = Kdir * d_inner

    # in_proj (Pallas), split into x and gate z
    xz = batched_matmul(x.reshape(1, M, d_model), p['w_in'][None])[0]       # (M, 2*d_inner)
    xz = xz.reshape(bsz, H, W, 2 * d_inner)
    x_in, z = xz[..., :d_inner], xz[..., d_inner:]

    # depthwise 3x3 conv + SiLU (Pallas)
    xc = dwconv_silu(x_in, p['conv_w'], p['conv_b'])                        # (bsz,H,W,d_inner)

    # build the 4 scan orders (row-major, col-major, and their reverses)
    x_hw = xc.reshape(bsz, L, d_inner)                                      # l = h*W + w
    x_wh = jnp.transpose(xc, (0, 2, 1, 3)).reshape(bsz, L, d_inner)         # l = w*H + h
    xs = jnp.stack([x_hw, x_wh, x_hw[:, ::-1], x_wh[:, ::-1]], axis=1)      # (bsz,K,L,d)

    # x_proj with dt_projs folded in -> one bmm emits (d_inner + 2n) dense columns
    w_dt = jnp.einsum('krd,ker->kde', p['x_proj_w'][:, :dt_rank, :],
                      p['dt_projs_w'], precision=_HIGHEST)                  # (K, d, d)
    w_bc = jnp.transpose(p['x_proj_w'][:, dt_rank:, :], (0, 2, 1))          # (K, d, 2n)
    w_comb = jnp.concatenate([w_dt, w_bc], axis=-1)                         # (K, d, d+2n)

    xs_k = jnp.transpose(xs, (1, 0, 2, 3)).reshape(Kdir, M, d_inner)
    x_dbl = batched_matmul(xs_k, w_comb)                                    # (K, M, d+2n)
    dts = x_dbl[..., :d_inner]
    Bs = x_dbl[..., d_inner:d_inner + d_state]
    Cs = x_dbl[..., d_inner + d_state:]

    # pack the 4 directions into the lane dim (lane = k*d_inner + j) -- XLA glue
    # TODO(synk): fold these transposes into the bmm out_spec / scan index_maps.
    u_pk = jnp.transpose(xs, (0, 2, 1, 3)).reshape(bsz, L, DD)
    dt_pk = jnp.transpose(dts.reshape(Kdir, bsz, L, d_inner),
                          (1, 2, 0, 3)).reshape(bsz, L, DD)
    B_s = jnp.transpose(Bs.reshape(Kdir, bsz, L, d_state), (1, 2, 3, 0))    # (bsz,L,n,K)
    C_s = jnp.transpose(Cs.reshape(Kdir, bsz, L, d_state), (1, 2, 3, 0))
    A_pk = jnp.transpose(-jnp.exp(p['A_logs']), (1, 0))                     # (n, DD)
    D_pk = p['Ds'].reshape(1, DD)
    bias_pk = p['dt_projs_bias'].reshape(1, DD)
    E = (jnp.arange(DD)[None, :] // d_inner ==
         jnp.arange(Kdir)[:, None]).astype(jnp.float32)                     # (K, DD)

    Lc = next(c for c in (8, 4, 2, 1) if L % c == 0)
    ys_pk = selective_scan(u_pk, dt_pk, A_pk, B_s, C_s, D_pk, bias_pk, E, Lc)

    # merge the 4 directions back into row-major (h, w) order
    ys = jnp.transpose(ys_pk.reshape(bsz, L, Kdir, d_inner), (0, 2, 1, 3))  # (bsz,K,L,d)
    y1 = ys[:, 0]
    y2 = ys[:, 2, ::-1]
    y3 = jnp.transpose(ys[:, 1].reshape(bsz, W, H, d_inner),
                       (0, 2, 1, 3)).reshape(bsz, L, d_inner)
    y4 = jnp.transpose(ys[:, 3, ::-1].reshape(bsz, W, H, d_inner),
                       (0, 2, 1, 3)).reshape(bsz, L, d_inner)
    y = y1 + y2 + y3 + y4                                                   # (bsz,L,d)

    # fused LayerNorm + SiLU(z) gate + out_proj (Pallas); dropout p=0.0 -> identity
    out = ln_gate_proj(y.reshape(M, d_inner), z.reshape(M, d_inner),
                       p['ln_g'], p['ln_b'], p['w_out'])                    # (M, d_model)
    return out.reshape(bsz, H, W, d_model)


# ----------------------------------------------------------------------------------
# Pure-JAX reference (mirrors the PyTorch code, torch-style channels-first layout)
# ----------------------------------------------------------------------------------
def selective_scan_reference(u, delta, A, Bmat, Cmat, D, delta_bias):
    bsz, G, L = u.shape
    Kdir = Bmat.shape[1]
    d_in = G // Kdir
    N = A.shape[1]
    delta = jax.nn.softplus(delta + delta_bias[None, :, None])
    Bexp = jnp.repeat(Bmat, d_in, axis=1)                                   # (bsz,G,N,L)
    Cexp = jnp.repeat(Cmat, d_in, axis=1)
    dA = jnp.exp(delta[:, :, None, :] * A[None, :, :, None])
    dBu = delta[:, :, None, :] * Bexp * u[:, :, None, :]

    def step(h, t):
        dA_t, dBu_t, C_t = t
        h = dA_t * h + dBu_t
        return h, jnp.sum(h * C_t, axis=-1)

    h0 = jnp.zeros((bsz, G, N), jnp.float32)
    seq = (jnp.moveaxis(dA, -1, 0), jnp.moveaxis(dBu, -1, 0), jnp.moveaxis(Cexp, -1, 0))
    _, ys = jax.lax.scan(step, h0, seq)
    return jnp.moveaxis(ys, 0, -1) + D[None, :, None] * u


def ss2d_reference(x, p):
    bsz, H, W, d_model = x.shape
    d_inner = p['w_in'].shape[1] // 2
    d_state = p['A_logs'].shape[1]
    Kdir = p['x_proj_w'].shape[0]
    dt_rank = p['dt_projs_w'].shape[2]
    L = H * W

    xz = jnp.einsum('bhwc,cf->bhwf', x, p['w_in'], precision=_HIGHEST)
    x_in, z = xz[..., :d_inner], xz[..., d_inner:]

    xc = jnp.transpose(x_in, (0, 3, 1, 2))
    wt = jnp.transpose(p['conv_w'], (3, 2, 0, 1))                           # (d_inner,1,3,3)
    xc = jax.lax.conv_general_dilated(
        xc, wt, window_strides=(1, 1), padding=((1, 1), (1, 1)),
        feature_group_count=d_inner,
        dimension_numbers=('NCHW', 'OIHW', 'NCHW'), precision=_HIGHEST)
    xc = xc + p['conv_b'].reshape(1, d_inner, 1, 1)
    xc = xc * jax.nn.sigmoid(xc)

    x_flat = xc.reshape(bsz, d_inner, L)
    x_wh = jnp.transpose(xc, (0, 1, 3, 2)).reshape(bsz, d_inner, L)
    x_hwwh = jnp.stack([x_flat, x_wh], axis=1)
    xs = jnp.concatenate([x_hwwh, x_hwwh[..., ::-1]], axis=1)               # (bsz,4,d,L)

    x_dbl = jnp.einsum('bkdl,kcd->bkcl', xs, p['x_proj_w'], precision=_HIGHEST)
    dts = x_dbl[:, :, :dt_rank]
    Bss = x_dbl[:, :, dt_rank:dt_rank + d_state]
    Css = x_dbl[:, :, dt_rank + d_state:]
    dts = jnp.einsum('bkrl,kdr->bkdl', dts, p['dt_projs_w'], precision=_HIGHEST)

    out_y = selective_scan_reference(
        xs.reshape(bsz, Kdir * d_inner, L), dts.reshape(bsz, Kdir * d_inner, L),
        -jnp.exp(p['A_logs']), Bss, Css, p['Ds'], p['dt_projs_bias'].reshape(-1))
    out_y = out_y.reshape(bsz, Kdir, d_inner, L)
    inv_y = out_y[:, 2:4, :, ::-1]
    wh_y = jnp.transpose(out_y[:, 1].reshape(bsz, d_inner, W, H),
                         (0, 1, 3, 2)).reshape(bsz, d_inner, L)
    invwh_y = jnp.transpose(inv_y[:, 1].reshape(bsz, d_inner, W, H),
                            (0, 1, 3, 2)).reshape(bsz, d_inner, L)
    y = out_y[:, 0] + inv_y[:, 0] + wh_y + invwh_y
    y = jnp.transpose(y, (0, 2, 1)).reshape(bsz, H, W, d_inner)

    mu = jnp.mean(y, axis=-1, keepdims=True)
    var = jnp.mean((y - mu) ** 2, axis=-1, keepdims=True)
    y = (y - mu) / jnp.sqrt(var + 1e-5) * p['ln_g'] + p['ln_b']
    y = y * (z * jax.nn.sigmoid(z))
    return jnp.einsum('bhwd,dm->bhwm', y, p['w_out'], precision=_HIGHEST)


# ----------------------------------------------------------------------------------
if __name__ == "__main__":
    d_model, d_state, d_conv, expand = 16, 16, 3, 2
    d_inner = expand * d_model            # 32  -> DD = 4*32 = 128 lanes, fully dense
    dt_rank = max(1, math.ceil(d_model / 16))
    Kdir = 4
    bsz, H, W = 2, 8, 8

    key = jax.random.PRNGKey(0)
    ks = jax.random.split(key, 12)

    def unif(k, shape, s):
        return jax.random.uniform(k, shape, minval=-s, maxval=s, dtype=jnp.float32)

    dt = jnp.exp(jax.random.uniform(ks[5], (Kdir, d_inner), dtype=jnp.float32)
                 * (math.log(0.1) - math.log(0.001)) + math.log(0.001))
    dt = jnp.maximum(dt, 1e-4)
    params = {
        'w_in': unif(ks[0], (d_model, 2 * d_inner), d_model ** -0.5),
        'conv_w': unif(ks[1], (d_conv, d_conv, 1, d_inner), (d_conv * d_conv) ** -0.5),
        'conv_b': unif(ks[2], (d_inner,), (d_conv * d_conv) ** -0.5),
        'x_proj_w': unif(ks[3], (Kdir, dt_rank + 2 * d_state, d_inner), d_inner ** -0.5),
        'dt_projs_w': unif(ks[4], (Kdir, d_inner, dt_rank), dt_rank ** -0.5),
        'dt_projs_bias': dt + jnp.log(-jnp.expm1(-dt)),
        'A_logs': (jnp.log(jnp.tile(jnp.arange(1, d_state + 1, dtype=jnp.float32)[None, :],
                                    (Kdir * d_inner, 1)))
                   + 0.05 * jax.random.normal(ks[6], (Kdir * d_inner, d_state),
                                              dtype=jnp.float32)),
        'Ds': jnp.ones((Kdir * d_inner,), jnp.float32),
        'ln_g': 1.0 + 0.1 * jax.random.normal(ks[7], (d_inner,), dtype=jnp.float32),
        'ln_b': 0.05 * jax.random.normal(ks[8], (d_inner,), dtype=jnp.float32),
        'w_out': unif(ks[9], (d_inner, d_model), d_inner ** -0.5),
    }
    x = jax.random.normal(ks[10], (bsz, H, W, d_model), dtype=jnp.float32)

    out = jax.jit(ss2d_forward)(x, params)
    out = jax.block_until_ready(out)

    ref = ss2d_reference(x, params)
    assert out.shape == (bsz, H, W, d_model)
    assert bool(jnp.all(jnp.isfinite(out)))
    assert bool(jnp.allclose(out, ref, atol=2e-3, rtol=2e-3)), "mismatch vs reference"
    print("KERNEL_OK")
</pallas_src>

<mosaic_0001>
module attributes {stable_mosaic.version = 11 : i64} {
  func.func @bmm_kernel(%arg0: i32, %arg1: i32, %arg2: memref<1x128x16xf32, #tpu.memory_space<vmem>>, %arg3: memref<1x16x64xf32, #tpu.memory_space<vmem>>, %arg4: memref<1x128x64xf32, #tpu.memory_space<vmem>>) attributes {dimension_semantics = [#tpu.dimension_semantics<parallel>, #tpu.dimension_semantics<parallel>], iteration_bounds = array<i64: 1, 1>, scalar_prefetch = 0 : i64, scratch_operands = 0 : i64, tpu.core_type = #tpu.core_type<tc>, window_params = [{transform_indices = @transform_0, window_bounds = array<i64: 1, 128, 16>}, {transform_indices = @transform_1, window_bounds = array<i64: 1, 16, 64>}, {transform_indices = @transform_2, window_bounds = array<i64: 1, 128, 64>}]} {
    %c0 = arith.constant 0 : index
    %c0_0 = arith.constant 0 : index
    %c0_1 = arith.constant 0 : index
    %0 = vector.load %arg2[%c0, %c0_0, %c0_1] : memref<1x128x16xf32, #tpu.memory_space<vmem>>, vector<1x128x16xf32>
    %1 = vector.shape_cast %0 : vector<1x128x16xf32> to vector<128x16xf32>
    %c0_2 = arith.constant 0 : index
    %c0_3 = arith.constant 0 : index
    %c0_4 = arith.constant 0 : index
    %2 = vector.load %arg3[%c0_2, %c0_3, %c0_4] : memref<1x16x64xf32, #tpu.memory_space<vmem>>, vector<1x16x64xf32>
    %3 = vector.shape_cast %2 : vector<1x16x64xf32> to vector<16x64xf32>
    %cst = arith.constant dense<0.000000e+00> : vector<128x64xf32>
    %4 = tpu.matmul %1, %3, %cst {dimension_numbers = #tpu.dot_dimension_numbers<[1], [0], [0], [1], [0, 0, 1, 1], [], []>} : vector<128x16xf32>, vector<16x64xf32>, vector<128x64xf32> -> vector<128x64xf32>
    %c0_5 = arith.constant 0 : index
    %c0_6 = arith.constant 0 : index
    %c0_7 = arith.constant 0 : index
    %5 = vector.load %arg4[%c0_5, %c0_6, %c0_7] : memref<1x128x64xf32, #tpu.memory_space<vmem>>, vector<1x128x64xf32>
    %6 = vector.shape_cast %5 : vector<1x128x64xf32> to vector<128x64xf32>
    %7 = vector.shape_cast %4 : vector<128x64xf32> to vector<1x128x64xf32>
    tpu.vector_store %arg4[%c0_5, %c0_6, %c0_7], %7 {strides = array<i32>} : memref<1x128x64xf32, #tpu.memory_space<vmem>>, vector<1x128x64xf32>,
    return
  }
  func.func @transform_0(%arg0: i32, %arg1: i32) -> (i32, i32, i32) {
    %c0_i32 = arith.constant 0 : i32
    %c0_i32_0 = arith.constant 0 : i32
    return %arg0, %arg1, %c0_i32 : i32, i32, i32
  }
  func.func @transform_1(%arg0: i32, %arg1: i32) -> (i32, i32, i32) {
    %c0_i32 = arith.constant 0 : i32
    %c0_i32_0 = arith.constant 0 : i32
    %c0_i32_1 = arith.constant 0 : i32
    return %arg0, %c0_i32, %c0_i32_0 : i32, i32, i32
  }
  func.func @transform_2(%arg0: i32, %arg1: i32) -> (i32, i32, i32) {
    %c0_i32 = arith.constant 0 : i32
    %c0_i32_0 = arith.constant 0 : i32
    return %arg0, %arg1, %c0_i32 : i32, i32, i32
  }
}

module attributes {stable_mosaic.version = 11 : i64} {
  func.func @dwconv_silu_kernel(%arg0: i32, %arg1: memref<1x10x10x32xf32, #tpu.memory_space<vmem>>, %arg2: memref<3x3x1x32xf32, #tpu.memory_space<vmem>>, %arg3: memref<1x32xf32, #tpu.memory_space<vmem>>, %arg4: memref<1x8x8x32xf32, #tpu.memory_space<vmem>>) attributes {dimension_semantics = [#tpu.dimension_semantics<parallel>], iteration_bounds = array<i64: 2>, scalar_prefetch = 0 : i64, scratch_operands = 0 : i64, tpu.core_type = #tpu.core_type<tc>, window_params = [{transform_indices = @transform_0, window_bounds = array<i64: 1, 10, 10, 32>}, {pipeline_mode = #tpu.pipeline_mode<synchronous>, transform_indices = @transform_1, window_bounds = array<i64: 3, 3, 1, 32>}, {pipeline_mode = #tpu.pipeline_mode<synchronous>, transform_indices = @transform_2, window_bounds = array<i64: 1, 32>}, {transform_indices = @transform_3, window_bounds = array<i64: 1, 8, 8, 32>}]} {
    %cst = arith.constant 0.000000e+00 : f32
    %0 = vector.broadcast %cst : f32 to vector<8x8x32xf32>
    %c0 = arith.constant 0 : index
    %c0_0 = arith.constant 0 : index
    %c0_1 = arith.constant 0 : index
    %c0_2 = arith.constant 0 : index
    %1 = vector.load %arg1[%c0, %c0_0, %c0_1, %c0_2] : memref<1x10x10x32xf32, #tpu.memory_space<vmem>>, vector<1x8x8x32xf32>
    %2 = vector.shape_cast %1 : vector<1x8x8x32xf32> to vector<8x8x32xf32>
    %c0_3 = arith.constant 0 : index
    %c0_4 = arith.constant 0 : index
    %c0_5 = arith.constant 0 : index
    %c0_6 = arith.constant 0 : index
    %3 = vector.load %arg2[%c0_3, %c0_4, %c0_5, %c0_6] : memref<3x3x1x32xf32, #tpu.memory_space<vmem>>, vector<1x1x1x32xf32>
    %4 = vector.shape_cast %3 : vector<1x1x1x32xf32> to vector<1x32xf32>
    %5 = vector.shape_cast %4 : vector<1x32xf32> to vector<1x1x32xf32>
    %6 = vector.broadcast %5 : vector<1x1x32xf32> to vector<8x8x32xf32>
    %7 = arith.mulf %2, %6 : vector<8x8x32xf32>
    %8 = arith.addf %0, %7 : vector<8x8x32xf32>
    %c0_7 = arith.constant 0 : index
    %c0_8 = arith.constant 0 : index
    %c1 = arith.constant 1 : index
    %c0_9 = arith.constant 0 : index
    %9 = vector.load %arg1[%c0_7, %c0_8, %c1, %c0_9] : memref<1x10x10x32xf32, #tpu.memory_space<vmem>>, vector<1x8x8x32xf32>
    %10 = vector.shape_cast %9 : vector<1x8x8x32xf32> to vector<8x8x32xf32>
    %c0_10 = arith.constant 0 : index
    %c1_11 = arith.constant 1 : index
    %c0_12 = arith.constant 0 : index
    %c0_13 = arith.constant 0 : index
    %11 = vector.load %arg2[%c0_10, %c1_11, %c0_12, %c0_13] : memref<3x3x1x32xf32, #tpu.memory_space<vmem>>, vector<1x1x1x32xf32>
    %12 = vector.shape_cast %11 : vector<1x1x1x32xf32> to vector<1x32xf32>
    %13 = vector.shape_cast %12 : vector<1x32xf32> to vector<1x1x32xf32>
    %14 = vector.broadcast %13 : vector<1x1x32xf32> to vector<8x8x32xf32>
    %15 = arith.mulf %10, %14 : vector<8x8x32xf32>
    %16 = arith.addf %8, %15 : vector<8x8x32xf32>
    %c0_14 = arith.constant 0 : index
    %c0_15 = arith.constant 0 : index
    %c2 = arith.constant 2 : index
    %c0_16 = arith.constant 0 : index
    %17 = vector.load %arg1[%c0_14, %c0_15, %c2, %c0_16] : memref<1x10x10x32xf32, #tpu.memory_space<vmem>>, vector<1x8x8x32xf32>
    %18 = vector.shape_cast %17 : vector<1x8x8x32xf32> to vector<8x8x32xf32>
    %c0_17 = arith.constant 0 : index
    %c2_18 = arith.constant 2 : index
    %c0_19 = arith.constant 0 : index
    %c0_20 = arith.constant 0 : index
    %19 = vector.load %arg2[%c0_17, %c2_18, %c0_19, %c0_20] : memref<3x3x1x32xf32, #tpu.memory_space<vmem>>, vector<1x1x1x32xf32>
    %20 = vector.shape_cast %19 : vector<1x1x1x32xf32> to vector<1x32xf32>
    %21 = vector.shape_cast %20 : vector<1x32xf32> to vector<1x1x32xf32>
    %22 = vector.broadcast %21 : vector<1x1x32xf32> to vector<8x8x32xf32>
    %23 = arith.mulf %18, %22 : vector<8x8x32xf32>
    %24 = arith.addf %16, %23 : vector<8x8x32xf32>
    %c0_21 = arith.constant 0 : index
    %c1_22 = arith.constant 1 : index
    %c0_23 = arith.constant 0 : index
    %c0_24 = arith.constant 0 : index
    %25 = vector.load %arg1[%c0_21, %c1_22, %c0_23, %c0_24] : memref<1x10x10x32xf32, #tpu.memory_space<vmem>>, vector<1x8x8x32xf32>
    %26 = vector.shape_cast %25 : vector<1x8x8x32xf32> to vector<8x8x32xf32>
    %c1_25 = arith.constant 1 : index
    %c0_26 = arith.constant 0 : index
    %c0_27 = arith.constant 0 : index
    %c0_28 = arith.constant 0 : index
    %27 = vector.load %arg2[%c1_25, %c0_26, %c0_27, %c0_28] : memref<3x3x1x32xf32, #tpu.memory_space<vmem>>, vector<1x1x1x32xf32>
    %28 = vector.shape_cast %27 : vector<1x1x1x32xf32> to vector<1x32xf32>
    %29 = vector.shape_cast %28 : vector<1x32xf32> to vector<1x1x32xf32>
    %30 = vector.broadcast %29 : vector<1x1x32xf32> to vector<8x8x32xf32>
    %31 = arith.mulf %26, %30 : vector<8x8x32xf32>
    %32 = arith.addf %24, %31 : vector<8x8x32xf32>
    %c0_29 = arith.constant 0 : index
    %c1_30 = arith.constant 1 : index
    %c1_31 = arith.constant 1 : index
    %c0_32 = arith.constant 0 : index
    %33 = vector.load %arg1[%c0_29, %c1_30, %c1_31, %c0_32] : memref<1x10x10x32xf32, #tpu.memory_space<vmem>>, vector<1x8x8x32xf32>
    %34 = vector.shape_cast %33 : vector<1x8x8x32xf32> to vector<8x8x32xf32>
    %c1_33 = arith.constant 1 : index
    %c1_34 = arith.constant 1 : index
    %c0_35 = arith.constant 0 : index
    %c0_36 = arith.constant 0 : index
    %35 = vector.load %arg2[%c1_33, %c1_34, %c0_35, %c0_36] : memref<3x3x1x32xf32, #tpu.memory_space<vmem>>, vector<1x1x1x32xf32>
    %36 = vector.shape_cast %35 : vector<1x1x1x32xf32> to vector<1x32xf32>
    %37 = vector.shape_cast %36 : vector<1x32xf32> to vector<1x1x32xf32>
    %38 = vector.broadcast %37 : vector<1x1x32xf32> to vector<8x8x32xf32>
    %39 = arith.mulf %34, %38 : vector<8x8x32xf32>
    %40 = arith.addf %32, %39 : vector<8x8x32xf32>
    %c0_37 = arith.constant 0 : index
    %c1_38 = arith.constant 1 : index
    %c2_39 = arith.constant 2 : index
    %c0_40 = arith.constant 0 : index
    %41 = vector.load %arg1[%c0_37, %c1_38, %c2_39, %c0_40] : memref<1x10x10x32xf32, #tpu.memory_space<vmem>>, vector<1x8x8x32xf32>
    %42 = vector.shape_cast %41 : vector<1x8x8x32xf32> to vector<8x8x32xf32>
    %c1_41 = arith.constant 1 : index
    %c2_42 = arith.constant 2 : index
    %c0_43 = arith.constant 0 : index
    %c0_44 = arith.constant 0 : index
    %43 = vector.load %arg2[%c1_41, %c2_42, %c0_43, %c0_44] : memref<3x3x1x32xf32, #tpu.memory_space<vmem>>, vector<1x1x1x32xf32>
    %44 = vector.shape_cast %43 : vector<1x1x1x32xf32> to vector<1x32xf32>
    %45 = vector.shape_cast %44 : vector<1x32xf32> to vector<1x1x32xf32>
    %46 = vector.broadcast %45 : vector<1x1x32xf32> to vector<8x8x32xf32>
    %47 = arith.mulf %42, %46 : vector<8x8x32xf32>
    %48 = arith.addf %40, %47 : vector<8x8x32xf32>
    %c0_45 = arith.constant 0 : index
    %c2_46 = arith.constant 2 : index
    %c0_47 = arith.constant 0 : index
    %c0_48 = arith.constant 0 : index
    %49 = vector.load %arg1[%c0_45, %c2_46, %c0_47, %c0_48] : memref<1x10x10x32xf32, #tpu.memory_space<vmem>>, vector<1x8x8x32xf32>
    %50 = vector.shape_cast %49 : vector<1x8x8x32xf32> to vector<8x8x32xf32>
    %c2_49 = arith.constant 2 : index
    %c0_50 = arith.constant 0 : index
    %c0_51 = arith.constant 0 : index
    %c0_52 = arith.constant 0 : index
    %51 = vector.load %arg2[%c2_49, %c0_50, %c0_51, %c0_52] : memref<3x3x1x32xf32, #tpu.memory_space<vmem>>, vector<1x1x1x32xf32>
    %52 = vector.shape_cast %51 : vector<1x1x1x32xf32> to vector<1x32xf32>
    %53 = vector.shape_cast %52 : vector<1x32xf32> to vector<1x1x32xf32>
    %54 = vector.broadcast %53 : vector<1x1x32xf32> to vector<8x8x32xf32>
    %55 = arith.mulf %50, %54 : vector<8x8x32xf32>
    %56 = arith.addf %48, %55 : vector<8x8x32xf32>
    %c0_53 = arith.constant 0 : index
    %c2_54 = arith.constant 2 : index
    %c1_55 = arith.constant 1 : index
    %c0_56 = arith.constant 0 : index
    %57 = vector.load %arg1[%c0_53, %c2_54, %c1_55, %c0_56] : memref<1x10x10x32xf32, #tpu.memory_space<vmem>>, vector<1x8x8x32xf32>
    %58 = vector.shape_cast %57 : vector<1x8x8x32xf32> to vector<8x8x32xf32>
    %c2_57 = arith.constant 2 : index
    %c1_58 = arith.constant 1 : index
    %c0_59 = arith.constant 0 : index
    %c0_60 = arith.constant 0 : index
    %59 = vector.load %arg2[%c2_57, %c1_58, %c0_59, %c0_60] : memref<3x3x1x32xf32, #tpu.memory_space<vmem>>, vector<1x1x1x32xf32>
    %60 = vector.shape_cast %59 : vector<1x1x1x32xf32> to vector<1x32xf32>
    %61 = vector.shape_cast %60 : vector<1x32xf32> to vector<1x1x32xf32>
    %62 = vector.broadcast %61 : vector<1x1x32xf32> to vector<8x8x32xf32>
    %63 = arith.mulf %58, %62 : vector<8x8x32xf32>
    %64 = arith.addf %56, %63 : vector<8x8x32xf32>
    %c0_61 = arith.constant 0 : index
    %c2_62 = arith.constant 2 : index
    %c2_63 = arith.constant 2 : index
    %c0_64 = arith.constant 0 : index
    %65 = vector.load %arg1[%c0_61, %c2_62, %c2_63, %c0_64] : memref<1x10x10x32xf32, #tpu.memory_space<vmem>>, vector<1x8x8x32xf32>
    %66 = vector.shape_cast %65 : vector<1x8x8x32xf32> to vector<8x8x32xf32>
    %c2_65 = arith.constant 2 : index
    %c2_66 = arith.constant 2 : index
    %c0_67 = arith.constant 0 : index
    %c0_68 = arith.constant 0 : index
    %67 = vector.load %arg2[%c2_65, %c2_66, %c0_67, %c0_68] : memref<3x3x1x32xf32, #tpu.memory_space<vmem>>, vector<1x1x1x32xf32>
    %68 = vector.shape_cast %67 : vector<1x1x1x32xf32> to vector<1x32xf32>
    %69 = vector.shape_cast %68 : vector<1x32xf32> to vector<1x1x32xf32>
    %70 = vector.broadcast %69 : vector<1x1x32xf32> to vector<8x8x32xf32>
    %71 = arith.mulf %66, %70 : vector<8x8x32xf32>
    %72 = arith.addf %64, %71 : vector<8x8x32xf32>
    %c0_69 = arith.constant 0 : index
    %c0_70 = arith.constant 0 : index
    %73 = vector.load %arg3[%c0_69, %c0_70] : memref<1x32xf32, #tpu.memory_space<vmem>>, vector<1x32xf32>
    %74 = vector.shape_cast %73 : vector<1x32xf32> to vector<1x1x32xf32>
    %75 = vector.broadcast %74 : vector<1x1x32xf32> to vector<8x8x32xf32>
    %76 = arith.addf %72, %75 : vector<8x8x32xf32>
    %cst_71 = arith.constant 0.000000e+00 : f32
    %77 = vector.broadcast %cst_71 : f32 to vector<8x8x32xf32>
    %78 = arith.subf %77, %76 : vector<8x8x32xf32>
    %79 = math.exp %78 : vector<8x8x32xf32>
    %cst_72 = arith.constant 1.000000e+00 : f32
    %80 = vector.broadcast %cst_72 : f32 to vector<8x8x32xf32>
    %81 = arith.addf %80, %79 : vector<8x8x32xf32>
    %cst_73 = arith.constant 1.000000e+00 : f32
    %82 = vector.broadcast %cst_73 : f32 to vector<8x8x32xf32>
    %83 = arith.divf %82, %81 : vector<8x8x32xf32>
    %84 = arith.mulf %76, %83 : vector<8x8x32xf32>
    %c0_74 = arith.constant 0 : index
    %c0_75 = arith.constant 0 : index
    %c0_76 = arith.constant 0 : index
    %c0_77 = arith.constant 0 : index
    %85 = vector.load %arg4[%c0_74, %c0_75, %c0_76, %c0_77] : memref<1x8x8x32xf32, #tpu.memory_space<vmem>>, vector<1x8x8x32xf32>
    %86 = vector.shape_cast %85 : vector<1x8x8x32xf32> to vector<8x8x32xf32>
    %87 = vector.shape_cast %84 : vector<8x8x32xf32> to vector<1x8x8x32xf32>
    tpu.vector_store %arg4[%c0_74, %c0_75, %c0_76, %c0_77], %87 {strides = array<i32>} : memref<1x8x8x32xf32, #tpu.memory_space<vmem>>, vector<1x8x8x32xf32>,
    return
  }
  func.func @transform_0(%arg0: i32) -> (i32, i32, i32, i32) {
    %c0_i32 = arith.constant 0 : i32
    %c0_i32_0 = arith.constant 0 : i32
    %c0_i32_1 = arith.constant 0 : i32
    %c0_i32_2 = arith.constant 0 : i32
    return %arg0, %c0_i32, %c0_i32_0, %c0_i32_1 : i32, i32, i32, i32
  }
  func.func @transform_1(%arg0: i32) -> (i32, i32, i32, i32) {
    %c0_i32 = arith.constant 0 : i32
    %c0_i32_0 = arith.constant 0 : i32
    %c0_i32_1 = arith.constant 0 : i32
    %c0_i32_2 = arith.constant 0 : i32
    %c0_i32_3 = arith.constant 0 : i32
    return %c0_i32, %c0_i32_0, %c0_i32_1, %c0_i32_2 : i32, i32, i32, i32
  }
  func.func @transform_2(%arg0: i32) -> (i32, i32) {
    %c0_i32 = arith.constant 0 : i32
    %c0_i32_0 = arith.constant 0 : i32
    %c0_i32_1 = arith.constant 0 : i32
    return %c0_i32, %c0_i32_0 : i32, i32
  }
  func.func @transform_3(%arg0: i32) -> (i32, i32, i32, i32) {
    %c0_i32 = arith.constant 0 : i32
    %c0_i32_0 = arith.constant 0 : i32
    %c0_i32_1 = arith.constant 0 : i32
    %c0_i32_2 = arith.constant 0 : i32
    return %arg0, %c0_i32, %c0_i32_0, %c0_i32_1 : i32, i32, i32, i32
  }
}

module attributes {stable_mosaic.version = 11 : i64} {
  func.func @bmm_kernel(%arg0: i32, %arg1: i32, %arg2: memref<1x128x32xf32, #tpu.memory_space<vmem>>, %arg3: memref<1x32x64xf32, #tpu.memory_space<vmem>>, %arg4: memref<1x128x64xf32, #tpu.memory_space<vmem>>) attributes {dimension_semantics = [#tpu.dimension_semantics<parallel>, #tpu.dimension_semantics<parallel>], iteration_bounds = array<i64: 4, 1>, scalar_prefetch = 0 : i64, scratch_operands = 0 : i64, tpu.core_type = #tpu.core_type<tc>, window_params = [{transform_indices = @transform_0, window_bounds = array<i64: 1, 128, 32>}, {transform_indices = @transform_1, window_bounds = array<i64: 1, 32, 64>}, {transform_indices = @transform_2, window_bounds = array<i64: 1, 128, 64>}]} {
    %c0 = arith.constant 0 : index
    %c0_0 = arith.constant 0 : index
    %c0_1 = arith.constant 0 : index
    %0 = vector.load %arg2[%c0, %c0_0, %c0_1] : memref<1x128x32xf32, #tpu.memory_space<vmem>>, vector<1x128x32xf32>
    %1 = vector.shape_cast %0 : vector<1x128x32xf32> to vector<128x32xf32>
    %c0_2 = arith.constant 0 : index
    %c0_3 = arith.constant 0 : index
    %c0_4 = arith.constant 0 : index
    %2 = vector.load %arg3[%c0_2, %c0_3, %c0_4] : memref<1x32x64xf32, #tpu.memory_space<vmem>>, vector<1x32x64xf32>
    %3 = vector.shape_cast %2 : vector<1x32x64xf32> to vector<32x64xf32>
    %cst = arith.constant dense<0.000000e+00> : vector<128x64xf32>
    %4 = tpu.matmul %1, %3, %cst {dimension_numbers = #tpu.dot_dimension_numbers<[1], [0], [0], [1], [0, 0, 1, 1], [], []>} : vector<128x32xf32>, vector<32x64xf32>, vector<128x64xf32> -> vector<128x64xf32>
    %c0_5 = arith.constant 0 : index
    %c0_6 = arith.constant 0 : index
    %c0_7 = arith.constant 0 : index
    %5 = vector.load %arg4[%c0_5, %c0_6, %c0_7] : memref<1x128x64xf32, #tpu.memory_space<vmem>>, vector<1x128x64xf32>
    %6 = vector.shape_cast %5 : vector<1x128x64xf32> to vector<128x64xf32>
    %7 = vector.shape_cast %4 : vector<128x64xf32> to vector<1x128x64xf32>
    tpu.vector_store %arg4[%c0_5, %c0_6, %c0_7], %7 {strides = array<i32>} : memref<1x128x64xf32, #tpu.memory_space<vmem>>, vector<1x128x64xf32>,
    return
  }
  func.func @transform_0(%arg0: i32, %arg1: i32) -> (i32, i32, i32) {
    %c0_i32 = arith.constant 0 : i32
    %c0_i32_0 = arith.constant 0 : i32
    return %arg0, %arg1, %c0_i32 : i32, i32, i32
  }
  func.func @transform_1(%arg0: i32, %arg1: i32) -> (i32, i32, i32) {
    %c0_i32 = arith.constant 0 : i32
    %c0_i32_0 = arith.constant 0 : i32
    %c0_i32_1 = arith.constant 0 : i32
    return %arg0, %c0_i32, %c0_i32_0 : i32, i32, i32
  }
  func.func @transform_2(%arg0: i32, %arg1: i32) -> (i32, i32, i32) {
    %c0_i32 = arith.constant 0 : i32
    %c0_i32_0 = arith.constant 0 : i32
    return %arg0, %arg1, %c0_i32 : i32, i32, i32
  }
}

module attributes {stable_mosaic.version = 11 : i64} {
  func.func @scan_kernel(%arg0: i32, %arg1: memref<1x64x128xf32, #tpu.memory_space<vmem>>, %arg2: memref<1x64x128xf32, #tpu.memory_space<vmem>>, %arg3: memref<16x128xf32, #tpu.memory_space<vmem>>, %arg4: memref<1x64x16x4xf32, #tpu.memory_space<vmem>>, %arg5: memref<1x64x16x4xf32, #tpu.memory_space<vmem>>, %arg6: memref<1x128xf32, #tpu.memory_space<vmem>>, %arg7: memref<1x128xf32, #tpu.memory_space<vmem>>, %arg8: memref<4x128xf32, #tpu.memory_space<vmem>>, %arg9: memref<1x64x128xf32, #tpu.memory_space<vmem>>) attributes {dimension_semantics = [#tpu.dimension_semantics<parallel>], iteration_bounds = array<i64: 2>, scalar_prefetch = 0 : i64, scratch_operands = 0 : i64, tpu.core_type = #tpu.core_type<tc>, window_params = [{transform_indices = @transform_0, window_bounds = array<i64: 1, 64, 128>}, {transform_indices = @transform_1, window_bounds = array<i64: 1, 64, 128>}, {pipeline_mode = #tpu.pipeline_mode<synchronous>, transform_indices = @transform_2, window_bounds = array<i64: 16, 128>}, {transform_indices = @transform_3, window_bounds = array<i64: 1, 64, 16, 4>}, {transform_indices = @transform_4, window_bounds = array<i64: 1, 64, 16, 4>}, {pipeline_mode = #tpu.pipeline_mode<synchronous>, transform_indices = @transform_5, window_bounds = array<i64: 1, 128>}, {pipeline_mode = #tpu.pipeline_mode<synchronous>, transform_indices = @transform_6, window_bounds = array<i64: 1, 128>}, {pipeline_mode = #tpu.pipeline_mode<synchronous>, transform_indices = @transform_7, window_bounds = array<i64: 4, 128>}, {transform_indices = @transform_8, window_bounds = array<i64: 1, 64, 128>}]} {
    %c0 = arith.constant 0 : index
    %c0_0 = arith.constant 0 : index
    %0 = vector.load %arg3[%c0, %c0_0] : memref<16x128xf32, #tpu.memory_space<vmem>>, vector<16x128xf32>
    %c0_1 = arith.constant 0 : index
    %c0_2 = arith.constant 0 : index
    %1 = vector.load %arg6[%c0_1, %c0_2] : memref<1x128xf32, #tpu.memory_space<vmem>>, vector<1x128xf32>
    %c0_3 = arith.constant 0 : index
    %c0_4 = arith.constant 0 : index
    %2 = vector.load %arg7[%c0_3, %c0_4] : memref<1x128xf32, #tpu.memory_space<vmem>>, vector<1x128xf32>
    %c0_5 = arith.constant 0 : index
    %c0_6 = arith.constant 0 : index
    %3 = vector.load %arg8[%c0_5, %c0_6] : memref<4x128xf32, #tpu.memory_space<vmem>>, vector<4x128xf32>
    %cst = arith.constant 0.000000e+00 : f32
    %4 = vector.broadcast %cst : f32 to vector<16x128xf32>
    %c0_i32 = arith.constant 0 : i32
    %c8_i32 = arith.constant 8 : i32
    %5 = arith.addi %c0_i32, %c8_i32 : i32
    %c1_i32 = arith.constant 1 : i32
    %6 = scf.for %arg10 = %c0_i32 to %5 step %c1_i32 iter_args(%arg11 = %4) -> (vector<16x128xf32>)  : i32 {
      %c8_i32_8 = arith.constant 8 : i32
      %7 = arith.muli %arg10, %c8_i32_8 : i32
      %8 = tpu.assume_multiple %7, 8 : i32
      %c0_9 = arith.constant 0 : index
      %9 = arith.index_cast %8 : i32 to index
      %c0_10 = arith.constant 0 : index
      %10 = vector.load %arg1[%c0_9, %9, %c0_10] : memref<1x64x128xf32, #tpu.memory_space<vmem>>, vector<1x8x128xf32>
      %11 = vector.shape_cast %10 : vector<1x8x128xf32> to vector<8x128xf32>
      %c0_11 = arith.constant 0 : index
      %12 = arith.index_cast %8 : i32 to index
      %c0_12 = arith.constant 0 : index
      %13 = vector.load %arg2[%c0_11, %12, %c0_12] : memref<1x64x128xf32, #tpu.memory_space<vmem>>, vector<1x8x128xf32>
      %14 = vector.shape_cast %13 : vector<1x8x128xf32> to vector<8x128xf32>
      %15 = vector.broadcast %2 : vector<1x128xf32> to vector<8x128xf32>
      %16 = arith.addf %14, %15 : vector<8x128xf32>
      %cst_13 = arith.constant 0.000000e+00 : f32
      %17 = vector.broadcast %cst_13 : f32 to vector<8x128xf32>
      %18 = arith.maximumf %16, %17 : vector<8x128xf32>
      %19 = math.absf %16 : vector<8x128xf32>
      %cst_14 = arith.constant 0.000000e+00 : f32
      %20 = vector.broadcast %cst_14 : f32 to vector<8x128xf32>
      %21 = arith.subf %20, %19 : vector<8x128xf32>
      %22 = math.exp %21 : vector<8x128xf32>
      %cst_15 = arith.constant 1.000000e+00 : f32
      %23 = vector.broadcast %cst_15 : f32 to vector<8x128xf32>
      %24 = arith.addf %23, %22 : vector<8x128xf32>
      %25 = math.log %24 : vector<8x128xf32>
      %26 = arith.addf %18, %25 : vector<8x128xf32>
      %27 = arith.mulf %26, %11 : vector<8x128xf32>
      %28 = vector.shape_cast %26 : vector<8x128xf32> to vector<8x1x128xf32>
      %29 = vector.shape_cast %0 : vector<16x128xf32> to vector<1x16x128xf32>
      %30 = vector.broadcast %28 : vector<8x1x128xf32> to vector<8x16x128xf32>
      %31 = vector.broadcast %29 : vector<1x16x128xf32> to vector<8x16x128xf32>
      %32 = arith.mulf %30, %31 : vector<8x16x128xf32>
      %33 = math.exp %32 : vector<8x16x128xf32>
      %c0_16 = arith.constant 0 : index
      %34 = arith.index_cast %8 : i32 to index
      %c0_17 = arith.constant 0 : index
      %c0_18 = arith.constant 0 : index
      %35 = vector.load %arg4[%c0_16, %34, %c0_17, %c0_18] : memref<1x64x16x4xf32, #tpu.memory_space<vmem>>, vector<1x8x16x4xf32>
      %36 = vector.shape_cast %35 : vector<1x8x16x4xf32> to vector<8x16x4xf32>
      %c0_19 = arith.constant 0 : index
      %37 = arith.index_cast %8 : i32 to index
      %c0_20 = arith.constant 0 : index
      %c0_21 = arith.constant 0 : index
      %38 = vector.load %arg5[%c0_19, %37, %c0_20, %c0_21] : memref<1x64x16x4xf32, #tpu.memory_space<vmem>>, vector<1x8x16x4xf32>
      %39 = vector.shape_cast %38 : vector<1x8x16x4xf32> to vector<8x16x4xf32>
      %cst_22 = arith.constant 0.000000e+00 : f32
      %40 = vector.broadcast %cst_22 : f32 to vector<8x16x128xf32>
      %cst_23 = arith.constant 0.000000e+00 : f32
      %41 = vector.broadcast %cst_23 : f32 to vector<8x16x128xf32>
      %42 = vector.extract_strided_slice %3 {offsets = [0, 0], sizes = [1, 128], strides = [1, 1]} : vector<4x128xf32> to vector<1x128xf32>
      %43 = vector.shape_cast %42 : vector<1x128xf32> to vector<1x1x128xf32>
      %44 = vector.extract_strided_slice %36 {offsets = [0, 0, 0], sizes = [8, 16, 1], strides = [1, 1, 1]} : vector<8x16x4xf32> to vector<8x16x1xf32>
      %45 = vector.broadcast %44 : vector<8x16x1xf32> to vector<8x16x128xf32>
      %46 = vector.broadcast %43 : vector<1x1x128xf32> to vector<8x16x128xf32>
      %47 = arith.mulf %45, %46 : vector<8x16x128xf32>
      %48 = arith.addf %40, %47 : vector<8x16x128xf32>
      %49 = vector.extract_strided_slice %39 {offsets = [0, 0, 0], sizes = [8, 16, 1], strides = [1, 1, 1]} : vector<8x16x4xf32> to vector<8x16x1xf32>
      %50 = vector.broadcast %49 : vector<8x16x1xf32> to vector<8x16x128xf32>
      %51 = vector.broadcast %43 : vector<1x1x128xf32> to vector<8x16x128xf32>
      %52 = arith.mulf %50, %51 : vector<8x16x128xf32>
      %53 = arith.addf %41, %52 : vector<8x16x128xf32>
      %54 = vector.extract_strided_slice %3 {offsets = [1, 0], sizes = [1, 128], strides = [1, 1]} : vector<4x128xf32> to vector<1x128xf32>
      %55 = vector.shape_cast %54 : vector<1x128xf32> to vector<1x1x128xf32>
      %56 = vector.extract_strided_slice %36 {offsets = [0, 0, 1], sizes = [8, 16, 1], strides = [1, 1, 1]} : vector<8x16x4xf32> to vector<8x16x1xf32>
      %57 = vector.broadcast %56 : vector<8x16x1xf32> to vector<8x16x128xf32>
      %58 = vector.broadcast %55 : vector<1x1x128xf32> to vector<8x16x128xf32>
      %59 = arith.mulf %57, %58 : vector<8x16x128xf32>
      %60 = arith.addf %48, %59 : vector<8x16x128xf32>
      %61 = vector.extract_strided_slice %39 {offsets = [0, 0, 1], sizes = [8, 16, 1], strides = [1, 1, 1]} : vector<8x16x4xf32> to vector<8x16x1xf32>
      %62 = vector.broadcast %61 : vector<8x16x1xf32> to vector<8x16x128xf32>
      %63 = vector.broadcast %55 : vector<1x1x128xf32> to vector<8x16x128xf32>
      %64 = arith.mulf %62, %63 : vector<8x16x128xf32>
      %65 = arith.addf %53, %64 : vector<8x16x128xf32>
      %66 = vector.extract_strided_slice %3 {offsets = [2, 0], sizes = [1, 128], strides = [1, 1]} : vector<4x128xf32> to vector<1x128xf32>
      %67 = vector.shape_cast %66 : vector<1x128xf32> to vector<1x1x128xf32>
      %68 = vector.extract_strided_slice %36 {offsets = [0, 0, 2], sizes = [8, 16, 1], strides = [1, 1, 1]} : vector<8x16x4xf32> to vector<8x16x1xf32>
      %69 = vector.broadcast %68 : vector<8x16x1xf32> to vector<8x16x128xf32>
      %70 = vector.broadcast %67 : vector<1x1x128xf32> to vector<8x16x128xf32>
      %71 = arith.mulf %69, %70 : vector<8x16x128xf32>
      %72 = arith.addf %60, %71 : vector<8x16x128xf32>
      %73 = vector.extract_strided_slice %39 {offsets = [0, 0, 2], sizes = [8, 16, 1], strides = [1, 1, 1]} : vector<8x16x4xf32> to vector<8x16x1xf32>
      %74 = vector.broadcast %73 : vector<8x16x1xf32> to vector<8x16x128xf32>
      %75 = vector.broadcast %67 : vector<1x1x128xf32> to vector<8x16x128xf32>
      %76 = arith.mulf %74, %75 : vector<8x16x128xf32>
      %77 = arith.addf %65, %76 : vector<8x16x128xf32>
      %78 = vector.extract_strided_slice %3 {offsets = [3, 0], sizes = [1, 128], strides = [1, 1]} : vector<4x128xf32> to vector<1x128xf32>
      %79 = vector.shape_cast %78 : vector<1x128xf32> to vector<1x1x128xf32>
      %80 = vector.extract_strided_slice %36 {offsets = [0, 0, 3], sizes = [8, 16, 1], strides = [1, 1, 1]} : vector<8x16x4xf32> to vector<8x16x1xf32>
      %81 = vector.broadcast %80 : vector<8x16x1xf32> to vector<8x16x128xf32>
      %82 = vector.broadcast %79 : vector<1x1x128xf32> to vector<8x16x128xf32>
      %83 = arith.mulf %81, %82 : vector<8x16x128xf32>
      %84 = arith.addf %72, %83 : vector<8x16x128xf32>
      %85 = vector.extract_strided_slice %39 {offsets = [0, 0, 3], sizes = [8, 16, 1], strides = [1, 1, 1]} : vector<8x16x4xf32> to vector<8x16x1xf32>
      %86 = vector.broadcast %85 : vector<8x16x1xf32> to vector<8x16x128xf32>
      %87 = vector.broadcast %79 : vector<1x1x128xf32> to vector<8x16x128xf32>
      %88 = arith.mulf %86, %87 : vector<8x16x128xf32>
      %89 = arith.addf %77, %88 : vector<8x16x128xf32>
      %90 = vector.shape_cast %27 : vector<8x128xf32> to vector<8x1x128xf32>
      %91 = vector.broadcast %90 : vector<8x1x128xf32> to vector<8x16x128xf32>
      %92 = arith.mulf %84, %91 : vector<8x16x128xf32>
      %93 = vector.broadcast %1 : vector<1x128xf32> to vector<8x128xf32>
      %94 = arith.mulf %93, %11 : vector<8x128xf32>
      %95 = vector.extract_strided_slice %33 {offsets = [0, 0, 0], sizes = [1, 16, 128], strides = [1, 1, 1]} : vector<8x16x128xf32> to vector<1x16x128xf32>
      %96 = vector.shape_cast %95 : vector<1x16x128xf32> to vector<16x128xf32>
      %97 = arith.mulf %96, %arg11 : vector<16x128xf32>
      %98 = vector.extract_strided_slice %92 {offsets = [0, 0, 0], sizes = [1, 16, 128], strides = [1, 1, 1]} : vector<8x16x128xf32> to vector<1x16x128xf32>
      %99 = vector.shape_cast %98 : vector<1x16x128xf32> to vector<16x128xf32>
      %100 = arith.addf %97, %99 : vector<16x128xf32>
      %101 = vector.extract_strided_slice %89 {offsets = [0, 0, 0], sizes = [1, 16, 128], strides = [1, 1, 1]} : vector<8x16x128xf32> to vector<1x16x128xf32>
      %102 = vector.shape_cast %101 : vector<1x16x128xf32> to vector<16x128xf32>
      %103 = arith.mulf %102, %100 : vector<16x128xf32>
      %cst_24 = arith.constant dense<0.000000e+00> : vector<128xf32>
      %104 = vector.multi_reduction <add>, %103, %cst_24 [0] : vector<16x128xf32> to vector<128xf32>
      %105 = vector.shape_cast %104 : vector<128xf32> to vector<1x128xf32>
      %106 = vector.extract_strided_slice %94 {offsets = [0, 0], sizes = [1, 128], strides = [1, 1]} : vector<8x128xf32> to vector<1x128xf32>
      %107 = arith.addf %105, %106 : vector<1x128xf32>
      %108 = vector.extract_strided_slice %33 {offsets = [1, 0, 0], sizes = [1, 16, 128], strides = [1, 1, 1]} : vector<8x16x128xf32> to vector<1x16x128xf32>
      %109 = vector.shape_cast %108 : vector<1x16x128xf32> to vector<16x128xf32>
      %110 = arith.mulf %109, %100 : vector<16x128xf32>
      %111 = vector.extract_strided_slice %92 {offsets = [1, 0, 0], sizes = [1, 16, 128], strides = [1, 1, 1]} : vector<8x16x128xf32> to vector<1x16x128xf32>
      %112 = vector.shape_cast %111 : vector<1x16x128xf32> to vector<16x128xf32>
      %113 = arith.addf %110, %112 : vector<16x128xf32>
      %114 = vector.extract_strided_slice %89 {offsets = [1, 0, 0], sizes = [1, 16, 128], strides = [1, 1, 1]} : vector<8x16x128xf32> to vector<1x16x128xf32>
      %115 = vector.shape_cast %114 : vector<1x16x128xf32> to vector<16x128xf32>
      %116 = arith.mulf %115, %113 : vector<16x128xf32>
      %cst_25 = arith.constant dense<0.000000e+00> : vector<128xf32>
      %117 = vector.multi_reduction <add>, %116, %cst_25 [0] : vector<16x128xf32> to vector<128xf32>
      %118 = vector.shape_cast %117 : vector<128xf32> to vector<1x128xf32>
      %119 = vector.extract_strided_slice %94 {offsets = [1, 0], sizes = [1, 128], strides = [1, 1]} : vector<8x128xf32> to vector<1x128xf32>
      %120 = arith.addf %118, %119 : vector<1x128xf32>
      %121 = vector.extract_strided_slice %33 {offsets = [2, 0, 0], sizes = [1, 16, 128], strides = [1, 1, 1]} : vector<8x16x128xf32> to vector<1x16x128xf32>
      %122 = vector.shape_cast %121 : vector<1x16x128xf32> to vector<16x128xf32>
      %123 = arith.mulf %122, %113 : vector<16x128xf32>
      %124 = vector.extract_strided_slice %92 {offsets = [2, 0, 0], sizes = [1, 16, 128], strides = [1, 1, 1]} : vector<8x16x128xf32> to vector<1x16x128xf32>
      %125 = vector.shape_cast %124 : vector<1x16x128xf32> to vector<16x128xf32>
      %126 = arith.addf %123, %125 : vector<16x128xf32>
      %127 = vector.extract_strided_slice %89 {offsets = [2, 0, 0], sizes = [1, 16, 128], strides = [1, 1, 1]} : vector<8x16x128xf32> to vector<1x16x128xf32>
      %128 = vector.shape_cast %127 : vector<1x16x128xf32> to vector<16x128xf32>
      %129 = arith.mulf %128, %126 : vector<16x128xf32>
      %cst_26 = arith.constant dense<0.000000e+00> : vector<128xf32>
      %130 = vector.multi_reduction <add>, %129, %cst_26 [0] : vector<16x128xf32> to vector<128xf32>
      %131 = vector.shape_cast %130 : vector<128xf32> to vector<1x128xf32>
      %132 = vector.extract_strided_slice %94 {offsets = [2, 0], sizes = [1, 128], strides = [1, 1]} : vector<8x128xf32> to vector<1x128xf32>
      %133 = arith.addf %131, %132 : vector<1x128xf32>
      %134 = vector.extract_strided_slice %33 {offsets = [3, 0, 0], sizes = [1, 16, 128], strides = [1, 1, 1]} : vector<8x16x128xf32> to vector<1x16x128xf32>
      %135 = vector.shape_cast %134 : vector<1x16x128xf32> to vector<16x128xf32>
      %136 = arith.mulf %135, %126 : vector<16x128xf32>
      %137 = vector.extract_strided_slice %92 {offsets = [3, 0, 0], sizes = [1, 16, 128], strides = [1, 1, 1]} : vector<8x16x128xf32> to vector<1x16x128xf32>
      %138 = vector.shape_cast %137 : vector<1x16x128xf32> to vector<16x128xf32>
      %139 = arith.addf %136, %138 : vector<16x128xf32>
      %140 = vector.extract_strided_slice %89 {offsets = [3, 0, 0], sizes = [1, 16, 128], strides = [1, 1, 1]} : vector<8x16x128xf32> to vector<1x16x128xf32>
      %141 = vector.shape_cast %140 : vector<1x16x128xf32> to vector<16x128xf32>
      %142 = arith.mulf %141, %139 : vector<16x128xf32>
      %cst_27 = arith.constant dense<0.000000e+00> : vector<128xf32>
      %143 = vector.multi_reduction <add>, %142, %cst_27 [0] : vector<16x128xf32> to vector<128xf32>
      %144 = vector.shape_cast %143 : vector<128xf32> to vector<1x128xf32>
      %145 = vector.extract_strided_slice %94 {offsets = [3, 0], sizes = [1, 128], strides = [1, 1]} : vector<8x128xf32> to vector<1x128xf32>
      %146 = arith.addf %144, %145 : vector<1x128xf32>
      %147 = vector.extract_strided_slice %33 {offsets = [4, 0, 0], sizes = [1, 16, 128], strides = [1, 1, 1]} : vector<8x16x128xf32> to vector<1x16x128xf32>
      %148 = vector.shape_cast %147 : vector<1x16x128xf32> to vector<16x128xf32>
      %149 = arith.mulf %148, %139 : vector<16x128xf32>
      %150 = vector.extract_strided_slice %92 {offsets = [4, 0, 0], sizes = [1, 16, 128], strides = [1, 1, 1]} : vector<8x16x128xf32> to vector<1x16x128xf32>
      %151 = vector.shape_cast %150 : vector<1x16x128xf32> to vector<16x128xf32>
      %152 = arith.addf %149, %151 : vector<16x128xf32>
      %153 = vector.extract_strided_slice %89 {offsets = [4, 0, 0], sizes = [1, 16, 128], strides = [1, 1, 1]} : vector<8x16x128xf32> to vector<1x16x128xf32>
      %154 = vector.shape_cast %153 : vector<1x16x128xf32> to vector<16x128xf32>
      %155 = arith.mulf %154, %152 : vector<16x128xf32>
      %cst_28 = arith.constant dense<0.000000e+00> : vector<128xf32>
      %156 = vector.multi_reduction <add>, %155, %cst_28 [0] : vector<16x128xf32> to vector<128xf32>
      %157 = vector.shape_cast %156 : vector<128xf32> to vector<1x128xf32>
      %158 = vector.extract_strided_slice %94 {offsets = [4, 0], sizes = [1, 128], strides = [1, 1]} : vector<8x128xf32> to vector<1x128xf32>
      %159 = arith.addf %157, %158 : vector<1x128xf32>
      %160 = vector.extract_strided_slice %33 {offsets = [5, 0, 0], sizes = [1, 16, 128], strides = [1, 1, 1]} : vector<8x16x128xf32> to vector<1x16x128xf32>
      %161 = vector.shape_cast %160 : vector<1x16x128xf32> to vector<16x128xf32>
      %162 = arith.mulf %161, %152 : vector<16x128xf32>
      %163 = vector.extract_strided_slice %92 {offsets = [5, 0, 0], sizes = [1, 16, 128], strides = [1, 1, 1]} : vector<8x16x128xf32> to vector<1x16x128xf32>
      %164 = vector.shape_cast %163 : vector<1x16x128xf32> to vector<16x128xf32>
      %165 = arith.addf %162, %164 : vector<16x128xf32>
      %166 = vector.extract_strided_slice %89 {offsets = [5, 0, 0], sizes = [1, 16, 128], strides = [1, 1, 1]} : vector<8x16x128xf32> to vector<1x16x128xf32>
      %167 = vector.shape_cast %166 : vector<1x16x128xf32> to vector<16x128xf32>
      %168 = arith.mulf %167, %165 : vector<16x128xf32>
      %cst_29 = arith.constant dense<0.000000e+00> : vector<128xf32>
      %169 = vector.multi_reduction <add>, %168, %cst_29 [0] : vector<16x128xf32> to vector<128xf32>
      %170 = vector.shape_cast %169 : vector<128xf32> to vector<1x128xf32>
      %171 = vector.extract_strided_slice %94 {offsets = [5, 0], sizes = [1, 128], strides = [1, 1]} : vector<8x128xf32> to vector<1x128xf32>
      %172 = arith.addf %170, %171 : vector<1x128xf32>
      %173 = vector.extract_strided_slice %33 {offsets = [6, 0, 0], sizes = [1, 16, 128], strides = [1, 1, 1]} : vector<8x16x128xf32> to vector<1x16x128xf32>
      %174 = vector.shape_cast %173 : vector<1x16x128xf32> to vector<16x128xf32>
      %175 = arith.mulf %174, %165 : vector<16x128xf32>
      %176 = vector.extract_strided_slice %92 {offsets = [6, 0, 0], sizes = [1, 16, 128], strides = [1, 1, 1]} : vector<8x16x128xf32> to vector<1x16x128xf32>
      %177 = vector.shape_cast %176 : vector<1x16x128xf32> to vector<16x128xf32>
      %178 = arith.addf %175, %177 : vector<16x128xf32>
      %179 = vector.extract_strided_slice %89 {offsets = [6, 0, 0], sizes = [1, 16, 128], strides = [1, 1, 1]} : vector<8x16x128xf32> to vector<1x16x128xf32>
      %180 = vector.shape_cast %179 : vector<1x16x128xf32> to vector<16x128xf32>
      %181 = arith.mulf %180, %178 : vector<16x128xf32>
      %cst_30 = arith.constant dense<0.000000e+00> : vector<128xf32>
      %182 = vector.multi_reduction <add>, %181, %cst_30 [0] : vector<16x128xf32> to vector<128xf32>
      %183 = vector.shape_cast %182 : vector<128xf32> to vector<1x128xf32>
      %184 = vector.extract_strided_slice %94 {offsets = [6, 0], sizes = [1, 128], strides = [1, 1]} : vector<8x128xf32> to vector<1x128xf32>
      %185 = arith.addf %183, %184 : vector<1x128xf32>
      %186 = vector.extract_strided_slice %33 {offsets = [7, 0, 0], sizes = [1, 16, 128], strides = [1, 1, 1]} : vector<8x16x128xf32> to vector<1x16x128xf32>
      %187 = vector.shape_cast %186 : vector<1x16x128xf32> to vector<16x128xf32>
      %188 = arith.mulf %187, %178 : vector<16x128xf32>
      %189 = vector.extract_strided_slice %92 {offsets = [7, 0, 0], sizes = [1, 16, 128], strides = [1, 1, 1]} : vector<8x16x128xf32> to vector<1x16x128xf32>
      %190 = vector.shape_cast %189 : vector<1x16x128xf32> to vector<16x128xf32>
      %191 = arith.addf %188, %190 : vector<16x128xf32>
      %192 = vector.extract_strided_slice %89 {offsets = [7, 0, 0], sizes = [1, 16, 128], strides = [1, 1, 1]} : vector<8x16x128xf32> to vector<1x16x128xf32>
      %193 = vector.shape_cast %192 : vector<1x16x128xf32> to vector<16x128xf32>
      %194 = arith.mulf %193, %191 : vector<16x128xf32>
      %cst_31 = arith.constant dense<0.000000e+00> : vector<128xf32>
      %195 = vector.multi_reduction <add>, %194, %cst_31 [0] : vector<16x128xf32> to vector<128xf32>
      %196 = vector.shape_cast %195 : vector<128xf32> to vector<1x128xf32>
      %197 = vector.extract_strided_slice %94 {offsets = [7, 0], sizes = [1, 128], strides = [1, 1]} : vector<8x128xf32> to vector<1x128xf32>
      %198 = arith.addf %196, %197 : vector<1x128xf32>
      %199 = tpu.concatenate %107, %120, %133, %146, %159, %172, %185, %198 in 0 : vector<1x128xf32>, vector<1x128xf32>, vector<1x128xf32>, vector<1x128xf32>, vector<1x128xf32>, vector<1x128xf32>, vector<1x128xf32>, vector<1x128xf32> -> vector<8x128xf32>
      %c0_32 = arith.constant 0 : index
      %200 = arith.index_cast %8 : i32 to index
      %c0_33 = arith.constant 0 : index
      %201 = vector.load %arg9[%c0_32, %200, %c0_33] : memref<1x64x128xf32, #tpu.memory_space<vmem>>, vector<1x8x128xf32>
      %202 = vector.shape_cast %201 : vector<1x8x128xf32> to vector<8x128xf32>
      %203 = vector.shape_cast %199 : vector<8x128xf32> to vector<1x8x128xf32>
      tpu.vector_store %arg9[%c0_32, %200, %c0_33], %203 {strides = array<i32>} : memref<1x64x128xf32, #tpu.memory_space<vmem>>, vector<1x8x128xf32>,
      scf.yield %191 : vector<16x128xf32>
    }
    %c8_i32_7 = arith.constant 8 : i32
    return
  }
  func.func @transform_0(%arg0: i32) -> (i32, i32, i32) {
    %c0_i32 = arith.constant 0 : i32
    %c0_i32_0 = arith.constant 0 : i32
    %c0_i32_1 = arith.constant 0 : i32
    return %arg0, %c0_i32, %c0_i32_0 : i32, i32, i32
  }
  func.func @transform_1(%arg0: i32) -> (i32, i32, i32) {
    %c0_i32 = arith.constant 0 : i32
    %c0_i32_0 = arith.constant 0 : i32
    %c0_i32_1 = arith.constant 0 : i32
    return %arg0, %c0_i32, %c0_i32_0 : i32, i32, i32
  }
  func.func @transform_2(%arg0: i32) -> (i32, i32) {
    %c0_i32 = arith.constant 0 : i32
    %c0_i32_0 = arith.constant 0 : i32
    %c0_i32_1 = arith.constant 0 : i32
    return %c0_i32, %c0_i32_0 : i32, i32
  }
  func.func @transform_3(%arg0: i32) -> (i32, i32, i32, i32) {
    %c0_i32 = arith.constant 0 : i32
    %c0_i32_0 = arith.constant 0 : i32
    %c0_i32_1 = arith.constant 0 : i32
    %c0_i32_2 = arith.constant 0 : i32
    return %arg0, %c0_i32, %c0_i32_0, %c0_i32_1 : i32, i32, i32, i32
  }
  func.func @transform_4(%arg0: i32) -> (i32, i32, i32, i32) {
    %c0_i32 = arith.constant 0 : i32
    %c0_i32_0 = arith.constant 0 : i32
    %c0_i32_1 = arith.constant 0 : i32
    %c0_i32_2 = arith.constant 0 : i32
    return %arg0, %c0_i32, %c0_i32_0, %c0_i32_1 : i32, i32, i32, i32
  }
  func.func @transform_5(%arg0: i32) -> (i32, i32) {
    %c0_i32 = arith.constant 0 : i32
    %c0_i32_0 = arith.constant 0 : i32
    %c0_i32_1 = arith.constant 0 : i32
    return %c0_i32, %c0_i32_0 : i32, i32
  }
  func.func @transform_6(%arg0: i32) -> (i32, i32) {
    %c0_i32 = arith.constant 0 : i32
    %c0_i32_0 = arith.constant 0 : i32
    %c0_i32_1 = arith.constant 0 : i32
    return %c0_i32, %c0_i32_0 : i32, i32
  }
  func.func @transform_7(%arg0: i32) -> (i32, i32) {
    %c0_i32 = arith.constant 0 : i32
    %c0_i32_0 = arith.constant 0 : i32
    %c0_i32_1 = arith.constant 0 : i32
    return %c0_i32, %c0_i32_0 : i32, i32
  }
  func.func @transform_8(%arg0: i32) -> (i32, i32, i32) {
    %c0_i32 = arith.constant 0 : i32
    %c0_i32_0 = arith.constant 0 : i32
    %c0_i32_1 = arith.constant 0 : i32
    return %arg0, %c0_i32, %c0_i32_0 : i32, i32, i32
  }
}

module attributes {stable_mosaic.version = 11 : i64} {
  func.func @ln_gate_proj_kernel(%arg0: i32, %arg1: memref<128x32xf32, #tpu.memory_space<vmem>>, %arg2: memref<128x32xf32, #tpu.memory_space<vmem>>, %arg3: memref<1x32xf32, #tpu.memory_space<vmem>>, %arg4: memref<1x32xf32, #tpu.memory_space<vmem>>, %arg5: memref<32x16xf32, #tpu.memory_space<vmem>>, %arg6: memref<128x16xf32, #tpu.memory_space<vmem>>) attributes {dimension_semantics = [#tpu.dimension_semantics<parallel>], iteration_bounds = array<i64: 1>, scalar_prefetch = 0 : i64, scratch_operands = 0 : i64, tpu.core_type = #tpu.core_type<tc>, window_params = [{transform_indices = @transform_0, window_bounds = array<i64: 128, 32>}, {transform_indices = @transform_1, window_bounds = array<i64: 128, 32>}, {pipeline_mode = #tpu.pipeline_mode<synchronous>, transform_indices = @transform_2, window_bounds = array<i64: 1, 32>}, {pipeline_mode = #tpu.pipeline_mode<synchronous>, transform_indices = @transform_3, window_bounds = array<i64: 1, 32>}, {pipeline_mode = #tpu.pipeline_mode<synchronous>, transform_indices = @transform_4, window_bounds = array<i64: 32, 16>}, {transform_indices = @transform_5, window_bounds = array<i64: 128, 16>}]} {
    %c0 = arith.constant 0 : index
    %c0_0 = arith.constant 0 : index
    %0 = vector.load %arg1[%c0, %c0_0] : memref<128x32xf32, #tpu.memory_space<vmem>>, vector<128x32xf32>
    %c0_1 = arith.constant 0 : index
    %c0_2 = arith.constant 0 : index
    %1 = vector.load %arg2[%c0_1, %c0_2] : memref<128x32xf32, #tpu.memory_space<vmem>>, vector<128x32xf32>
    %cst = arith.constant dense<0.000000e+00> : vector<128xf32>
    %2 = vector.multi_reduction <add>, %0, %cst [1] : vector<128x32xf32> to vector<128xf32>
    %3 = vector.shape_cast %2 : vector<128xf32> to vector<128x1xf32>
    %cst_3 = arith.constant 3.200000e+01 : f32
    %4 = vector.broadcast %cst_3 : f32 to vector<128x1xf32>
    %5 = arith.divf %3, %4 : vector<128x1xf32>
    %6 = vector.broadcast %5 : vector<128x1xf32> to vector<128x32xf32>
    %7 = arith.subf %0, %6 : vector<128x32xf32>
    %8 = arith.mulf %7, %7 : vector<128x32xf32>
    %cst_4 = arith.constant dense<0.000000e+00> : vector<128xf32>
    %9 = vector.multi_reduction <add>, %8, %cst_4 [1] : vector<128x32xf32> to vector<128xf32>
    %10 = vector.shape_cast %9 : vector<128xf32> to vector<128x1xf32>
    %cst_5 = arith.constant 3.200000e+01 : f32
    %11 = vector.broadcast %cst_5 : f32 to vector<128x1xf32>
    %12 = arith.divf %10, %11 : vector<128x1xf32>
    %cst_6 = arith.constant 9.99999974E-6 : f32
    %13 = vector.broadcast %cst_6 : f32 to vector<128x1xf32>
    %14 = arith.addf %12, %13 : vector<128x1xf32>
    %15 = math.rsqrt %14 : vector<128x1xf32>
    %16 = vector.broadcast %15 : vector<128x1xf32> to vector<128x32xf32>
    %17 = arith.mulf %7, %16 : vector<128x32xf32>
    %c0_7 = arith.constant 0 : index
    %c0_8 = arith.constant 0 : index
    %18 = vector.load %arg3[%c0_7, %c0_8] : memref<1x32xf32, #tpu.memory_space<vmem>>, vector<1x32xf32>
    %19 = vector.broadcast %18 : vector<1x32xf32> to vector<128x32xf32>
    %20 = arith.mulf %17, %19 : vector<128x32xf32>
    %c0_9 = arith.constant 0 : index
    %c0_10 = arith.constant 0 : index
    %21 = vector.load %arg4[%c0_9, %c0_10] : memref<1x32xf32, #tpu.memory_space<vmem>>, vector<1x32xf32>
    %22 = vector.broadcast %21 : vector<1x32xf32> to vector<128x32xf32>
    %23 = arith.addf %20, %22 : vector<128x32xf32>
    %cst_11 = arith.constant 0.000000e+00 : f32
    %24 = vector.broadcast %cst_11 : f32 to vector<128x32xf32>
    %25 = arith.subf %24, %1 : vector<128x32xf32>
    %26 = math.exp %25 : vector<128x32xf32>
    %cst_12 = arith.constant 1.000000e+00 : f32
    %27 = vector.broadcast %cst_12 : f32 to vector<128x32xf32>
    %28 = arith.addf %27, %26 : vector<128x32xf32>
    %cst_13 = arith.constant 1.000000e+00 : f32
    %29 = vector.broadcast %cst_13 : f32 to vector<128x32xf32>
    %30 = arith.divf %29, %28 : vector<128x32xf32>
    %31 = arith.mulf %1, %30 : vector<128x32xf32>
    %32 = arith.mulf %23, %31 : vector<128x32xf32>
    %c0_14 = arith.constant 0 : index
    %c0_15 = arith.constant 0 : index
    %33 = vector.load %arg5[%c0_14, %c0_15] : memref<32x16xf32, #tpu.memory_space<vmem>>, vector<32x16xf32>
    %cst_16 = arith.constant dense<0.000000e+00> : vector<128x16xf32>
    %34 = tpu.matmul %32, %33, %cst_16 {dimension_numbers = #tpu.dot_dimension_numbers<[1], [0], [0], [1], [0, 0, 1, 1], [], []>} : vector<128x32xf32>, vector<32x16xf32>, vector<128x16xf32> -> vector<128x16xf32>
    %c0_17 = arith.constant 0 : index
    %c0_18 = arith.constant 0 : index
    %35 = vector.load %arg6[%c0_17, %c0_18] : memref<128x16xf32, #tpu.memory_space<vmem>>, vector<128x16xf32>
    tpu.vector_store %arg6[%c0_17, %c0_18], %34 {strides = array<i32>} : memref<128x16xf32, #tpu.memory_space<vmem>>, vector<128x16xf32>,
    return
  }
  func.func @transform_0(%arg0: i32) -> (i32, i32) {
    %c0_i32 = arith.constant 0 : i32
    %c0_i32_0 = arith.constant 0 : i32
    return %arg0, %c0_i32 : i32, i32
  }
  func.func @transform_1(%arg0: i32) -> (i32, i32) {
    %c0_i32 = arith.constant 0 : i32
    %c0_i32_0 = arith.constant 0 : i32
    return %arg0, %c0_i32 : i32, i32
  }
  func.func @transform_2(%arg0: i32) -> (i32, i32) {
    %c0_i32 = arith.constant 0 : i32
    %c0_i32_0 = arith.constant 0 : i32
    %c0_i32_1 = arith.constant 0 : i32
    return %c0_i32, %c0_i32_0 : i32, i32
  }
  func.func @transform_3(%arg0: i32) -> (i32, i32) {
    %c0_i32 = arith.constant 0 : i32
    %c0_i32_0 = arith.constant 0 : i32
    %c0_i32_1 = arith.constant 0 : i32
    return %c0_i32, %c0_i32_0 : i32, i32
  }
  func.func @transform_4(%arg0: i32) -> (i32, i32) {
    %c0_i32 = arith.constant 0 : i32
    %c0_i32_0 = arith.constant 0 : i32
    %c0_i32_1 = arith.constant 0 : i32
    return %c0_i32, %c0_i32_0 : i32, i32
  }
  func.func @transform_5(%arg0: i32) -> (i32, i32) {
    %c0_i32 = arith.constant 0 : i32
    %c0_i32_0 = arith.constant 0 : i32
    return %arg0, %c0_i32 : i32, i32
  }
}

</mosaic_0001>

<llo_original>
// kernel: ss2d_forward.5
$region0: #{ss2d_forward.5}
  #allocation0 [shape = 'u32[]', space=smem, size = 0x4, offset = 0x4, fixed_abs, tag = 'smem constant byte address 0x4 - core index']
  #allocation1 [shape = 'u32[72,128]{1,0:T(1,128)}', space=vmem, size = 0x9000, scoped, tag = 'internal scratch']
  %s0 = inlined_call_operand.hbm [shape: f32[1,128,16], index: 0, kind: input, shape index: {}]
  %s1 = inlined_call_operand.hbm [shape: f32[1,16,64], index: 1, kind: input, shape index: {}]
  %s2 = inlined_call_operand.vmem [shape: f32[1,128,64], index: 2, kind: output, shape index: {}]
  %s3 = sld [smem:[#allocation0]]
  $region26: #{ss2d_forward.5} parent=0
    _
  %s5 = ssub.s32 1, %s3
  %s6 = scalar_select 0, %s5, %s3
  $region1: #{ss2d_forward.5} parent=0
    #allocation2 [shape = 'u8[65536]{0}', space=vmem, size = 0x10000, scoped, tag = 'input window, operand 0, single buffered']
    #allocation3 [shape = 's32[1]{0}', space=sflag, size = 0x4, scoped, tag = 'scoped memory for ss2d_forward.5']
    #allocation4 [shape = 'u8[8192]{0}', space=vmem, size = 0x2000, scoped, tag = 'input window, operand 1, single buffered']
    #allocation5 [shape = 's32[1]{0}', space=sflag, size = 0x4, scoped, tag = 'scoped memory for ss2d_forward.5']
    %7 = vsyncpa [#allocation3], 0
    %8 = vsyncpa [#allocation5], 0
    // Predicated region
    $region2: #{ss2d_forward.5} parent=1 // pred_check
      _
    $region3: #{ss2d_forward.5} parent=1 // pred_check_branch
      %10 = sbr.rel (0) target = $region5
    $region4: #{ss2d_forward.5} parent=1 // pred_region
      %12 = vsyncadd [#allocation3], 0
      %s13 = sshll.u32 %s0, 4
      %s14 = int_to_ptr.hbm [resolvable:$true] %s13
      %s15 = sshll.u32 [#allocation2], 4
      %s16 = int_to_ptr.vmem [resolvable:$true] %s15
      %21 = dma.hbm_to_vmem [thread:$0]  %s14, 2048, %s16, [#allocation3], 128, 128, 8
    $region5: #{ss2d_forward.5} parent=1 // pred_fallthru
      _
    // Predicated region
    $region6: #{ss2d_forward.5} parent=1 // pred_check
      _
    $region7: #{ss2d_forward.5} parent=1 // pred_check_branch
      %23 = sbr.rel (0) target = $region9
    $region8: #{ss2d_forward.5} parent=1 // pred_region
      %25 = vsyncadd [#allocation5], 0
      %s26 = sshll.u32 %s1, 4
      %s27 = int_to_ptr.hbm [resolvable:$true] %s26
      %s28 = sshll.u32 [#allocation4], 4
      %s29 = int_to_ptr.vmem [resolvable:$true] %s28
      %34 = dma.hbm_to_vmem [thread:$0]  %s27, 256, %s29, [#allocation5], 128, 128, 8
    $region9: #{ss2d_forward.5} parent=1 // pred_fallthru
      _
    // Predicated region
    $region10: #{ss2d_forward.5} parent=1 // pred_check
      _
    $region11: #{ss2d_forward.5} parent=1 // pred_check_branch
      %36 = sbr.rel (0) target = $region13
    $region12: #{ss2d_forward.5} parent=1 // pred_region
      %38 = dma.done [#allocation3], 2048
    $region13: #{ss2d_forward.5} parent=1 // pred_fallthru
      _
    // Predicated region
    $region14: #{ss2d_forward.5} parent=1 // pred_check
      _
    $region15: #{ss2d_forward.5} parent=1 // pred_check_branch
      %40 = sbr.rel (0) target = $region17
    $region16: #{ss2d_forward.5} parent=1 // pred_region
      %42 = dma.done [#allocation5], 256
    $region17: #{ss2d_forward.5} parent=1 // pred_fallthru
      _
    %v43 = vld [vmem:[#allocation2] sm:$0xff]
    %v44 = vld [vmem:[#allocation2 + $0x8] sm:$0xff]
    %v45 = vld [vmem:[#allocation2 + $0x10] sm:$0xff]
    %v46 = vld [vmem:[#allocation2 + $0x18] sm:$0xff]
    %v47 = vld [vmem:[#allocation2 + $0x20] sm:$0xff]
    %v48 = vld [vmem:[#allocation2 + $0x28] sm:$0xff]
    %v49 = vld [vmem:[#allocation2 + $0x30] sm:$0xff]
    %v50 = vld [vmem:[#allocation2 + $0x38] sm:$0xff]
    %v51 = vld [vmem:[#allocation2 + $0x40] sm:$0xff]
    %v52 = vld [vmem:[#allocation2 + $0x48] sm:$0xff]
    %v53 = vld [vmem:[#allocation2 + $0x50] sm:$0xff]
    %v54 = vld [vmem:[#allocation2 + $0x58] sm:$0xff]
    %v55 = vld [vmem:[#allocation2 + $0x60] sm:$0xff]
    %v56 = vld [vmem:[#allocation2 + $0x68] sm:$0xff]
    %v57 = vld [vmem:[#allocation2 + $0x70] sm:$0xff]
    %v58 = vld [vmem:[#allocation2 + $0x78] sm:$0xff]
    %v59 = vld [vmem:[#allocation4] sm:$0xff]
    %v60 = vld [vmem:[#allocation4 + $0x8] sm:$0xff]
    %vm61 = vcmask 130048
    %v63 = vsel %vm61, %v43, 0
    %v66 = vsel %vm61, %v44, 0
    %v69 = vsel %vm61, %v45, 0
    %v72 = vsel %vm61, %v46, 0
    %v75 = vsel %vm61, %v47, 0
    %v78 = vsel %vm61, %v48, 0
    %v81 = vsel %vm61, %v49, 0
    %v84 = vsel %vm61, %v50, 0
    %v87 = vsel %vm61, %v51, 0
    %v90 = vsel %vm61, %v52, 0
    %v93 = vsel %vm61, %v53, 0
    %v96 = vsel %vm61, %v54, 0
    %v99 = vsel %vm61, %v55, 0
    %v102 = vsel %vm61, %v56, 0
    %v105 = vsel %vm61, %v57, 0
    %v108 = vsel %vm61, %v58, 0
    %110 = vmatpush.msra.mxu0 0.0
    %111 = vmatpush.msra.mxu0 0.0
    %112 = vmatpush.msra.mxu0 0.0
    %113 = vmatpush.msra.mxu0 0.0
    %114 = vmatpush.msra.mxu0 0.0
    %115 = vmatpush.msra.mxu0 0.0
    %116 = vmatpush.msra.mxu0 0.0
    %117 = vmatpush.msra.mxu0 0.0
    %118 = vmatpush.msra.mxu0 0.0
    %119 = vmatpush.msra.mxu0 0.0
    %120 = vmatpush.msra.mxu0 0.0
    %121 = vmatpush.msra.mxu0 0.0
    %122 = vmatpush.msra.mxu0 0.0
    %123 = vmatpush.msra.mxu0 0.0
    %124 = vmatpush.msra.mxu0 %v60
    %125 = vmatpush.msra.mxu0 %v59
    %126 = vmatmul.f32.gmra.mxu0 %v63
    %v127 = vpop.f32.mrf.mxu0
    %v128 = vadd.f32 0.0, %v127
    %129 = vmatmul.f32.gmra.mxu0 %v66
    %v130 = vpop.f32.mrf.mxu0
    %v131 = vadd.f32 0.0, %v130
    %132 = vmatmul.f32.gmra.mxu0 %v69
    %v133 = vpop.f32.mrf.mxu0
    %v134 = vadd.f32 0.0, %v133
    %135 = vmatmul.f32.gmra.mxu0 %v72
    %v136 = vpop.f32.mrf.mxu0
    %v137 = vadd.f32 0.0, %v136
    %138 = vmatmul.f32.gmra.mxu0 %v75
    %v139 = vpop.f32.mrf.mxu0
    %v140 = vadd.f32 0.0, %v139
    %141 = vmatmul.f32.gmra.mxu0 %v78
    %v142 = vpop.f32.mrf.mxu0
    %v143 = vadd.f32 0.0, %v142
    %144 = vmatmul.f32.gmra.mxu0 %v81
    %v145 = vpop.f32.mrf.mxu0
    %v146 = vadd.f32 0.0, %v145
    %147 = vmatmul.f32.gmra.mxu0 %v84
    %v148 = vpop.f32.mrf.mxu0
    %v149 = vadd.f32 0.0, %v148
    %150 = vmatmul.f32.gmra.mxu0 %v87
    %v151 = vpop.f32.mrf.mxu0
    %v152 = vadd.f32 0.0, %v151
    %153 = vmatmul.f32.gmra.mxu0 %v90
    %v154 = vpop.f32.mrf.mxu0
    %v155 = vadd.f32 0.0, %v154
    %156 = vmatmul.f32.gmra.mxu0 %v93
    %v157 = vpop.f32.mrf.mxu0
    %v158 = vadd.f32 0.0, %v157
    %159 = vmatmul.f32.gmra.mxu0 %v96
    %v160 = vpop.f32.mrf.mxu0
    %v161 = vadd.f32 0.0, %v160
    %162 = vmatmul.f32.gmra.mxu0 %v99
    %v163 = vpop.f32.mrf.mxu0
    %v164 = vadd.f32 0.0, %v163
    %165 = vmatmul.f32.gmra.mxu0 %v102
    %v166 = vpop.f32.mrf.mxu0
    %v167 = vadd.f32 0.0, %v166
    %168 = vmatmul.f32.gmra.mxu0 %v105
    %v169 = vpop.f32.mrf.mxu0
    %v170 = vadd.f32 0.0, %v169
    %171 = vmatmul.f32.gmra.mxu0 %v108
    %v172 = vpop.f32.mrf.mxu0
    %v173 = vadd.f32 0.0, %v172
    %174 = vdwg.mxu0
    %vm175 = vcmask 523264
    %176 = vst.msk [vmem:[%s2] sm:$0xff] %vm175, %v128
    %177 = vst.msk [vmem:[%s2 + $0x8] sm:$0xff] %vm175, %v131
    %178 = vst.msk [vmem:[%s2 + $0x10] sm:$0xff] %vm175, %v134
    %179 = vst.msk [vmem:[%s2 + $0x18] sm:$0xff] %vm175, %v137
    %180 = vst.msk [vmem:[%s2 + $0x20] sm:$0xff] %vm175, %v140
    %181 = vst.msk [vmem:[%s2 + $0x28] sm:$0xff] %vm175, %v143
    %182 = vst.msk [vmem:[%s2 + $0x30] sm:$0xff] %vm175, %v146
    %183 = vst.msk [vmem:[%s2 + $0x38] sm:$0xff] %vm175, %v149
    %184 = vst.msk [vmem:[%s2 + $0x40] sm:$0xff] %vm175, %v152
    %185 = vst.msk [vmem:[%s2 + $0x48] sm:$0xff] %vm175, %v155
    %186 = vst.msk [vmem:[%s2 + $0x50] sm:$0xff] %vm175, %v158
    %187 = vst.msk [vmem:[%s2 + $0x58] sm:$0xff] %vm175, %v161
    %188 = vst.msk [vmem:[%s2 + $0x60] sm:$0xff] %vm175, %v164
    %189 = vst.msk [vmem:[%s2 + $0x68] sm:$0xff] %vm175, %v167
    %190 = vst.msk [vmem:[%s2 + $0x70] sm:$0xff] %vm175, %v170
    %191 = vst.msk [vmem:[%s2 + $0x78] sm:$0xff] %vm175, %v173
    // Predicated region
    $region18: #{ss2d_forward.5} parent=1 // pred_check
      _
    $region19: #{ss2d_forward.5} parent=1 // pred_check_branch
      %193 = sbr.rel (0) target = $region21
    $region20: #{ss2d_forward.5} parent=1 // pred_region
      _
    $region21: #{ss2d_forward.5} parent=1 // pred_fallthru
      _
    // Predicated region
    $region22: #{ss2d_forward.5} parent=1 // pred_check
      _
    $region23: #{ss2d_forward.5} parent=1 // pred_check_branch
      %195 = sbr.rel (0) target = $region25
    $region24: #{ss2d_forward.5} parent=1 // pred_region
      _
    $region25: #{ss2d_forward.5} parent=1 // pred_fallthru
      _
    %196 = vsyncpa [#allocation3], 1
    %197 = vsyncpa [#allocation5], 1

// kernel: ss2d_forward.6
$region0: #{ss2d_forward.6}
  #allocation0 [shape = 'u32[]', space=smem, size = 0x4, offset = 0x4, fixed_abs, tag = 'smem constant byte address 0x4 - core index']
  #allocation1 [shape = 'u32[72,128]{1,0:T(1,128)}', space=vmem, size = 0x9000, scoped, tag = 'internal scratch']
  %s0 = inlined_call_operand.vmem [shape: f32[2,10,10,32], index: 0, kind: input, shape index: {}]
  %s1 = inlined_call_operand.vmem [shape: f32[3,3,1,32], index: 1, kind: input, shape index: {}]
  %s2 = inlined_call_operand.vmem [shape: f32[1,32], index: 2, kind: input, shape index: {}]
  %s3 = inlined_call_operand.vmem [shape: f32[2,8,8,32], index: 3, kind: output, shape index: {}]
  %s4 = sld [smem:[#allocation0]]
  $region45: #{ss2d_forward.6} parent=0
    _
  %s6 = ssub.s32 1, %s4
  %s7 = scalar_select 0, %s6, %s4
  loop: start=0, step=1, limit=4
  $region2: #{ss2d_forward.6} parent=0 // loop_pre_header
    _
  $region3: #{ss2d_forward.6} parent=0 // loop_header
    %s9 = sphi 0, %s13
    %p10 = scmp.ge.s32.totalorder %s9, 4
    %s19 = sphi 0, %s21
    %s22 = sphi 0, %s19
    %s23 = sphi 0, %s22
    %s39 = sphi 0, %s23
    %s43 = sphi 0, %s43
    %s45 = sphi 0, %s43
    %s46 = sphi 0, %s45
    %s60 = sphi 0, %s46
    %s64 = sphi 0, %s64
    %s66 = sphi 0, %s64
    %s67 = sphi 0, %s66
    %s81 = sphi 0, %s67
    %s87 = sphi 0, %s89
    %s90 = sphi 0, %s87
    %s91 = sphi 0, %s90
    %s107 = sphi 0, %s91
  $region4: #{ss2d_forward.6} parent=0 // loop_header_branch
    %12 = sbr.rel (%p10) target = $region8
  $region5: #{ss2d_forward.6} parent=0 // loop_body
    %s14 = ssub.s32 %s9, 1
    %s15 = ssub.s32 %s9, 2
    %s16 = sadd.s32 %s9, 1
    %s17 = ssub.s32 %s9, %s16
    %p18 = scmp.eq.s32.totalorder %s17, 0
    %s20 = sadd.s32 %s19, 1
    %s21 = scalar_select %p18, %s19, %s20
    %p24 = pneg %p18
    %p25 = scmp.eq.s32.totalorder %s9, 1
    %p26 = por %p24, %p25
    %p27 = scmp.ne.s32.totalorder %s19, %s22
    %p28 = scmp.eq.s32.totalorder %s9, 0
    %p29 = por %p27, %p28
    %p30 = scmp.ne.s32.totalorder %s19, %s22
    %p31 = scmp.eq.s32.totalorder %s14, 1
    %p32 = por %p30, %p31
    %p33 = scmp.ne.s32.totalorder %s22, %s23
    %p34 = scmp.eq.s32.totalorder %s14, 0
    %p35 = por %p33, %p34
    %p36 = scmp.ne.s32.totalorder %s22, %s23
    %p37 = scmp.eq.s32.totalorder %s15, 1
    %p38 = por %p36, %p37
    %p40 = scmp.ne.s32.totalorder %s23, %s39
    %p41 = scmp.eq.s32.totalorder %s15, 0
    %p42 = por %p40, %p41
    %s44 = sadd.s32 %s43, 1
    %p47 = scmp.eq.s32.totalorder %s9, 1
    %p48 = scmp.ne.s32.totalorder %s43, %s45
    %p49 = scmp.eq.s32.totalorder %s9, 0
    %p50 = por %p48, %p49
    %p51 = scmp.ne.s32.totalorder %s43, %s45
    %p52 = scmp.eq.s32.totalorder %s14, 1
    %p53 = por %p51, %p52
    %p54 = scmp.ne.s32.totalorder %s45, %s46
    %p55 = scmp.eq.s32.totalorder %s14, 0
    %p56 = por %p54, %p55
    %p57 = scmp.ne.s32.totalorder %s45, %s46
    %p58 = scmp.eq.s32.totalorder %s15, 1
    %p59 = por %p57, %p58
    %p61 = scmp.ne.s32.totalorder %s46, %s60
    %p62 = scmp.eq.s32.totalorder %s15, 0
    %p63 = por %p61, %p62
    %s65 = sadd.s32 %s64, 1
    %p68 = scmp.eq.s32.totalorder %s9, 1
    %p69 = scmp.ne.s32.totalorder %s64, %s66
    %p70 = scmp.eq.s32.totalorder %s9, 0
    %p71 = por %p69, %p70
    %p72 = scmp.ne.s32.totalorder %s64, %s66
    %p73 = scmp.eq.s32.totalorder %s14, 1
    %p74 = por %p72, %p73
    %p75 = scmp.ne.s32.totalorder %s66, %s67
    %p76 = scmp.eq.s32.totalorder %s14, 0
    %p77 = por %p75, %p76
    %p78 = scmp.ne.s32.totalorder %s66, %s67
    %p79 = scmp.eq.s32.totalorder %s15, 1
    %p80 = por %p78, %p79
    %p82 = scmp.ne.s32.totalorder %s67, %s81
    %p83 = scmp.eq.s32.totalorder %s15, 0
    %p84 = por %p82, %p83
    %s85 = ssub.s32 %s9, %s16
    %p86 = scmp.eq.s32.totalorder %s85, 0
    %s88 = sadd.s32 %s87, 1
    %s89 = scalar_select %p86, %s87, %s88
    %p92 = pneg %p86
    %p93 = scmp.eq.s32.totalorder %s9, 1
    %p94 = por %p92, %p93
    %p95 = scmp.ne.s32.totalorder %s87, %s90
    %p96 = scmp.eq.s32.totalorder %s9, 0
    %p97 = por %p95, %p96
    %p98 = scmp.ne.s32.totalorder %s87, %s90
    %p99 = scmp.eq.s32.totalorder %s14, 1
    %p100 = por %p98, %p99
    %p101 = scmp.ne.s32.totalorder %s90, %s91
    %p102 = scmp.eq.s32.totalorder %s14, 0
    %p103 = por %p101, %p102
    %p104 = scmp.ne.s32.totalorder %s90, %s91
    %p105 = scmp.eq.s32.totalorder %s15, 1
    %p106 = por %p104, %p105
    %p108 = scmp.ne.s32.totalorder %s91, %s107
    %p109 = scmp.eq.s32.totalorder %s15, 0
    %p110 = por %p108, %p109
    %p111 = scmp.le.s32.totalorder 1, %s9
    %p112 = scmp.lt.s32.totalorder %s9, 3
    %p113 = pnand %p111, %p112
    %p114 = pneg %p113
    // Predicated region
    $region9: #{ss2d_forward.6} parent=5 // pred_check
      _
    $region10: #{ss2d_forward.6} parent=5 // pred_check_branch
      %116 = sbr.rel (%p113) target = $region12
    $region11: #{ss2d_forward.6} parent=5 // pred_region
      %s117 = ssub.s32 %s9, 1
      // Predicated region
      $region13: #{ss2d_forward.6} parent=11 // pred_check
        %p118 = pneg %p56
      $region14: #{ss2d_forward.6} parent=11 // pred_check_branch
        %120 = sbr.rel (%p118) target = $region16
      $region15: #{ss2d_forward.6} parent=11 // pred_region
        _
      $region16: #{ss2d_forward.6} parent=11 // pred_fallthru
        _
      // Predicated region
      $region17: #{ss2d_forward.6} parent=11 // pred_check
        %p121 = pneg %p77
      $region18: #{ss2d_forward.6} parent=11 // pred_check_branch
        %123 = sbr.rel (%p121) target = $region20
      $region19: #{ss2d_forward.6} parent=11 // pred_region
        _
      $region20: #{ss2d_forward.6} parent=11 // pred_fallthru
        _
    $region12: #{ss2d_forward.6} parent=5 // pred_fallthru
      _
    %p124 = scmp.lt.s32.totalorder %s9, 2
    // Predicated region
    $region21: #{ss2d_forward.6} parent=5 // pred_check
      %p125 = pneg %p124
    $region22: #{ss2d_forward.6} parent=5 // pred_check_branch
      %127 = sbr.rel (%p125) target = $region24
    $region23: #{ss2d_forward.6} parent=5 // pred_region
      // Predicated region
      $region25: #{ss2d_forward.6} parent=23 // pred_check
        %p128 = pneg %p29
      $region26: #{ss2d_forward.6} parent=23 // pred_check_branch
        %130 = sbr.rel (%p128) target = $region28
      $region27: #{ss2d_forward.6} parent=23 // pred_region
        %p131 = scmp.lt.s32.totalorder %s9, 1
        %s132 = scalar_select %p131, %s9, 1
        %s133 = smul.addr %s132, 20
        %s134 = smul.addr %s133, 8
        %s135 = scalar_lea.vmem %s0, %s134
      $region28: #{ss2d_forward.6} parent=23 // pred_fallthru
        _
    $region24: #{ss2d_forward.6} parent=5 // pred_fallthru
      _
    %p136 = scmp.le.s32.totalorder 1, %s9
    %p137 = scmp.lt.s32.totalorder %s9, 3
    %p138 = pnand %p136, %p137
    %p139 = pneg %p138
    // Predicated region
    $region29: #{ss2d_forward.6} parent=5 // pred_check
      _
    $region30: #{ss2d_forward.6} parent=5 // pred_check_branch
      %141 = sbr.rel (%p138) target = $region32
    $region31: #{ss2d_forward.6} parent=5 // pred_region
      %s142 = ssub.s32 %s9, 1
      %p143 = scmp.lt.s32.totalorder %s14, 1
      %s144 = scalar_select %p143, %s14, 1
      %s145 = smul.addr %s144, 20
      %s146 = smul.addr %s145, 8
      %s147 = scalar_lea.vmem %s0, %s146
      %p148 = pneg %p35
      %p149 = pneg %p32
      %p150 = pneg %p56
      %p151 = pneg %p53
      %p152 = pneg %p77
      %p153 = pneg %p74
      %p154 = pneg %p103
      %p155 = pneg %p100
      %p156 = scmp.lt.s32.totalorder %s14, 1
      %s157 = scalar_select %p156, %s14, 1
      %s158 = smul.addr %s157, 8
      %s159 = smul.addr %s158, 8
      %s160 = scalar_lea.vmem %s3, %s159
      %p161 = scmp.lt.s32.totalorder %s14, 1
      %s162 = scalar_select %p161, %s14, 1
      %s163 = smul.addr %s162, 20
      %s164 = smul.addr %s163, 8
      %s165 = scalar_lea.vmem %s0, %s164
      %p166 = scmp.lt.s32.totalorder %s14, 1
      %s167 = scalar_select %p166, %s14, 1
      %s168 = smul.addr %s167, 8
      %s169 = smul.addr %s168, 8
      %s170 = scalar_lea.vmem %s3, %s169
      %v171 = vld [vmem:[%s165] sm:$0xff]
      %v172 = vld [vmem:[%s165 + $0x10] sm:$0xff]
      %v173 = vld [vmem:[%s165 + $0x20] sm:$0xff]
      %v174 = vld [vmem:[%s165 + $0x30] sm:$0xff]
      %v175 = vld [vmem:[%s165 + $0x40] sm:$0xff]
      %v176 = vld [vmem:[%s165 + $0x50] sm:$0xff]
      %v177 = vld [vmem:[%s165 + $0x60] sm:$0xff]
      %v178 = vld [vmem:[%s165 + $0x70] sm:$0xff]
      %v179 = vld [vmem:[%s1] sm:$0x1]
      %v181 = vperm.slane %v179, 0
      %v183 = vmul.f32 %v171, %v181
      %v184 = vmul.f32 %v172, %v181
      %v185 = vmul.f32 %v173, %v181
      %v186 = vmul.f32 %v174, %v181
      %v187 = vmul.f32 %v175, %v181
      %v188 = vmul.f32 %v176, %v181
      %v189 = vmul.f32 %v177, %v181
      %v190 = vmul.f32 %v178, %v181
      %v191 = vadd.f32 %v183, 0.0
      %v192 = vadd.f32 %v184, 0.0
      %v193 = vadd.f32 %v185, 0.0
      %v194 = vadd.f32 %v186, 0.0
      %v195 = vadd.f32 %v187, 0.0
      %v196 = vadd.f32 %v188, 0.0
      %v197 = vadd.f32 %v189, 0.0
      %v198 = vadd.f32 %v190, 0.0
      %v199 = vld [vmem:[%s165 + $0x1] sm:$0xff]
      %v200 = vld [vmem:[%s165 + $0x11] sm:$0xff]
      %v201 = vld [vmem:[%s165 + $0x21] sm:$0xff]
      %v202 = vld [vmem:[%s165 + $0x31] sm:$0xff]
      %v203 = vld [vmem:[%s165 + $0x41] sm:$0xff]
      %v204 = vld [vmem:[%s165 + $0x51] sm:$0xff]
      %v205 = vld [vmem:[%s165 + $0x61] sm:$0xff]
      %v206 = vld [vmem:[%s165 + $0x71] sm:$0xff]
      %s207 = scalar_lea.vmem %s1, 1
      %v208 = vld [vmem:[%s207] sm:$0x1]
      %v210 = vperm.slane %v208, 0
      %v212 = vmul.f32 %v199, %v210
      %v213 = vmul.f32 %v200, %v210
      %v214 = vmul.f32 %v201, %v210
      %v215 = vmul.f32 %v202, %v210
      %v216 = vmul.f32 %v203, %v210
      %v217 = vmul.f32 %v204, %v210
      %v218 = vmul.f32 %v205, %v210
      %v219 = vmul.f32 %v206, %v210
      %v220 = vadd.f32 %v191, %v212
      %v221 = vadd.f32 %v192, %v213
      %v222 = vadd.f32 %v193, %v214
      %v223 = vadd.f32 %v194, %v215
      %v224 = vadd.f32 %v195, %v216
      %v225 = vadd.f32 %v196, %v217
      %v226 = vadd.f32 %v197, %v218
      %v227 = vadd.f32 %v198, %v219
      %v228 = vld [vmem:[%s165 + $0x2] sm:$0xff]
      %v229 = vld [vmem:[%s165 + $0x12] sm:$0xff]
      %v230 = vld [vmem:[%s165 + $0x22] sm:$0xff]
      %v231 = vld [vmem:[%s165 + $0x32] sm:$0xff]
      %v232 = vld [vmem:[%s165 + $0x42] sm:$0xff]
      %v233 = vld [vmem:[%s165 + $0x52] sm:$0xff]
      %v234 = vld [vmem:[%s165 + $0x62] sm:$0xff]
      %v235 = vld [vmem:[%s165 + $0x72] sm:$0xff]
      %s236 = scalar_lea.vmem %s1, 2
      %v237 = vld [vmem:[%s236] sm:$0x1]
      %v239 = vperm.slane %v237, 0
      %v241 = vmul.f32 %v228, %v239
      %v242 = vmul.f32 %v229, %v239
      %v243 = vmul.f32 %v230, %v239
      %v244 = vmul.f32 %v231, %v239
      %v245 = vmul.f32 %v232, %v239
      %v246 = vmul.f32 %v233, %v239
      %v247 = vmul.f32 %v234, %v239
      %v248 = vmul.f32 %v235, %v239
      %v249 = vadd.f32 %v220, %v241
      %v250 = vadd.f32 %v221, %v242
      %v251 = vadd.f32 %v222, %v243
      %v252 = vadd.f32 %v223, %v244
      %v253 = vadd.f32 %v224, %v245
      %v254 = vadd.f32 %v225, %v246
      %v255 = vadd.f32 %v226, %v247
      %v256 = vadd.f32 %v227, %v248
      %s257 = scalar_lea.vmem %s165, 16
      %v258 = vld [vmem:[%s257] sm:$0xff]
      %v259 = vld [vmem:[%s257 + $0x10] sm:$0xff]
      %v260 = vld [vmem:[%s257 + $0x20] sm:$0xff]
      %v261 = vld [vmem:[%s257 + $0x30] sm:$0xff]
      %v262 = vld [vmem:[%s257 + $0x40] sm:$0xff]
      %v263 = vld [vmem:[%s257 + $0x50] sm:$0xff]
      %v264 = vld [vmem:[%s257 + $0x60] sm:$0xff]
      %v265 = vld [vmem:[%s257 + $0x70] sm:$0xff]
      %s266 = scalar_lea.vmem %s1, 3
      %v267 = vld [vmem:[%s266] sm:$0x1]
      %v269 = vperm.slane %v267, 0
      %v271 = vmul.f32 %v258, %v269
      %v272 = vmul.f32 %v259, %v269
      %v273 = vmul.f32 %v260, %v269
      %v274 = vmul.f32 %v261, %v269
      %v275 = vmul.f32 %v262, %v269
      %v276 = vmul.f32 %v263, %v269
      %v277 = vmul.f32 %v264, %v269
      %v278 = vmul.f32 %v265, %v269
      %v279 = vadd.f32 %v249, %v271
      %v280 = vadd.f32 %v250, %v272
      %v281 = vadd.f32 %v251, %v273
      %v282 = vadd.f32 %v252, %v274
      %v283 = vadd.f32 %v253, %v275
      %v284 = vadd.f32 %v254, %v276
      %v285 = vadd.f32 %v255, %v277
      %v286 = vadd.f32 %v256, %v278
      %v287 = vld [vmem:[%s257 + $0x1] sm:$0xff]
      %v288 = vld [vmem:[%s257 + $0x11] sm:$0xff]
      %v289 = vld [vmem:[%s257 + $0x21] sm:$0xff]
      %v290 = vld [vmem:[%s257 + $0x31] sm:$0xff]
      %v291 = vld [vmem:[%s257 + $0x41] sm:$0xff]
      %v292 = vld [vmem:[%s257 + $0x51] sm:$0xff]
      %v293 = vld [vmem:[%s257 + $0x61] sm:$0xff]
      %v294 = vld [vmem:[%s257 + $0x71] sm:$0xff]
      %s295 = scalar_lea.vmem %s1, 4
      %v296 = vld [vmem:[%s295] sm:$0x1]
      %v298 = vperm.slane %v296, 0
      %v300 = vmul.f32 %v287, %v298
      %v301 = vmul.f32 %v288, %v298
      %v302 = vmul.f32 %v289, %v298
      %v303 = vmul.f32 %v290, %v298
      %v304 = vmul.f32 %v291, %v298
      %v305 = vmul.f32 %v292, %v298
      %v306 = vmul.f32 %v293, %v298
      %v307 = vmul.f32 %v294, %v298
      %v308 = vadd.f32 %v279, %v300
      %v309 = vadd.f32 %v280, %v301
      %v310 = vadd.f32 %v281, %v302
      %v311 = vadd.f32 %v282, %v303
      %v312 = vadd.f32 %v283, %v304
      %v313 = vadd.f32 %v284, %v305
      %v314 = vadd.f32 %v285, %v306
      %v315 = vadd.f32 %v286, %v307
      %v316 = vld [vmem:[%s257 + $0x2] sm:$0xff]
      %v317 = vld [vmem:[%s257 + $0x12] sm:$0xff]
      %v318 = vld [vmem:[%s257 + $0x22] sm:$0xff]
      %v319 = vld [vmem:[%s257 + $0x32] sm:$0xff]
      %v320 = vld [vmem:[%s257 + $0x42] sm:$0xff]
      %v321 = vld [vmem:[%s257 + $0x52] sm:$0xff]
      %v322 = vld [vmem:[%s257 + $0x62] sm:$0xff]
      %v323 = vld [vmem:[%s257 + $0x72] sm:$0xff]
      %s324 = scalar_lea.vmem %s1, 5
      %v325 = vld [vmem:[%s324] sm:$0x1]
      %v327 = vperm.slane %v325, 0
      %v329 = vmul.f32 %v316, %v327
      %v330 = vmul.f32 %v317, %v327
      %v331 = vmul.f32 %v318, %v327
      %v332 = vmul.f32 %v319, %v327
      %v333 = vmul.f32 %v320, %v327
      %v334 = vmul.f32 %v321, %v327
      %v335 = vmul.f32 %v322, %v327
      %v336 = vmul.f32 %v323, %v327
      %v337 = vadd.f32 %v308, %v329
      %v338 = vadd.f32 %v309, %v330
      %v339 = vadd.f32 %v310, %v331
      %v340 = vadd.f32 %v311, %v332
      %v341 = vadd.f32 %v312, %v333
      %v342 = vadd.f32 %v313, %v334
      %v343 = vadd.f32 %v314, %v335
      %v344 = vadd.f32 %v315, %v336
      %s345 = scalar_lea.vmem %s165, 32
      %v346 = vld [vmem:[%s345] sm:$0xff]
      %v347 = vld [vmem:[%s345 + $0x10] sm:$0xff]
      %v348 = vld [vmem:[%s345 + $0x20] sm:$0xff]
      %v349 = vld [vmem:[%s345 + $0x30] sm:$0xff]
      %v350 = vld [vmem:[%s345 + $0x40] sm:$0xff]
      %v351 = vld [vmem:[%s345 + $0x50] sm:$0xff]
      %v352 = vld [vmem:[%s345 + $0x60] sm:$0xff]
      %v353 = vld [vmem:[%s345 + $0x70] sm:$0xff]
      %s354 = scalar_lea.vmem %s1, 6
      %v355 = vld [vmem:[%s354] sm:$0x1]
      %v357 = vperm.slane %v355, 0
      %v359 = vmul.f32 %v346, %v357
      %v360 = vmul.f32 %v347, %v357
      %v361 = vmul.f32 %v348, %v357
      %v362 = vmul.f32 %v349, %v357
      %v363 = vmul.f32 %v350, %v357
      %v364 = vmul.f32 %v351, %v357
      %v365 = vmul.f32 %v352, %v357
      %v366 = vmul.f32 %v353, %v357
      %v367 = vadd.f32 %v337, %v359
      %v368 = vadd.f32 %v338, %v360
      %v369 = vadd.f32 %v339, %v361
      %v370 = vadd.f32 %v340, %v362
      %v371 = vadd.f32 %v341, %v363
      %v372 = vadd.f32 %v342, %v364
      %v373 = vadd.f32 %v343, %v365
      %v374 = vadd.f32 %v344, %v366
      %v375 = vld [vmem:[%s345 + $0x1] sm:$0xff]
      %v376 = vld [vmem:[%s345 + $0x11] sm:$0xff]
      %v377 = vld [vmem:[%s345 + $0x21] sm:$0xff]
      %v378 = vld [vmem:[%s345 + $0x31] sm:$0xff]
      %v379 = vld [vmem:[%s345 + $0x41] sm:$0xff]
      %v380 = vld [vmem:[%s345 + $0x51] sm:$0xff]
      %v381 = vld [vmem:[%s345 + $0x61] sm:$0xff]
      %v382 = vld [vmem:[%s345 + $0x71] sm:$0xff]
      %s383 = scalar_lea.vmem %s1, 7
      %v384 = vld [vmem:[%s383] sm:$0x1]
      %v386 = vperm.slane %v384, 0
      %v388 = vmul.f32 %v375, %v386
      %v389 = vmul.f32 %v376, %v386
      %v390 = vmul.f32 %v377, %v386
      %v391 = vmul.f32 %v378, %v386
      %v392 = vmul.f32 %v379, %v386
      %v393 = vmul.f32 %v380, %v386
      %v394 = vmul.f32 %v381, %v386
      %v395 = vmul.f32 %v382, %v386
      %v396 = vadd.f32 %v367, %v388
      %v397 = vadd.f32 %v368, %v389
      %v398 = vadd.f32 %v369, %v390
      %v399 = vadd.f32 %v370, %v391
      %v400 = vadd.f32 %v371, %v392
      %v401 = vadd.f32 %v372, %v393
      %v402 = vadd.f32 %v373, %v394
      %v403 = vadd.f32 %v374, %v395
      %v404 = vld [vmem:[%s345 + $0x2] sm:$0xff]
      %v405 = vld [vmem:[%s345 + $0x12] sm:$0xff]
      %v406 = vld [vmem:[%s345 + $0x22] sm:$0xff]
      %v407 = vld [vmem:[%s345 + $0x32] sm:$0xff]
      %v408 = vld [vmem:[%s345 + $0x42] sm:$0xff]
      %v409 = vld [vmem:[%s345 + $0x52] sm:$0xff]
      %v410 = vld [vmem:[%s345 + $0x62] sm:$0xff]
      %v411 = vld [vmem:[%s345 + $0x72] sm:$0xff]
      %s412 = scalar_lea.vmem %s1, 8
      %v413 = vld [vmem:[%s412] sm:$0x1]
      %v415 = vperm.slane %v413, 0
      %v417 = vmul.f32 %v404, %v415
      %v418 = vmul.f32 %v405, %v415
      %v419 = vmul.f32 %v406, %v415
      %v420 = vmul.f32 %v407, %v415
      %v421 = vmul.f32 %v408, %v415
      %v422 = vmul.f32 %v409, %v415
      %v423 = vmul.f32 %v410, %v415
      %v424 = vmul.f32 %v411, %v415
      %v425 = vadd.f32 %v396, %v417
      %v426 = vadd.f32 %v397, %v418
      %v427 = vadd.f32 %v398, %v419
      %v428 = vadd.f32 %v399, %v420
      %v429 = vadd.f32 %v400, %v421
      %v430 = vadd.f32 %v401, %v422
      %v431 = vadd.f32 %v402, %v423
      %v432 = vadd.f32 %v403, %v424
      %v433 = vld [vmem:[%s2] sm:$0x1]
      %v435 = vperm.slane %v433, 0
      %v437 = vadd.f32 %v425, %v435
      %v438 = vadd.f32 %v426, %v435
      %v439 = vadd.f32 %v427, %v435
      %v440 = vadd.f32 %v428, %v435
      %v441 = vadd.f32 %v429, %v435
      %v442 = vadd.f32 %v430, %v435
      %v443 = vadd.f32 %v431, %v435
      %v444 = vadd.f32 %v432, %v435
      %v445 = vsub.f32 0.0, %v437
      %v446 = vsub.f32 0.0, %v438
      %v447 = vsub.f32 0.0, %v439
      %v448 = vsub.f32 0.0, %v440
      %v449 = vsub.f32 0.0, %v441
      %v450 = vsub.f32 0.0, %v442
      %v451 = vsub.f32 0.0, %v443
      %v452 = vsub.f32 0.0, %v444
      %v453 = vmul.f32 %v445, 1.442695
      %v454 = vpow.pop %v453
      %v455 = vmul.f32 %v446, 1.442695
      %v456 = vpow.pop %v455
      %v457 = vmul.f32 %v447, 1.442695
      %v458 = vpow.pop %v457
      %v459 = vmul.f32 %v448, 1.442695
      %v460 = vpow.pop %v459
      %v461 = vmul.f32 %v449, 1.442695
      %v462 = vpow.pop %v461
      %v463 = vmul.f32 %v450, 1.442695
      %v464 = vpow.pop %v463
      %v465 = vmul.f32 %v451, 1.442695
      %v466 = vpow.pop %v465
      %v467 = vmul.f32 %v452, 1.442695
      %v468 = vpow.pop %v467
      %v469 = vadd.f32 %v454, 1.0
      %v470 = vadd.f32 %v456, 1.0
      %v471 = vadd.f32 %v458, 1.0
      %v472 = vadd.f32 %v460, 1.0
      %v473 = vadd.f32 %v462, 1.0
      %v474 = vadd.f32 %v464, 1.0
      %v475 = vadd.f32 %v466, 1.0
      %v476 = vadd.f32 %v468, 1.0
      %v477 = vrcp.pop %v469
      %v478 = vmul.f32 %v469, %v477
      %v479 = vsub.f32 1.0, %v478
      %v480 = vmul.f32 %v477, %v479
      %v481 = vadd.f32 %v477, %v480
      %vm482 = vweird.f32 %v469
      %vm483 = vweird.f32 %v477
      %vm484 = vmor %vm482, %vm483
      %v485 = vsel %vm484, %v477, %v481
      %v486 = vand.u32 2147483647, %v469
      %vm487 = vcmp.eq.f32.partialorder %v486, 8.507059e+37
      %v488 = vand.u32 %v469, 2147483648
      %v489 = vor.u32 1.1754944e-38, %v488
      %v490 = vsel %vm487, %v489, %v485
      %v491 = vmul.f32 1.0, %v490
      %v492 = vrcp.pop %v470
      %v493 = vmul.f32 %v470, %v492
      %v494 = vsub.f32 1.0, %v493
      %v495 = vmul.f32 %v492, %v494
      %v496 = vadd.f32 %v492, %v495
      %vm497 = vweird.f32 %v470
      %vm498 = vweird.f32 %v492
      %vm499 = vmor %vm497, %vm498
      %v500 = vsel %vm499, %v492, %v496
      %v501 = vand.u32 2147483647, %v470
      %vm502 = vcmp.eq.f32.partialorder %v501, 8.507059e+37
      %v503 = vand.u32 %v470, 2147483648
      %v504 = vor.u32 1.1754944e-38, %v503
      %v505 = vsel %vm502, %v504, %v500
      %v506 = vmul.f32 1.0, %v505
      %v507 = vrcp.pop %v471
      %v508 = vmul.f32 %v471, %v507
      %v509 = vsub.f32 1.0, %v508
      %v510 = vmul.f32 %v507, %v509
      %v511 = vadd.f32 %v507, %v510
      %vm512 = vweird.f32 %v471
      %vm513 = vweird.f32 %v507
      %vm514 = vmor %vm512, %vm513
      %v515 = vsel %vm514, %v507, %v511
      %v516 = vand.u32 2147483647, %v471
      %vm517 = vcmp.eq.f32.partialorder %v516, 8.507059e+37
      %v518 = vand.u32 %v471, 2147483648
      %v519 = vor.u32 1.1754944e-38, %v518
      %v520 = vsel %vm517, %v519, %v515
      %v521 = vmul.f32 1.0, %v520
      %v522 = vrcp.pop %v472
      %v523 = vmul.f32 %v472, %v522
      %v524 = vsub.f32 1.0, %v523
      %v525 = vmul.f32 %v522, %v524
      %v526 = vadd.f32 %v522, %v525
      %vm527 = vweird.f32 %v472
      %vm528 = vweird.f32 %v522
      %vm529 = vmor %vm527, %vm528
      %v530 = vsel %vm529, %v522, %v526
      %v531 = vand.u32 2147483647, %v472
      %vm532 = vcmp.eq.f32.partialorder %v531, 8.507059e+37
      %v533 = vand.u32 %v472, 2147483648
      %v534 = vor.u32 1.1754944e-38, %v533
      %v535 = vsel %vm532, %v534, %v530
      %v536 = vmul.f32 1.0, %v535
      %v537 = vrcp.pop %v473
      %v538 = vmul.f32 %v473, %v537
      %v539 = vsub.f32 1.0, %v538
      %v540 = vmul.f32 %v537, %v539
      %v541 = vadd.f32 %v537, %v540
      %vm542 = vweird.f32 %v473
      %vm543 = vweird.f32 %v537
      %vm544 = vmor %vm542, %vm543
      %v545 = vsel %vm544, %v537, %v541
      %v546 = vand.u32 2147483647, %v473
      %vm547 = vcmp.eq.f32.partialorder %v546, 8.507059e+37
      %v548 = vand.u32 %v473, 2147483648
      %v549 = vor.u32 1.1754944e-38, %v548
      %v550 = vsel %vm547, %v549, %v545
      %v551 = vmul.f32 1.0, %v550
      %v552 = vrcp.pop %v474
      %v553 = vmul.f32 %v474, %v552
      %v554 = vsub.f32 1.0, %v553
      %v555 = vmul.f32 %v552, %v554
      %v556 = vadd.f32 %v552, %v555
      %vm557 = vweird.f32 %v474
      %vm558 = vweird.f32 %v552
      %vm559 = vmor %vm557, %vm558
      %v560 = vsel %vm559, %v552, %v556
      %v561 = vand.u32 2147483647, %v474
      %vm562 = vcmp.eq.f32.partialorder %v561, 8.507059e+37
      %v563 = vand.u32 %v474, 2147483648
      %v564 = vor.u32 1.1754944e-38, %v563
      %v565 = vsel %vm562, %v564, %v560
      %v566 = vmul.f32 1.0, %v565
      %v567 = vrcp.pop %v475
      %v568 = vmul.f32 %v475, %v567
      %v569 = vsub.f32 1.0, %v568
      %v570 = vmul.f32 %v567, %v569
      %v571 = vadd.f32 %v567, %v570
      %vm572 = vweird.f32 %v475
      %vm573 = vweird.f32 %v567
      %vm574 = vmor %vm572, %vm573
      %v575 = vsel %vm574, %v567, %v571
      %v576 = vand.u32 2147483647, %v475
      %vm577 = vcmp.eq.f32.partialorder %v576, 8.507059e+37
      %v578 = vand.u32 %v475, 2147483648
      %v579 = vor.u32 1.1754944e-38, %v578
      %v580 = vsel %vm577, %v579, %v575
      %v581 = vmul.f32 1.0, %v580
      %v582 = vrcp.pop %v476
      %v583 = vmul.f32 %v476, %v582
      %v584 = vsub.f32 1.0, %v583
      %v585 = vmul.f32 %v582, %v584
      %v586 = vadd.f32 %v582, %v585
      %vm587 = vweird.f32 %v476
      %vm588 = vweird.f32 %v582
      %vm589 = vmor %vm587, %vm588
      %v590 = vsel %vm589, %v582, %v586
      %v591 = vand.u32 2147483647, %v476
      %vm592 = vcmp.eq.f32.partialorder %v591, 8.507059e+37
      %v593 = vand.u32 %v476, 2147483648
      %v594 = vor.u32 1.1754944e-38, %v593
      %v595 = vsel %vm592, %v594, %v590
      %v596 = vmul.f32 1.0, %v595
      %v597 = vmul.f32 %v437, %v491
      %v598 = vmul.f32 %v438, %v506
      %v599 = vmul.f32 %v439, %v521
      %v600 = vmul.f32 %v440, %v536
      %v601 = vmul.f32 %v441, %v551
      %v602 = vmul.f32 %v442, %v566
      %v603 = vmul.f32 %v443, %v581
      %v604 = vmul.f32 %v444, %v596
      %vm605 = vcmask 261120
      %606 = vst.msk [vmem:[%s170] sm:$0xff] %vm605, %v597
      %607 = vst.msk [vmem:[%s170 + $0x8] sm:$0xff] %vm605, %v598
      %608 = vst.msk [vmem:[%s170 + $0x10] sm:$0xff] %vm605, %v599
      %609 = vst.msk [vmem:[%s170 + $0x18] sm:$0xff] %vm605, %v600
      %610 = vst.msk [vmem:[%s170 + $0x20] sm:$0xff] %vm605, %v601
      %611 = vst.msk [vmem:[%s170 + $0x28] sm:$0xff] %vm605, %v602
      %612 = vst.msk [vmem:[%s170 + $0x30] sm:$0xff] %vm605, %v603
      %613 = vst.msk [vmem:[%s170 + $0x38] sm:$0xff] %vm605, %v604
      %p614 = scmp.lt.s32.totalorder %s14, 1
      %s615 = scalar_select %p614, %s14, 1
      %s616 = smul.addr %s615, 8
      %s617 = smul.addr %s616, 8
      %s618 = scalar_lea.vmem %s3, %s617
      // Predicated region
      $region33: #{ss2d_forward.6} parent=31 // pred_check
        %p619 = pneg %p100
      $region34: #{ss2d_forward.6} parent=31 // pred_check_branch
        %621 = sbr.rel (%p619) target = $region36
      $region35: #{ss2d_forward.6} parent=31 // pred_region
        _
      $region36: #{ss2d_forward.6} parent=31 // pred_fallthru
        _
    $region32: #{ss2d_forward.6} parent=5 // pred_fallthru
      _
    %p622 = scmp.le.s32.totalorder 2, %s9
    // Predicated region
    $region37: #{ss2d_forward.6} parent=5 // pred_check
      %p623 = pneg %p622
    $region38: #{ss2d_forward.6} parent=5 // pred_check_branch
      %625 = sbr.rel (%p623) target = $region40
    $region39: #{ss2d_forward.6} parent=5 // pred_region
      %s626 = ssub.s32 %s9, 2
      // Predicated region
      $region41: #{ss2d_forward.6} parent=39 // pred_check
        %p627 = pneg %p106
      $region42: #{ss2d_forward.6} parent=39 // pred_check_branch
        %629 = sbr.rel (%p627) target = $region44
      $region43: #{ss2d_forward.6} parent=39 // pred_region
        %p630 = scmp.lt.s32.totalorder %s15, 1
        %s631 = scalar_select %p630, %s15, 1
        %s632 = smul.addr %s631, 8
        %s633 = smul.addr %s632, 8
        %s634 = scalar_lea.vmem %s3, %s633
      $region44: #{ss2d_forward.6} parent=39 // pred_fallthru
        _
    $region40: #{ss2d_forward.6} parent=5 // pred_fallthru
      _
  $region6: #{ss2d_forward.6} parent=0 // loop_footer
    %s13 = sadd.s32 1, %s9
  $region7: #{ss2d_forward.6} parent=0 // loop_footer_branch
    %8 = sbr.rel target = $region3
  $region8: #{ss2d_forward.6} parent=0 // loop_exit
    _

// kernel: ss2d_forward.7
$region0: #{ss2d_forward.7}
  #allocation0 [shape = 'u32[]', space=smem, size = 0x4, offset = 0x4, fixed_abs, tag = 'smem constant byte address 0x4 - core index']
  #allocation1 [shape = 'u32[72,128]{1,0:T(1,128)}', space=vmem, size = 0x9000, scoped, tag = 'internal scratch']
  %s0 = inlined_call_operand.vmem [shape: f32[4,128,32], index: 0, kind: input, shape index: {}]
  %s1 = inlined_call_operand.vmem [shape: f32[4,32,64], index: 1, kind: input, shape index: {}]
  %s2 = inlined_call_operand.vmem [shape: f32[4,128,64], index: 2, kind: output, shape index: {}]
  %s3 = sld [smem:[#allocation0]]
  $region41: #{ss2d_forward.7} parent=0
    _
  %s5 = ssub.s32 1, %s3
  %s6 = scalar_select 0, %s5, %s3
  loop: start=0, step=1, limit=6
  $region2: #{ss2d_forward.7} parent=0 // loop_pre_header
    _
  $region3: #{ss2d_forward.7} parent=0 // loop_header
    %s8 = sphi 0, %s12
    %p9 = scmp.ge.s32.totalorder %s8, 6
    %s15 = sphi 0, %s27
    %s16 = sphi 0, %s23
    %s17 = sphi 0, %s15
    %s18 = sphi 0, %s16
    %s19 = sphi 0, %s17
    %s20 = sphi 0, %s18
    %s32 = sphi 0, %s34
    %s35 = sphi 0, %s32
    %s36 = sphi 0, %s35
    %s52 = sphi 0, %s36
    %s58 = sphi 0, %s60
    %s61 = sphi 0, %s58
    %s62 = sphi 0, %s61
    %s78 = sphi 0, %s62
    %s86 = sphi 0, %s88
    %s89 = sphi 0, %s86
    %s90 = sphi 0, %s89
    %s106 = sphi 0, %s90
  $region4: #{ss2d_forward.7} parent=0 // loop_header_branch
    %11 = sbr.rel (%p9) target = $region8
  $region5: #{ss2d_forward.7} parent=0 // loop_body
    %s13 = ssub.s32 %s8, 1
    %s14 = ssub.s32 %s8, 2
    %s21 = sadd.s32 1, %s16
    %p22 = scmp.ge.s32.totalorder %s21, 1
    %s23 = scalar_select %p22, 0, %s21
    %s24 = sadd.s32 1, %s15
    %s25 = scalar_select %p22, %s24, %s15
    %p26 = scmp.ge.s32.totalorder %s25, 4
    %s27 = scalar_select %p26, 0, %s25
    %s28 = ssub.s32 %s15, %s27
    %s29 = ssub.s32 %s16, %s23
    %s30 = sor.u32 %s28, %s29
    %p31 = scmp.eq.s32.totalorder %s30, 0
    %s33 = sadd.s32 %s32, 1
    %s34 = scalar_select %p31, %s32, %s33
    %p37 = pneg %p31
    %p38 = scmp.eq.s32.totalorder %s8, 3
    %p39 = por %p37, %p38
    %p40 = scmp.ne.s32.totalorder %s32, %s35
    %p41 = scmp.eq.s32.totalorder %s8, 0
    %p42 = por %p40, %p41
    %p43 = scmp.ne.s32.totalorder %s32, %s35
    %p44 = scmp.eq.s32.totalorder %s13, 3
    %p45 = por %p43, %p44
    %p46 = scmp.ne.s32.totalorder %s35, %s36
    %p47 = scmp.eq.s32.totalorder %s13, 0
    %p48 = por %p46, %p47
    %p49 = scmp.ne.s32.totalorder %s35, %s36
    %p50 = scmp.eq.s32.totalorder %s14, 3
    %p51 = por %p49, %p50
    %p53 = scmp.ne.s32.totalorder %s36, %s52
    %p54 = scmp.eq.s32.totalorder %s14, 0
    %p55 = por %p53, %p54
    %s56 = ssub.s32 %s15, %s27
    %p57 = scmp.eq.s32.totalorder %s56, 0
    %s59 = sadd.s32 %s58, 1
    %s60 = scalar_select %p57, %s58, %s59
    %p63 = pneg %p57
    %p64 = scmp.eq.s32.totalorder %s8, 3
    %p65 = por %p63, %p64
    %p66 = scmp.ne.s32.totalorder %s58, %s61
    %p67 = scmp.eq.s32.totalorder %s8, 0
    %p68 = por %p66, %p67
    %p69 = scmp.ne.s32.totalorder %s58, %s61
    %p70 = scmp.eq.s32.totalorder %s13, 3
    %p71 = por %p69, %p70
    %p72 = scmp.ne.s32.totalorder %s61, %s62
    %p73 = scmp.eq.s32.totalorder %s13, 0
    %p74 = por %p72, %p73
    %p75 = scmp.ne.s32.totalorder %s61, %s62
    %p76 = scmp.eq.s32.totalorder %s14, 3
    %p77 = por %p75, %p76
    %p79 = scmp.ne.s32.totalorder %s62, %s78
    %p80 = scmp.eq.s32.totalorder %s14, 0
    %p81 = por %p79, %p80
    %s82 = ssub.s32 %s15, %s27
    %s83 = ssub.s32 %s16, %s23
    %s84 = sor.u32 %s82, %s83
    %p85 = scmp.eq.s32.totalorder %s84, 0
    %s87 = sadd.s32 %s86, 1
    %s88 = scalar_select %p85, %s86, %s87
    %p91 = pneg %p85
    %p92 = scmp.eq.s32.totalorder %s8, 3
    %p93 = por %p91, %p92
    %p94 = scmp.ne.s32.totalorder %s86, %s89
    %p95 = scmp.eq.s32.totalorder %s8, 0
    %p96 = por %p94, %p95
    %p97 = scmp.ne.s32.totalorder %s86, %s89
    %p98 = scmp.eq.s32.totalorder %s13, 3
    %p99 = por %p97, %p98
    %p100 = scmp.ne.s32.totalorder %s89, %s90
    %p101 = scmp.eq.s32.totalorder %s13, 0
    %p102 = por %p100, %p101
    %p103 = scmp.ne.s32.totalorder %s89, %s90
    %p104 = scmp.eq.s32.totalorder %s14, 3
    %p105 = por %p103, %p104
    %p107 = scmp.ne.s32.totalorder %s90, %s106
    %p108 = scmp.eq.s32.totalorder %s14, 0
    %p109 = por %p107, %p108
    %p110 = scmp.le.s32.totalorder 1, %s8
    %p111 = scmp.lt.s32.totalorder %s8, 5
    %p112 = pnand %p110, %p111
    %p113 = pneg %p112
    // Predicated region
    $region9: #{ss2d_forward.7} parent=5 // pred_check
      _
    $region10: #{ss2d_forward.7} parent=5 // pred_check_branch
      %115 = sbr.rel (%p112) target = $region12
    $region11: #{ss2d_forward.7} parent=5 // pred_region
      %s116 = ssub.s32 %s8, 1
    $region12: #{ss2d_forward.7} parent=5 // pred_fallthru
      _
    %p117 = scmp.lt.s32.totalorder %s8, 4
    // Predicated region
    $region13: #{ss2d_forward.7} parent=5 // pred_check
      %p118 = pneg %p117
    $region14: #{ss2d_forward.7} parent=5 // pred_check_branch
      %120 = sbr.rel (%p118) target = $region16
    $region15: #{ss2d_forward.7} parent=5 // pred_region
      // Predicated region
      $region17: #{ss2d_forward.7} parent=15 // pred_check
        %p121 = pneg %p42
      $region18: #{ss2d_forward.7} parent=15 // pred_check_branch
        %123 = sbr.rel (%p121) target = $region20
      $region19: #{ss2d_forward.7} parent=15 // pred_region
        %s124 = smul.u32 16, %s16
        %p125 = scmp.lt.s32.totalorder %s15, 3
        %s126 = scalar_select %p125, %s15, 3
        %p127 = scmp.lt.s32.totalorder %s124, 15
        %s128 = scalar_select %p127, %s124, 15
        %s129 = smul.addr %s126, 16
        %s130 = sadd.s32 %s128, %s129
        %s131 = smul.addr %s130, 8
        %s132 = scalar_lea.vmem %s0, %s131
        %s133 = smul.u32 16, %s16
      $region20: #{ss2d_forward.7} parent=15 // pred_fallthru
        _
      // Predicated region
      $region21: #{ss2d_forward.7} parent=15 // pred_check
        %p134 = pneg %p68
      $region22: #{ss2d_forward.7} parent=15 // pred_check_branch
        %136 = sbr.rel (%p134) target = $region24
      $region23: #{ss2d_forward.7} parent=15 // pred_region
        %p137 = scmp.lt.s32.totalorder %s15, 3
        %s138 = scalar_select %p137, %s15, 3
        %s139 = smul.addr %s138, 4
        %s140 = smul.addr %s139, 8
        %s141 = scalar_lea.vmem %s1, %s140
      $region24: #{ss2d_forward.7} parent=15 // pred_fallthru
        _
    $region16: #{ss2d_forward.7} parent=5 // pred_fallthru
      _
    %p142 = scmp.le.s32.totalorder 1, %s8
    %p143 = scmp.lt.s32.totalorder %s8, 5
    %p144 = pnand %p142, %p143
    %p145 = pneg %p144
    // Predicated region
    $region25: #{ss2d_forward.7} parent=5 // pred_check
      _
    $region26: #{ss2d_forward.7} parent=5 // pred_check_branch
      %147 = sbr.rel (%p144) target = $region28
    $region27: #{ss2d_forward.7} parent=5 // pred_region
      %s148 = ssub.s32 %s8, 1
      %s149 = smul.u32 16, %s18
      %p150 = scmp.lt.s32.totalorder %s17, 3
      %s151 = scalar_select %p150, %s17, 3
      %p152 = scmp.lt.s32.totalorder %s149, 15
      %s153 = scalar_select %p152, %s149, 15
      %s154 = smul.addr %s151, 16
      %s155 = sadd.s32 %s153, %s154
      %s156 = smul.addr %s155, 8
      %s157 = scalar_lea.vmem %s0, %s156
      %p158 = pneg %p48
      %p159 = pneg %p45
      %p160 = scmp.lt.s32.totalorder %s17, 3
      %s161 = scalar_select %p160, %s17, 3
      %s162 = smul.addr %s161, 4
      %s163 = smul.addr %s162, 8
      %s164 = scalar_lea.vmem %s1, %s163
      %p165 = pneg %p74
      %p166 = pneg %p71
      %p167 = pneg %p102
      %p168 = pneg %p99
      %s169 = smul.u32 16, %s18
      %p170 = scmp.lt.s32.totalorder %s17, 3
      %s171 = scalar_select %p170, %s17, 3
      %p172 = scmp.lt.s32.totalorder %s169, 15
      %s173 = scalar_select %p172, %s169, 15
      %s174 = smul.addr %s171, 16
      %s175 = sadd.s32 %s173, %s174
      %s176 = smul.addr %s175, 8
      %s177 = scalar_lea.vmem %s2, %s176
      %s178 = smul.u32 16, %s18
      %p179 = scmp.lt.s32.totalorder %s17, 3
      %s180 = scalar_select %p179, %s17, 3
      %p181 = scmp.lt.s32.totalorder %s178, 15
      %s182 = scalar_select %p181, %s178, 15
      %s183 = smul.addr %s180, 16
      %s184 = sadd.s32 %s182, %s183
      %s185 = smul.addr %s184, 8
      %s186 = scalar_lea.vmem %s0, %s185
      %s187 = smul.u32 16, %s18
      %p188 = scmp.lt.s32.totalorder %s17, 3
      %s189 = scalar_select %p188, %s17, 3
      %s190 = smul.addr %s189, 4
      %s191 = smul.addr %s190, 8
      %s192 = scalar_lea.vmem %s1, %s191
      %s193 = smul.u32 16, %s18
      %p194 = scmp.lt.s32.totalorder %s17, 3
      %s195 = scalar_select %p194, %s17, 3
      %p196 = scmp.lt.s32.totalorder %s193, 15
      %s197 = scalar_select %p196, %s193, 15
      %s198 = smul.addr %s195, 16
      %s199 = sadd.s32 %s197, %s198
      %s200 = smul.addr %s199, 8
      %s201 = scalar_lea.vmem %s2, %s200
      %s202 = smul.u32 16, %s18
      %v203 = vld [vmem:[%s186] sm:$0xff]
      %v204 = vld [vmem:[%s186 + $0x8] sm:$0xff]
      %v205 = vld [vmem:[%s186 + $0x10] sm:$0xff]
      %v206 = vld [vmem:[%s186 + $0x18] sm:$0xff]
      %v207 = vld [vmem:[%s186 + $0x20] sm:$0xff]
      %v208 = vld [vmem:[%s186 + $0x28] sm:$0xff]
      %v209 = vld [vmem:[%s186 + $0x30] sm:$0xff]
      %v210 = vld [vmem:[%s186 + $0x38] sm:$0xff]
      %v211 = vld [vmem:[%s186 + $0x40] sm:$0xff]
      %v212 = vld [vmem:[%s186 + $0x48] sm:$0xff]
      %v213 = vld [vmem:[%s186 + $0x50] sm:$0xff]
      %v214 = vld [vmem:[%s186 + $0x58] sm:$0xff]
      %v215 = vld [vmem:[%s186 + $0x60] sm:$0xff]
      %v216 = vld [vmem:[%s186 + $0x68] sm:$0xff]
      %v217 = vld [vmem:[%s186 + $0x70] sm:$0xff]
      %v218 = vld [vmem:[%s186 + $0x78] sm:$0xff]
      %v219 = vld [vmem:[%s192] sm:$0xff]
      %v220 = vld [vmem:[%s192 + $0x8] sm:$0xff]
      %v221 = vld [vmem:[%s192 + $0x10] sm:$0xff]
      %v222 = vld [vmem:[%s192 + $0x18] sm:$0xff]
      %vm223 = vcmask 261120
      %v225 = vsel %vm223, %v203, 0
      %v228 = vsel %vm223, %v204, 0
      %v231 = vsel %vm223, %v205, 0
      %v234 = vsel %vm223, %v206, 0
      %v237 = vsel %vm223, %v207, 0
      %v240 = vsel %vm223, %v208, 0
      %v243 = vsel %vm223, %v209, 0
      %v246 = vsel %vm223, %v210, 0
      %v249 = vsel %vm223, %v211, 0
      %v252 = vsel %vm223, %v212, 0
      %v255 = vsel %vm223, %v213, 0
      %v258 = vsel %vm223, %v214, 0
      %v261 = vsel %vm223, %v215, 0
      %v264 = vsel %vm223, %v216, 0
      %v267 = vsel %vm223, %v217, 0
      %v270 = vsel %vm223, %v218, 0
      %272 = vmatpush.msra.mxu0 0.0
      %273 = vmatpush.msra.mxu0 0.0
      %274 = vmatpush.msra.mxu0 0.0
      %275 = vmatpush.msra.mxu0 0.0
      %276 = vmatpush.msra.mxu0 0.0
      %277 = vmatpush.msra.mxu0 0.0
      %278 = vmatpush.msra.mxu0 0.0
      %279 = vmatpush.msra.mxu0 0.0
      %280 = vmatpush.msra.mxu0 0.0
      %281 = vmatpush.msra.mxu0 0.0
      %282 = vmatpush.msra.mxu0 0.0
      %283 = vmatpush.msra.mxu0 0.0
      %284 = vmatpush.msra.mxu0 %v222
      %285 = vmatpush.msra.mxu0 %v221
      %286 = vmatpush.msra.mxu0 %v220
      %287 = vmatpush.msra.mxu0 %v219
      %288 = vmatmul.f32.gmra.mxu0 %v225
      %v289 = vpop.f32.mrf.mxu0
      %v290 = vadd.f32 0.0, %v289
      %291 = vmatmul.f32.gmra.mxu0 %v228
      %v292 = vpop.f32.mrf.mxu0
      %v293 = vadd.f32 0.0, %v292
      %294 = vmatmul.f32.gmra.mxu0 %v231
      %v295 = vpop.f32.mrf.mxu0
      %v296 = vadd.f32 0.0, %v295
      %297 = vmatmul.f32.gmra.mxu0 %v234
      %v298 = vpop.f32.mrf.mxu0
      %v299 = vadd.f32 0.0, %v298
      %300 = vmatmul.f32.gmra.mxu0 %v237
      %v301 = vpop.f32.mrf.mxu0
      %v302 = vadd.f32 0.0, %v301
      %303 = vmatmul.f32.gmra.mxu0 %v240
      %v304 = vpop.f32.mrf.mxu0
      %v305 = vadd.f32 0.0, %v304
      %306 = vmatmul.f32.gmra.mxu0 %v243
      %v307 = vpop.f32.mrf.mxu0
      %v308 = vadd.f32 0.0, %v307
      %309 = vmatmul.f32.gmra.mxu0 %v246
      %v310 = vpop.f32.mrf.mxu0
      %v311 = vadd.f32 0.0, %v310
      %312 = vmatmul.f32.gmra.mxu0 %v249
      %v313 = vpop.f32.mrf.mxu0
      %v314 = vadd.f32 0.0, %v313
      %315 = vmatmul.f32.gmra.mxu0 %v252
      %v316 = vpop.f32.mrf.mxu0
      %v317 = vadd.f32 0.0, %v316
      %318 = vmatmul.f32.gmra.mxu0 %v255
      %v319 = vpop.f32.mrf.mxu0
      %v320 = vadd.f32 0.0, %v319
      %321 = vmatmul.f32.gmra.mxu0 %v258
      %v322 = vpop.f32.mrf.mxu0
      %v323 = vadd.f32 0.0, %v322
      %324 = vmatmul.f32.gmra.mxu0 %v261
      %v325 = vpop.f32.mrf.mxu0
      %v326 = vadd.f32 0.0, %v325
      %327 = vmatmul.f32.gmra.mxu0 %v264
      %v328 = vpop.f32.mrf.mxu0
      %v329 = vadd.f32 0.0, %v328
      %330 = vmatmul.f32.gmra.mxu0 %v267
      %v331 = vpop.f32.mrf.mxu0
      %v332 = vadd.f32 0.0, %v331
      %333 = vmatmul.f32.gmra.mxu0 %v270
      %v334 = vpop.f32.mrf.mxu0
      %v335 = vadd.f32 0.0, %v334
      %336 = vdwg.mxu0
      %vm337 = vcmask 523264
      %338 = vst.msk [vmem:[%s201] sm:$0xff] %vm337, %v290
      %339 = vst.msk [vmem:[%s201 + $0x8] sm:$0xff] %vm337, %v293
      %340 = vst.msk [vmem:[%s201 + $0x10] sm:$0xff] %vm337, %v296
      %341 = vst.msk [vmem:[%s201 + $0x18] sm:$0xff] %vm337, %v299
      %342 = vst.msk [vmem:[%s201 + $0x20] sm:$0xff] %vm337, %v302
      %343 = vst.msk [vmem:[%s201 + $0x28] sm:$0xff] %vm337, %v305
      %344 = vst.msk [vmem:[%s201 + $0x30] sm:$0xff] %vm337, %v308
      %345 = vst.msk [vmem:[%s201 + $0x38] sm:$0xff] %vm337, %v311
      %346 = vst.msk [vmem:[%s201 + $0x40] sm:$0xff] %vm337, %v314
      %347 = vst.msk [vmem:[%s201 + $0x48] sm:$0xff] %vm337, %v317
      %348 = vst.msk [vmem:[%s201 + $0x50] sm:$0xff] %vm337, %v320
      %349 = vst.msk [vmem:[%s201 + $0x58] sm:$0xff] %vm337, %v323
      %350 = vst.msk [vmem:[%s201 + $0x60] sm:$0xff] %vm337, %v326
      %351 = vst.msk [vmem:[%s201 + $0x68] sm:$0xff] %vm337, %v329
      %352 = vst.msk [vmem:[%s201 + $0x70] sm:$0xff] %vm337, %v332
      %353 = vst.msk [vmem:[%s201 + $0x78] sm:$0xff] %vm337, %v335
      %s354 = smul.u32 16, %s18
      %p355 = scmp.lt.s32.totalorder %s17, 3
      %s356 = scalar_select %p355, %s17, 3
      %p357 = scmp.lt.s32.totalorder %s354, 15
      %s358 = scalar_select %p357, %s354, 15
      %s359 = smul.addr %s356, 16
      %s360 = sadd.s32 %s358, %s359
      %s361 = smul.addr %s360, 8
      %s362 = scalar_lea.vmem %s2, %s361
      // Predicated region
      $region29: #{ss2d_forward.7} parent=27 // pred_check
        %p363 = pneg %p99
      $region30: #{ss2d_forward.7} parent=27 // pred_check_branch
        %365 = sbr.rel (%p363) target = $region32
      $region31: #{ss2d_forward.7} parent=27 // pred_region
        %s366 = smul.u32 16, %s18
      $region32: #{ss2d_forward.7} parent=27 // pred_fallthru
        _
    $region28: #{ss2d_forward.7} parent=5 // pred_fallthru
      _
    %p367 = scmp.le.s32.totalorder 2, %s8
    // Predicated region
    $region33: #{ss2d_forward.7} parent=5 // pred_check
      %p368 = pneg %p367
    $region34: #{ss2d_forward.7} parent=5 // pred_check_branch
      %370 = sbr.rel (%p368) target = $region36
    $region35: #{ss2d_forward.7} parent=5 // pred_region
      %s371 = ssub.s32 %s8, 2
      // Predicated region
      $region37: #{ss2d_forward.7} parent=35 // pred_check
        %p372 = pneg %p105
      $region38: #{ss2d_forward.7} parent=35 // pred_check_branch
        %374 = sbr.rel (%p372) target = $region40
      $region39: #{ss2d_forward.7} parent=35 // pred_region
        %s375 = smul.u32 16, %s20
        %p376 = scmp.lt.s32.totalorder %s19, 3
        %s377 = scalar_select %p376, %s19, 3
        %p378 = scmp.lt.s32.totalorder %s375, 15
        %s379 = scalar_select %p378, %s375, 15
        %s380 = smul.addr %s377, 16
        %s381 = sadd.s32 %s379, %s380
        %s382 = smul.addr %s381, 8
        %s383 = scalar_lea.vmem %s2, %s382
      $region40: #{ss2d_forward.7} parent=35 // pred_fallthru
        _
    $region36: #{ss2d_forward.7} parent=5 // pred_fallthru
      _
  $region6: #{ss2d_forward.7} parent=0 // loop_footer
    %s12 = sadd.s32 1, %s8
  $region7: #{ss2d_forward.7} parent=0 // loop_footer_branch
    %7 = sbr.rel target = $region3
  $region8: #{ss2d_forward.7} parent=0 // loop_exit
    _

// kernel: ss2d_forward.9
$region0: #{ss2d_forward.9}
  #allocation0 [shape = 'u32[]', space=smem, size = 0x4, offset = 0x4, fixed_abs, tag = 'smem constant byte address 0x4 - core index']
  #allocation1 [shape = 'u32[72,128]{1,0:T(1,128)}', space=vmem, size = 0x9000, scoped, tag = 'internal scratch']
  %s0 = inlined_call_operand.vmem [shape: f32[128,32], index: 0, kind: input, shape index: {}]
  %s1 = inlined_call_operand.vmem [shape: f32[128,32], index: 1, kind: input, shape index: {}]
  %s2 = inlined_call_operand.vmem [shape: f32[1,32], index: 2, kind: input, shape index: {}]
  %s3 = inlined_call_operand.vmem [shape: f32[1,32], index: 3, kind: input, shape index: {}]
  %s4 = inlined_call_operand.vmem [shape: f32[32,16], index: 4, kind: input, shape index: {}]
  %s5 = inlined_call_operand.hbm [shape: f32[128,16], index: 5, kind: output, shape index: {}]
  %s6 = sld [smem:[#allocation0]]
  $region30: #{ss2d_forward.9} parent=0
    _
  %s8 = ssub.s32 1, %s6
  %s9 = scalar_select 0, %s8, %s6
  $region1: #{ss2d_forward.9} parent=0
    #allocation2 [shape = 'u8[65536]{0}', space=vmem, size = 0x10000, scoped, tag = 'output window, operand 0, single buffered']
    #allocation3 [shape = 's32[1]{0}', space=sflag, size = 0x4, scoped, tag = 'scoped memory for ss2d_forward.9']
    %10 = vsyncpa [#allocation3], 0
    // Predicated region
    $region2: #{ss2d_forward.9} parent=1 // pred_check
      _
    $region3: #{ss2d_forward.9} parent=1 // pred_check_branch
      %12 = sbr.rel (0) target = $region5
    $region4: #{ss2d_forward.9} parent=1 // pred_region
      _
    $region5: #{ss2d_forward.9} parent=1 // pred_fallthru
      _
    // Predicated region
    $region6: #{ss2d_forward.9} parent=1 // pred_check
      _
    $region7: #{ss2d_forward.9} parent=1 // pred_check_branch
      %14 = sbr.rel (0) target = $region9
    $region8: #{ss2d_forward.9} parent=1 // pred_region
      _
    $region9: #{ss2d_forward.9} parent=1 // pred_fallthru
      _
    // Predicated region
    $region10: #{ss2d_forward.9} parent=1 // pred_check
      _
    $region11: #{ss2d_forward.9} parent=1 // pred_check_branch
      %16 = sbr.rel (0) target = $region13
    $region12: #{ss2d_forward.9} parent=1 // pred_region
      _
    $region13: #{ss2d_forward.9} parent=1 // pred_fallthru
      _
    // Predicated region
    $region14: #{ss2d_forward.9} parent=1 // pred_check
      _
    $region15: #{ss2d_forward.9} parent=1 // pred_check_branch
      %18 = sbr.rel (0) target = $region17
    $region16: #{ss2d_forward.9} parent=1 // pred_region
      _
    $region17: #{ss2d_forward.9} parent=1 // pred_fallthru
      _
    // Predicated region
    $region18: #{ss2d_forward.9} parent=1 // pred_check
      _
    $region19: #{ss2d_forward.9} parent=1 // pred_check_branch
      %20 = sbr.rel (0) target = $region21
    $region20: #{ss2d_forward.9} parent=1 // pred_region
      _
    $region21: #{ss2d_forward.9} parent=1 // pred_fallthru
      _
    %v21 = vld [vmem:[%s0] sm:$0xff]
    %v22 = vld [vmem:[%s0 + $0x8] sm:$0xff]
    %v23 = vld [vmem:[%s0 + $0x10] sm:$0xff]
    %v24 = vld [vmem:[%s0 + $0x18] sm:$0xff]
    %v25 = vld [vmem:[%s0 + $0x20] sm:$0xff]
    %v26 = vld [vmem:[%s0 + $0x28] sm:$0xff]
    %v27 = vld [vmem:[%s0 + $0x30] sm:$0xff]
    %v28 = vld [vmem:[%s0 + $0x38] sm:$0xff]
    %v29 = vld [vmem:[%s0 + $0x40] sm:$0xff]
    %v30 = vld [vmem:[%s0 + $0x48] sm:$0xff]
    %v31 = vld [vmem:[%s0 + $0x50] sm:$0xff]
    %v32 = vld [vmem:[%s0 + $0x58] sm:$0xff]
    %v33 = vld [vmem:[%s0 + $0x60] sm:$0xff]
    %v34 = vld [vmem:[%s0 + $0x68] sm:$0xff]
    %v35 = vld [vmem:[%s0 + $0x70] sm:$0xff]
    %v36 = vld [vmem:[%s0 + $0x78] sm:$0xff]
    %v37 = vld [vmem:[%s1] sm:$0xff]
    %v38 = vld [vmem:[%s1 + $0x8] sm:$0xff]
    %v39 = vld [vmem:[%s1 + $0x10] sm:$0xff]
    %v40 = vld [vmem:[%s1 + $0x18] sm:$0xff]
    %v41 = vld [vmem:[%s1 + $0x20] sm:$0xff]
    %v42 = vld [vmem:[%s1 + $0x28] sm:$0xff]
    %v43 = vld [vmem:[%s1 + $0x30] sm:$0xff]
    %v44 = vld [vmem:[%s1 + $0x38] sm:$0xff]
    %v45 = vld [vmem:[%s1 + $0x40] sm:$0xff]
    %v46 = vld [vmem:[%s1 + $0x48] sm:$0xff]
    %v47 = vld [vmem:[%s1 + $0x50] sm:$0xff]
    %v48 = vld [vmem:[%s1 + $0x58] sm:$0xff]
    %v49 = vld [vmem:[%s1 + $0x60] sm:$0xff]
    %v50 = vld [vmem:[%s1 + $0x68] sm:$0xff]
    %v51 = vld [vmem:[%s1 + $0x70] sm:$0xff]
    %v52 = vld [vmem:[%s1 + $0x78] sm:$0xff]
    %vm53 = vcmask 261120
    %v54 = vsel %vm53, %v21, 0.0
    %55 = vadd.xlane.f32.xlu0 %v54
    %v56 = vpop.xlane.xlu0 %55
    %v57 = vsel %vm53, %v22, 0.0
    %58 = vadd.xlane.f32.xlu0 %v57
    %v59 = vpop.xlane.xlu0 %58
    %v60 = vsel %vm53, %v23, 0.0
    %61 = vadd.xlane.f32.xlu0 %v60
    %v62 = vpop.xlane.xlu0 %61
    %v63 = vsel %vm53, %v24, 0.0
    %64 = vadd.xlane.f32.xlu0 %v63
    %v65 = vpop.xlane.xlu0 %64
    %v66 = vsel %vm53, %v25, 0.0
    %67 = vadd.xlane.f32.xlu0 %v66
    %v68 = vpop.xlane.xlu0 %67
    %v69 = vsel %vm53, %v26, 0.0
    %70 = vadd.xlane.f32.xlu0 %v69
    %v71 = vpop.xlane.xlu0 %70
    %v72 = vsel %vm53, %v27, 0.0
    %73 = vadd.xlane.f32.xlu0 %v72
    %v74 = vpop.xlane.xlu0 %73
    %v75 = vsel %vm53, %v28, 0.0
    %76 = vadd.xlane.f32.xlu0 %v75
    %v77 = vpop.xlane.xlu0 %76
    %v78 = vsel %vm53, %v29, 0.0
    %79 = vadd.xlane.f32.xlu0 %v78
    %v80 = vpop.xlane.xlu0 %79
    %v81 = vsel %vm53, %v30, 0.0
    %82 = vadd.xlane.f32.xlu0 %v81
    %v83 = vpop.xlane.xlu0 %82
    %v84 = vsel %vm53, %v31, 0.0
    %85 = vadd.xlane.f32.xlu0 %v84
    %v86 = vpop.xlane.xlu0 %85
    %v87 = vsel %vm53, %v32, 0.0
    %88 = vadd.xlane.f32.xlu0 %v87
    %v89 = vpop.xlane.xlu0 %88
    %v90 = vsel %vm53, %v33, 0.0
    %91 = vadd.xlane.f32.xlu0 %v90
    %v92 = vpop.xlane.xlu0 %91
    %v93 = vsel %vm53, %v34, 0.0
    %94 = vadd.xlane.f32.xlu0 %v93
    %v95 = vpop.xlane.xlu0 %94
    %v96 = vsel %vm53, %v35, 0.0
    %97 = vadd.xlane.f32.xlu0 %v96
    %v98 = vpop.xlane.xlu0 %97
    %v99 = vsel %vm53, %v36, 0.0
    %100 = vadd.xlane.f32.xlu0 %v99
    %v101 = vpop.xlane.xlu0 %100
    %v102 = vrcp.pop 32.0
    %v103 = vmul.f32 32.0, %v102
    %v104 = vsub.f32 1.0, %v103
    %v105 = vmul.f32 %v102, %v104
    %v106 = vadd.f32 %v102, %v105
    %vm107 = vweird.f32 %v102
    %v108 = vsel %vm107, %v102, %v106
    %v109 = vmul.f32 %v56, %v108
    %v110 = vmul.f32 %v59, %v108
    %v111 = vmul.f32 %v62, %v108
    %v112 = vmul.f32 %v65, %v108
    %v113 = vmul.f32 %v68, %v108
    %v114 = vmul.f32 %v71, %v108
    %v115 = vmul.f32 %v74, %v108
    %v116 = vmul.f32 %v77, %v108
    %v117 = vmul.f32 %v80, %v108
    %v118 = vmul.f32 %v83, %v108
    %v119 = vmul.f32 %v86, %v108
    %v120 = vmul.f32 %v89, %v108
    %v121 = vmul.f32 %v92, %v108
    %v122 = vmul.f32 %v95, %v108
    %v123 = vmul.f32 %v98, %v108
    %v124 = vmul.f32 %v101, %v108
    %v125 = vsub.f32 %v21, %v109
    %v126 = vsub.f32 %v22, %v110
    %v127 = vsub.f32 %v23, %v111
    %v128 = vsub.f32 %v24, %v112
    %v129 = vsub.f32 %v25, %v113
    %v130 = vsub.f32 %v26, %v114
    %v131 = vsub.f32 %v27, %v115
    %v132 = vsub.f32 %v28, %v116
    %v133 = vsub.f32 %v29, %v117
    %v134 = vsub.f32 %v30, %v118
    %v135 = vsub.f32 %v31, %v119
    %v136 = vsub.f32 %v32, %v120
    %v137 = vsub.f32 %v33, %v121
    %v138 = vsub.f32 %v34, %v122
    %v139 = vsub.f32 %v35, %v123
    %v140 = vsub.f32 %v36, %v124
    %v141 = vmul.f32 %v125, %v125
    %v142 = vmul.f32 %v126, %v126
    %v143 = vmul.f32 %v127, %v127
    %v144 = vmul.f32 %v128, %v128
    %v145 = vmul.f32 %v129, %v129
    %v146 = vmul.f32 %v130, %v130
    %v147 = vmul.f32 %v131, %v131
    %v148 = vmul.f32 %v132, %v132
    %v149 = vmul.f32 %v133, %v133
    %v150 = vmul.f32 %v134, %v134
    %v151 = vmul.f32 %v135, %v135
    %v152 = vmul.f32 %v136, %v136
    %v153 = vmul.f32 %v137, %v137
    %v154 = vmul.f32 %v138, %v138
    %v155 = vmul.f32 %v139, %v139
    %v156 = vmul.f32 %v140, %v140
    %v157 = vsel %vm53, %v141, 0.0
    %158 = vadd.xlane.f32.xlu0 %v157
    %v159 = vpop.xlane.xlu0 %158
    %v160 = vsel %vm53, %v142, 0.0
    %161 = vadd.xlane.f32.xlu0 %v160
    %v162 = vpop.xlane.xlu0 %161
    %v163 = vsel %vm53, %v143, 0.0
    %164 = vadd.xlane.f32.xlu0 %v163
    %v165 = vpop.xlane.xlu0 %164
    %v166 = vsel %vm53, %v144, 0.0
    %167 = vadd.xlane.f32.xlu0 %v166
    %v168 = vpop.xlane.xlu0 %167
    %v169 = vsel %vm53, %v145, 0.0
    %170 = vadd.xlane.f32.xlu0 %v169
    %v171 = vpop.xlane.xlu0 %170
    %v172 = vsel %vm53, %v146, 0.0
    %173 = vadd.xlane.f32.xlu0 %v172
    %v174 = vpop.xlane.xlu0 %173
    %v175 = vsel %vm53, %v147, 0.0
    %176 = vadd.xlane.f32.xlu0 %v175
    %v177 = vpop.xlane.xlu0 %176
    %v178 = vsel %vm53, %v148, 0.0
    %179 = vadd.xlane.f32.xlu0 %v178
    %v180 = vpop.xlane.xlu0 %179
    %v181 = vsel %vm53, %v149, 0.0
    %182 = vadd.xlane.f32.xlu0 %v181
    %v183 = vpop.xlane.xlu0 %182
    %v184 = vsel %vm53, %v150, 0.0
    %185 = vadd.xlane.f32.xlu0 %v184
    %v186 = vpop.xlane.xlu0 %185
    %v187 = vsel %vm53, %v151, 0.0
    %188 = vadd.xlane.f32.xlu0 %v187
    %v189 = vpop.xlane.xlu0 %188
    %v190 = vsel %vm53, %v152, 0.0
    %191 = vadd.xlane.f32.xlu0 %v190
    %v192 = vpop.xlane.xlu0 %191
    %v193 = vsel %vm53, %v153, 0.0
    %194 = vadd.xlane.f32.xlu0 %v193
    %v195 = vpop.xlane.xlu0 %194
    %v196 = vsel %vm53, %v154, 0.0
    %197 = vadd.xlane.f32.xlu0 %v196
    %v198 = vpop.xlane.xlu0 %197
    %v199 = vsel %vm53, %v155, 0.0
    %200 = vadd.xlane.f32.xlu0 %v199
    %v201 = vpop.xlane.xlu0 %200
    %v202 = vsel %vm53, %v156, 0.0
    %203 = vadd.xlane.f32.xlu0 %v202
    %v204 = vpop.xlane.xlu0 %203
    %v205 = vmul.f32 %v159, %v108
    %v206 = vmul.f32 %v162, %v108
    %v207 = vmul.f32 %v165, %v108
    %v208 = vmul.f32 %v168, %v108
    %v209 = vmul.f32 %v171, %v108
    %v210 = vmul.f32 %v174, %v108
    %v211 = vmul.f32 %v177, %v108
    %v212 = vmul.f32 %v180, %v108
    %v213 = vmul.f32 %v183, %v108
    %v214 = vmul.f32 %v186, %v108
    %v215 = vmul.f32 %v189, %v108
    %v216 = vmul.f32 %v192, %v108
    %v217 = vmul.f32 %v195, %v108
    %v218 = vmul.f32 %v198, %v108
    %v219 = vmul.f32 %v201, %v108
    %v220 = vmul.f32 %v204, %v108
    %v221 = vadd.f32 %v205, 1e-05
    %v222 = vadd.f32 %v206, 1e-05
    %v223 = vadd.f32 %v207, 1e-05
    %v224 = vadd.f32 %v208, 1e-05
    %v225 = vadd.f32 %v209, 1e-05
    %v226 = vadd.f32 %v210, 1e-05
    %v227 = vadd.f32 %v211, 1e-05
    %v228 = vadd.f32 %v212, 1e-05
    %v229 = vadd.f32 %v213, 1e-05
    %v230 = vadd.f32 %v214, 1e-05
    %v231 = vadd.f32 %v215, 1e-05
    %v232 = vadd.f32 %v216, 1e-05
    %v233 = vadd.f32 %v217, 1e-05
    %v234 = vadd.f32 %v218, 1e-05
    %v235 = vadd.f32 %v219, 1e-05
    %v236 = vadd.f32 %v220, 1e-05
    %v237 = vrsqrt.pop %v221
    %v238 = vmul.f32 %v237, %v221
    %v239 = vmul.f32 %v238, %v237
    %v240 = vmul.f32 0.5, %v239
    %v241 = vsub.f32 1.5, %v240
    %v242 = vmul.f32 %v237, %v241
    %vm243 = vweird.f32 %v221
    %vm244 = vweird.f32 %v237
    %vm245 = vmor %vm243, %vm244
    %v246 = vsel %vm245, %v237, %v242
    %v247 = vrsqrt.pop %v222
    %v248 = vmul.f32 %v247, %v222
    %v249 = vmul.f32 %v248, %v247
    %v250 = vmul.f32 0.5, %v249
    %v251 = vsub.f32 1.5, %v250
    %v252 = vmul.f32 %v247, %v251
    %vm253 = vweird.f32 %v222
    %vm254 = vweird.f32 %v247
    %vm255 = vmor %vm253, %vm254
    %v256 = vsel %vm255, %v247, %v252
    %v257 = vrsqrt.pop %v223
    %v258 = vmul.f32 %v257, %v223
    %v259 = vmul.f32 %v258, %v257
    %v260 = vmul.f32 0.5, %v259
    %v261 = vsub.f32 1.5, %v260
    %v262 = vmul.f32 %v257, %v261
    %vm263 = vweird.f32 %v223
    %vm264 = vweird.f32 %v257
    %vm265 = vmor %vm263, %vm264
    %v266 = vsel %vm265, %v257, %v262
    %v267 = vrsqrt.pop %v224
    %v268 = vmul.f32 %v267, %v224
    %v269 = vmul.f32 %v268, %v267
    %v270 = vmul.f32 0.5, %v269
    %v271 = vsub.f32 1.5, %v270
    %v272 = vmul.f32 %v267, %v271
    %vm273 = vweird.f32 %v224
    %vm274 = vweird.f32 %v267
    %vm275 = vmor %vm273, %vm274
    %v276 = vsel %vm275, %v267, %v272
    %v277 = vrsqrt.pop %v225
    %v278 = vmul.f32 %v277, %v225
    %v279 = vmul.f32 %v278, %v277
    %v280 = vmul.f32 0.5, %v279
    %v281 = vsub.f32 1.5, %v280
    %v282 = vmul.f32 %v277, %v281
    %vm283 = vweird.f32 %v225
    %vm284 = vweird.f32 %v277
    %vm285 = vmor %vm283, %vm284
    %v286 = vsel %vm285, %v277, %v282
    %v287 = vrsqrt.pop %v226
    %v288 = vmul.f32 %v287, %v226
    %v289 = vmul.f32 %v288, %v287
    %v290 = vmul.f32 0.5, %v289
    %v291 = vsub.f32 1.5, %v290
    %v292 = vmul.f32 %v287, %v291
    %vm293 = vweird.f32 %v226
    %vm294 = vweird.f32 %v287
    %vm295 = vmor %vm293, %vm294
    %v296 = vsel %vm295, %v287, %v292
    %v297 = vrsqrt.pop %v227
    %v298 = vmul.f32 %v297, %v227
    %v299 = vmul.f32 %v298, %v297
    %v300 = vmul.f32 0.5, %v299
    %v301 = vsub.f32 1.5, %v300
    %v302 = vmul.f32 %v297, %v301
    %vm303 = vweird.f32 %v227
    %vm304 = vweird.f32 %v297
    %vm305 = vmor %vm303, %vm304
    %v306 = vsel %vm305, %v297, %v302
    %v307 = vrsqrt.pop %v228
    %v308 = vmul.f32 %v307, %v228
    %v309 = vmul.f32 %v308, %v307
    %v310 = vmul.f32 0.5, %v309
    %v311 = vsub.f32 1.5, %v310
    %v312 = vmul.f32 %v307, %v311
    %vm313 = vweird.f32 %v228
    %vm314 = vweird.f32 %v307
    %vm315 = vmor %vm313, %vm314
    %v316 = vsel %vm315, %v307, %v312
    %v317 = vrsqrt.pop %v229
    %v318 = vmul.f32 %v317, %v229
    %v319 = vmul.f32 %v318, %v317
    %v320 = vmul.f32 0.5, %v319
    %v321 = vsub.f32 1.5, %v320
    %v322 = vmul.f32 %v317, %v321
    %vm323 = vweird.f32 %v229
    %vm324 = vweird.f32 %v317
    %vm325 = vmor %vm323, %vm324
    %v326 = vsel %vm325, %v317, %v322
    %v327 = vrsqrt.pop %v230
    %v328 = vmul.f32 %v327, %v230
    %v329 = vmul.f32 %v328, %v327
    %v330 = vmul.f32 0.5, %v329
    %v331 = vsub.f32 1.5, %v330
    %v332 = vmul.f32 %v327, %v331
    %vm333 = vweird.f32 %v230
    %vm334 = vweird.f32 %v327
    %vm335 = vmor %vm333, %vm334
    %v336 = vsel %vm335, %v327, %v332
    %v337 = vrsqrt.pop %v231
    %v338 = vmul.f32 %v337, %v231
    %v339 = vmul.f32 %v338, %v337
    %v340 = vmul.f32 0.5, %v339
    %v341 = vsub.f32 1.5, %v340
    %v342 = vmul.f32 %v337, %v341
    %vm343 = vweird.f32 %v231
    %vm344 = vweird.f32 %v337
    %vm345 = vmor %vm343, %vm344
    %v346 = vsel %vm345, %v337, %v342
    %v347 = vrsqrt.pop %v232
    %v348 = vmul.f32 %v347, %v232
    %v349 = vmul.f32 %v348, %v347
    %v350 = vmul.f32 0.5, %v349
    %v351 = vsub.f32 1.5, %v350
    %v352 = vmul.f32 %v347, %v351
    %vm353 = vweird.f32 %v232
    %vm354 = vweird.f32 %v347
    %vm355 = vmor %vm353, %vm354
    %v356 = vsel %vm355, %v347, %v352
    %v357 = vrsqrt.pop %v233
    %v358 = vmul.f32 %v357, %v233
    %v359 = vmul.f32 %v358, %v357
    %v360 = vmul.f32 0.5, %v359
    %v361 = vsub.f32 1.5, %v360
    %v362 = vmul.f32 %v357, %v361
    %vm363 = vweird.f32 %v233
    %vm364 = vweird.f32 %v357
    %vm365 = vmor %vm363, %vm364
    %v366 = vsel %vm365, %v357, %v362
    %v367 = vrsqrt.pop %v234
    %v368 = vmul.f32 %v367, %v234
    %v369 = vmul.f32 %v368, %v367
    %v370 = vmul.f32 0.5, %v369
    %v371 = vsub.f32 1.5, %v370
    %v372 = vmul.f32 %v367, %v371
    %vm373 = vweird.f32 %v234
    %vm374 = vweird.f32 %v367
    %vm375 = vmor %vm373, %vm374
    %v376 = vsel %vm375, %v367, %v372
    %v377 = vrsqrt.pop %v235
    %v378 = vmul.f32 %v377, %v235
    %v379 = vmul.f32 %v378, %v377
    %v380 = vmul.f32 0.5, %v379
    %v381 = vsub.f32 1.5, %v380
    %v382 = vmul.f32 %v377, %v381
    %vm383 = vweird.f32 %v235
    %vm384 = vweird.f32 %v377
    %vm385 = vmor %vm383, %vm384
    %v386 = vsel %vm385, %v377, %v382
    %v387 = vrsqrt.pop %v236
    %v388 = vmul.f32 %v387, %v236
    %v389 = vmul.f32 %v388, %v387
    %v390 = vmul.f32 0.5, %v389
    %v391 = vsub.f32 1.5, %v390
    %v392 = vmul.f32 %v387, %v391
    %vm393 = vweird.f32 %v236
    %vm394 = vweird.f32 %v387
    %vm395 = vmor %vm393, %vm394
    %v396 = vsel %vm395, %v387, %v392
    %v397 = vmul.f32 %v125, %v246
    %v398 = vmul.f32 %v126, %v256
    %v399 = vmul.f32 %v127, %v266
    %v400 = vmul.f32 %v128, %v276
    %v401 = vmul.f32 %v129, %v286
    %v402 = vmul.f32 %v130, %v296
    %v403 = vmul.f32 %v131, %v306
    %v404 = vmul.f32 %v132, %v316
    %v405 = vmul.f32 %v133, %v326
    %v406 = vmul.f32 %v134, %v336
    %v407 = vmul.f32 %v135, %v346
    %v408 = vmul.f32 %v136, %v356
    %v409 = vmul.f32 %v137, %v366
    %v410 = vmul.f32 %v138, %v376
    %v411 = vmul.f32 %v139, %v386
    %v412 = vmul.f32 %v140, %v396
    %v413 = vld [vmem:[%s2] sm:$0x1]
    %v415 = vperm.slane %v413, 0
    %v417 = vmul.f32 %v397, %v415
    %v418 = vmul.f32 %v398, %v415
    %v419 = vmul.f32 %v399, %v415
    %v420 = vmul.f32 %v400, %v415
    %v421 = vmul.f32 %v401, %v415
    %v422 = vmul.f32 %v402, %v415
    %v423 = vmul.f32 %v403, %v415
    %v424 = vmul.f32 %v404, %v415
    %v425 = vmul.f32 %v405, %v415
    %v426 = vmul.f32 %v406, %v415
    %v427 = vmul.f32 %v407, %v415
    %v428 = vmul.f32 %v408, %v415
    %v429 = vmul.f32 %v409, %v415
    %v430 = vmul.f32 %v410, %v415
    %v431 = vmul.f32 %v411, %v415
    %v432 = vmul.f32 %v412, %v415
    %v433 = vld [vmem:[%s3] sm:$0x1]
    %v435 = vperm.slane %v433, 0
    %v437 = vadd.f32 %v417, %v435
    %v438 = vadd.f32 %v418, %v435
    %v439 = vadd.f32 %v419, %v435
    %v440 = vadd.f32 %v420, %v435
    %v441 = vadd.f32 %v421, %v435
    %v442 = vadd.f32 %v422, %v435
    %v443 = vadd.f32 %v423, %v435
    %v444 = vadd.f32 %v424, %v435
    %v445 = vadd.f32 %v425, %v435
    %v446 = vadd.f32 %v426, %v435
    %v447 = vadd.f32 %v427, %v435
    %v448 = vadd.f32 %v428, %v435
    %v449 = vadd.f32 %v429, %v435
    %v450 = vadd.f32 %v430, %v435
    %v451 = vadd.f32 %v431, %v435
    %v452 = vadd.f32 %v432, %v435
    %v453 = vsub.f32 0.0, %v37
    %v454 = vsub.f32 0.0, %v38
    %v455 = vsub.f32 0.0, %v39
    %v456 = vsub.f32 0.0, %v40
    %v457 = vsub.f32 0.0, %v41
    %v458 = vsub.f32 0.0, %v42
    %v459 = vsub.f32 0.0, %v43
    %v460 = vsub.f32 0.0, %v44
    %v461 = vsub.f32 0.0, %v45
    %v462 = vsub.f32 0.0, %v46
    %v463 = vsub.f32 0.0, %v47
    %v464 = vsub.f32 0.0, %v48
    %v465 = vsub.f32 0.0, %v49
    %v466 = vsub.f32 0.0, %v50
    %v467 = vsub.f32 0.0, %v51
    %v468 = vsub.f32 0.0, %v52
    %v469 = vmul.f32 %v453, 1.442695
    %v470 = vpow.pop %v469
    %v471 = vmul.f32 %v454, 1.442695
    %v472 = vpow.pop %v471
    %v473 = vmul.f32 %v455, 1.442695
    %v474 = vpow.pop %v473
    %v475 = vmul.f32 %v456, 1.442695
    %v476 = vpow.pop %v475
    %v477 = vmul.f32 %v457, 1.442695
    %v478 = vpow.pop %v477
    %v479 = vmul.f32 %v458, 1.442695
    %v480 = vpow.pop %v479
    %v481 = vmul.f32 %v459, 1.442695
    %v482 = vpow.pop %v481
    %v483 = vmul.f32 %v460, 1.442695
    %v484 = vpow.pop %v483
    %v485 = vmul.f32 %v461, 1.442695
    %v486 = vpow.pop %v485
    %v487 = vmul.f32 %v462, 1.442695
    %v488 = vpow.pop %v487
    %v489 = vmul.f32 %v463, 1.442695
    %v490 = vpow.pop %v489
    %v491 = vmul.f32 %v464, 1.442695
    %v492 = vpow.pop %v491
    %v493 = vmul.f32 %v465, 1.442695
    %v494 = vpow.pop %v493
    %v495 = vmul.f32 %v466, 1.442695
    %v496 = vpow.pop %v495
    %v497 = vmul.f32 %v467, 1.442695
    %v498 = vpow.pop %v497
    %v499 = vmul.f32 %v468, 1.442695
    %v500 = vpow.pop %v499
    %v501 = vadd.f32 %v470, 1.0
    %v502 = vadd.f32 %v472, 1.0
    %v503 = vadd.f32 %v474, 1.0
    %v504 = vadd.f32 %v476, 1.0
    %v505 = vadd.f32 %v478, 1.0
    %v506 = vadd.f32 %v480, 1.0
    %v507 = vadd.f32 %v482, 1.0
    %v508 = vadd.f32 %v484, 1.0
    %v509 = vadd.f32 %v486, 1.0
    %v510 = vadd.f32 %v488, 1.0
    %v511 = vadd.f32 %v490, 1.0
    %v512 = vadd.f32 %v492, 1.0
    %v513 = vadd.f32 %v494, 1.0
    %v514 = vadd.f32 %v496, 1.0
    %v515 = vadd.f32 %v498, 1.0
    %v516 = vadd.f32 %v500, 1.0
    %v517 = vrcp.pop %v501
    %v518 = vmul.f32 %v501, %v517
    %v519 = vsub.f32 1.0, %v518
    %v520 = vmul.f32 %v517, %v519
    %v521 = vadd.f32 %v517, %v520
    %vm522 = vweird.f32 %v501
    %vm523 = vweird.f32 %v517
    %vm524 = vmor %vm522, %vm523
    %v525 = vsel %vm524, %v517, %v521
    %v526 = vand.u32 2147483647, %v501
    %vm527 = vcmp.eq.f32.partialorder %v526, 8.507059e+37
    %v528 = vand.u32 %v501, 2147483648
    %v529 = vor.u32 1.1754944e-38, %v528
    %v530 = vsel %vm527, %v529, %v525
    %v531 = vmul.f32 1.0, %v530
    %v532 = vrcp.pop %v502
    %v533 = vmul.f32 %v502, %v532
    %v534 = vsub.f32 1.0, %v533
    %v535 = vmul.f32 %v532, %v534
    %v536 = vadd.f32 %v532, %v535
    %vm537 = vweird.f32 %v502
    %vm538 = vweird.f32 %v532
    %vm539 = vmor %vm537, %vm538
    %v540 = vsel %vm539, %v532, %v536
    %v541 = vand.u32 2147483647, %v502
    %vm542 = vcmp.eq.f32.partialorder %v541, 8.507059e+37
    %v543 = vand.u32 %v502, 2147483648
    %v544 = vor.u32 1.1754944e-38, %v543
    %v545 = vsel %vm542, %v544, %v540
    %v546 = vmul.f32 1.0, %v545
    %v547 = vrcp.pop %v503
    %v548 = vmul.f32 %v503, %v547
    %v549 = vsub.f32 1.0, %v548
    %v550 = vmul.f32 %v547, %v549
    %v551 = vadd.f32 %v547, %v550
    %vm552 = vweird.f32 %v503
    %vm553 = vweird.f32 %v547
    %vm554 = vmor %vm552, %vm553
    %v555 = vsel %vm554, %v547, %v551
    %v556 = vand.u32 2147483647, %v503
    %vm557 = vcmp.eq.f32.partialorder %v556, 8.507059e+37
    %v558 = vand.u32 %v503, 2147483648
    %v559 = vor.u32 1.1754944e-38, %v558
    %v560 = vsel %vm557, %v559, %v555
    %v561 = vmul.f32 1.0, %v560
    %v562 = vrcp.pop %v504
    %v563 = vmul.f32 %v504, %v562
    %v564 = vsub.f32 1.0, %v563
    %v565 = vmul.f32 %v562, %v564
    %v566 = vadd.f32 %v562, %v565
    %vm567 = vweird.f32 %v504
    %vm568 = vweird.f32 %v562
    %vm569 = vmor %vm567, %vm568
    %v570 = vsel %vm569, %v562, %v566
    %v571 = vand.u32 2147483647, %v504
    %vm572 = vcmp.eq.f32.partialorder %v571, 8.507059e+37
    %v573 = vand.u32 %v504, 2147483648
    %v574 = vor.u32 1.1754944e-38, %v573
    %v575 = vsel %vm572, %v574, %v570
    %v576 = vmul.f32 1.0, %v575
    %v577 = vrcp.pop %v505
    %v578 = vmul.f32 %v505, %v577
    %v579 = vsub.f32 1.0, %v578
    %v580 = vmul.f32 %v577, %v579
    %v581 = vadd.f32 %v577, %v580
    %vm582 = vweird.f32 %v505
    %vm583 = vweird.f32 %v577
    %vm584 = vmor %vm582, %vm583
    %v585 = vsel %vm584, %v577, %v581
    %v586 = vand.u32 2147483647, %v505
    %vm587 = vcmp.eq.f32.partialorder %v586, 8.507059e+37
    %v588 = vand.u32 %v505, 2147483648
    %v589 = vor.u32 1.1754944e-38, %v588
    %v590 = vsel %vm587, %v589, %v585
    %v591 = vmul.f32 1.0, %v590
    %v592 = vrcp.pop %v506
    %v593 = vmul.f32 %v506, %v592
    %v594 = vsub.f32 1.0, %v593
    %v595 = vmul.f32 %v592, %v594
    %v596 = vadd.f32 %v592, %v595
    %vm597 = vweird.f32 %v506
    %vm598 = vweird.f32 %v592
    %vm599 = vmor %vm597, %vm598
    %v600 = vsel %vm599, %v592, %v596
    %v601 = vand.u32 2147483647, %v506
    %vm602 = vcmp.eq.f32.partialorder %v601, 8.507059e+37
    %v603 = vand.u32 %v506, 2147483648
    %v604 = vor.u32 1.1754944e-38, %v603
    %v605 = vsel %vm602, %v604, %v600
    %v606 = vmul.f32 1.0, %v605
    %v607 = vrcp.pop %v507
    %v608 = vmul.f32 %v507, %v607
    %v609 = vsub.f32 1.0, %v608
    %v610 = vmul.f32 %v607, %v609
    %v611 = vadd.f32 %v607, %v610
    %vm612 = vweird.f32 %v507
    %vm613 = vweird.f32 %v607
    %vm614 = vmor %vm612, %vm613
    %v615 = vsel %vm614, %v607, %v611
    %v616 = vand.u32 2147483647, %v507
    %vm617 = vcmp.eq.f32.partialorder %v616, 8.507059e+37
    %v618 = vand.u32 %v507, 2147483648
    %v619 = vor.u32 1.1754944e-38, %v618
    %v620 = vsel %vm617, %v619, %v615
    %v621 = vmul.f32 1.0, %v620
    %v622 = vrcp.pop %v508
    %v623 = vmul.f32 %v508, %v622
    %v624 = vsub.f32 1.0, %v623
    %v625 = vmul.f32 %v622, %v624
    %v626 = vadd.f32 %v622, %v625
    %vm627 = vweird.f32 %v508
    %vm628 = vweird.f32 %v622
    %vm629 = vmor %vm627, %vm628
    %v630 = vsel %vm629, %v622, %v626
    %v631 = vand.u32 2147483647, %v508
    %vm632 = vcmp.eq.f32.partialorder %v631, 8.507059e+37
    %v633 = vand.u32 %v508, 2147483648
    %v634 = vor.u32 1.1754944e-38, %v633
    %v635 = vsel %vm632, %v634, %v630
    %v636 = vmul.f32 1.0, %v635
    %v637 = vrcp.pop %v509
    %v638 = vmul.f32 %v509, %v637
    %v639 = vsub.f32 1.0, %v638
    %v640 = vmul.f32 %v637, %v639
    %v641 = vadd.f32 %v637, %v640
    %vm642 = vweird.f32 %v509
    %vm643 = vweird.f32 %v637
    %vm644 = vmor %vm642, %vm643
    %v645 = vsel %vm644, %v637, %v641
    %v646 = vand.u32 2147483647, %v509
    %vm647 = vcmp.eq.f32.partialorder %v646, 8.507059e+37
    %v648 = vand.u32 %v509, 2147483648
    %v649 = vor.u32 1.1754944e-38, %v648
    %v650 = vsel %vm647, %v649, %v645
    %v651 = vmul.f32 1.0, %v650
    %v652 = vrcp.pop %v510
    %v653 = vmul.f32 %v510, %v652
    %v654 = vsub.f32 1.0, %v653
    %v655 = vmul.f32 %v652, %v654
    %v656 = vadd.f32 %v652, %v655
    %vm657 = vweird.f32 %v510
    %vm658 = vweird.f32 %v652
    %vm659 = vmor %vm657, %vm658
    %v660 = vsel %vm659, %v652, %v656
    %v661 = vand.u32 2147483647, %v510
    %vm662 = vcmp.eq.f32.partialorder %v661, 8.507059e+37
    %v663 = vand.u32 %v510, 2147483648
    %v664 = vor.u32 1.1754944e-38, %v663
    %v665 = vsel %vm662, %v664, %v660
    %v666 = vmul.f32 1.0, %v665
    %v667 = vrcp.pop %v511
    %v668 = vmul.f32 %v511, %v667
    %v669 = vsub.f32 1.0, %v668
    %v670 = vmul.f32 %v667, %v669
    %v671 = vadd.f32 %v667, %v670
    %vm672 = vweird.f32 %v511
    %vm673 = vweird.f32 %v667
    %vm674 = vmor %vm672, %vm673
    %v675 = vsel %vm674, %v667, %v671
    %v676 = vand.u32 2147483647, %v511
    %vm677 = vcmp.eq.f32.partialorder %v676, 8.507059e+37
    %v678 = vand.u32 %v511, 2147483648
    %v679 = vor.u32 1.1754944e-38, %v678
    %v680 = vsel %vm677, %v679, %v675
    %v681 = vmul.f32 1.0, %v680
    %v682 = vrcp.pop %v512
    %v683 = vmul.f32 %v512, %v682
    %v684 = vsub.f32 1.0, %v683
    %v685 = vmul.f32 %v682, %v684
    %v686 = vadd.f32 %v682, %v685
    %vm687 = vweird.f32 %v512
    %vm688 = vweird.f32 %v682
    %vm689 = vmor %vm687, %vm688
    %v690 = vsel %vm689, %v682, %v686
    %v691 = vand.u32 2147483647, %v512
    %vm692 = vcmp.eq.f32.partialorder %v691, 8.507059e+37
    %v693 = vand.u32 %v512, 2147483648
    %v694 = vor.u32 1.1754944e-38, %v693
    %v695 = vsel %vm692, %v694, %v690
    %v696 = vmul.f32 1.0, %v695
    %v697 = vrcp.pop %v513
    %v698 = vmul.f32 %v513, %v697
    %v699 = vsub.f32 1.0, %v698
    %v700 = vmul.f32 %v697, %v699
    %v701 = vadd.f32 %v697, %v700
    %vm702 = vweird.f32 %v513
    %vm703 = vweird.f32 %v697
    %vm704 = vmor %vm702, %vm703
    %v705 = vsel %vm704, %v697, %v701
    %v706 = vand.u32 2147483647, %v513
    %vm707 = vcmp.eq.f32.partialorder %v706, 8.507059e+37
    %v708 = vand.u32 %v513, 2147483648
    %v709 = vor.u32 1.1754944e-38, %v708
    %v710 = vsel %vm707, %v709, %v705
    %v711 = vmul.f32 1.0, %v710
    %v712 = vrcp.pop %v514
    %v713 = vmul.f32 %v514, %v712
    %v714 = vsub.f32 1.0, %v713
    %v715 = vmul.f32 %v712, %v714
    %v716 = vadd.f32 %v712, %v715
    %vm717 = vweird.f32 %v514
    %vm718 = vweird.f32 %v712
    %vm719 = vmor %vm717, %vm718
    %v720 = vsel %vm719, %v712, %v716
    %v721 = vand.u32 2147483647, %v514
    %vm722 = vcmp.eq.f32.partialorder %v721, 8.507059e+37
    %v723 = vand.u32 %v514, 2147483648
    %v724 = vor.u32 1.1754944e-38, %v723
    %v725 = vsel %vm722, %v724, %v720
    %v726 = vmul.f32 1.0, %v725
    %v727 = vrcp.pop %v515
    %v728 = vmul.f32 %v515, %v727
    %v729 = vsub.f32 1.0, %v728
    %v730 = vmul.f32 %v727, %v729
    %v731 = vadd.f32 %v727, %v730
    %vm732 = vweird.f32 %v515
    %vm733 = vweird.f32 %v727
    %vm734 = vmor %vm732, %vm733
    %v735 = vsel %vm734, %v727, %v731
    %v736 = vand.u32 2147483647, %v515
    %vm737 = vcmp.eq.f32.partialorder %v736, 8.507059e+37
    %v738 = vand.u32 %v515, 2147483648
    %v739 = vor.u32 1.1754944e-38, %v738
    %v740 = vsel %vm737, %v739, %v735
    %v741 = vmul.f32 1.0, %v740
    %v742 = vrcp.pop %v516
    %v743 = vmul.f32 %v516, %v742
    %v744 = vsub.f32 1.0, %v743
    %v745 = vmul.f32 %v742, %v744
    %v746 = vadd.f32 %v742, %v745
    %vm747 = vweird.f32 %v516
    %vm748 = vweird.f32 %v742
    %vm749 = vmor %vm747, %vm748
    %v750 = vsel %vm749, %v742, %v746
    %v751 = vand.u32 2147483647, %v516
    %vm752 = vcmp.eq.f32.partialorder %v751, 8.507059e+37
    %v753 = vand.u32 %v516, 2147483648
    %v754 = vor.u32 1.1754944e-38, %v753
    %v755 = vsel %vm752, %v754, %v750
    %v756 = vmul.f32 1.0, %v755
    %v757 = vmul.f32 %v37, %v531
    %v758 = vmul.f32 %v38, %v546
    %v759 = vmul.f32 %v39, %v561
    %v760 = vmul.f32 %v40, %v576
    %v761 = vmul.f32 %v41, %v591
    %v762 = vmul.f32 %v42, %v606
    %v763 = vmul.f32 %v43, %v621
    %v764 = vmul.f32 %v44, %v636
    %v765 = vmul.f32 %v45, %v651
    %v766 = vmul.f32 %v46, %v666
    %v767 = vmul.f32 %v47, %v681
    %v768 = vmul.f32 %v48, %v696
    %v769 = vmul.f32 %v49, %v711
    %v770 = vmul.f32 %v50, %v726
    %v771 = vmul.f32 %v51, %v741
    %v772 = vmul.f32 %v52, %v756
    %v773 = vmul.f32 %v437, %v757
    %v774 = vmul.f32 %v438, %v758
    %v775 = vmul.f32 %v439, %v759
    %v776 = vmul.f32 %v440, %v760
    %v777 = vmul.f32 %v441, %v761
    %v778 = vmul.f32 %v442, %v762
    %v779 = vmul.f32 %v443, %v763
    %v780 = vmul.f32 %v444, %v764
    %v781 = vmul.f32 %v445, %v765
    %v782 = vmul.f32 %v446, %v766
    %v783 = vmul.f32 %v447, %v767
    %v784 = vmul.f32 %v448, %v768
    %v785 = vmul.f32 %v449, %v769
    %v786 = vmul.f32 %v450, %v770
    %v787 = vmul.f32 %v451, %v771
    %v788 = vmul.f32 %v452, %v772
    %v789 = vld [vmem:[%s4] sm:$0xff]
    %v790 = vld [vmem:[%s4 + $0x8] sm:$0xff]
    %v791 = vld [vmem:[%s4 + $0x10] sm:$0xff]
    %v792 = vld [vmem:[%s4 + $0x18] sm:$0xff]
    %v794 = vsel %vm53, %v773, 0
    %v797 = vsel %vm53, %v774, 0
    %v800 = vsel %vm53, %v775, 0
    %v803 = vsel %vm53, %v776, 0
    %v806 = vsel %vm53, %v777, 0
    %v809 = vsel %vm53, %v778, 0
    %v812 = vsel %vm53, %v779, 0
    %v815 = vsel %vm53, %v780, 0
    %v818 = vsel %vm53, %v781, 0
    %v821 = vsel %vm53, %v782, 0
    %v824 = vsel %vm53, %v783, 0
    %v827 = vsel %vm53, %v784, 0
    %v830 = vsel %vm53, %v785, 0
    %v833 = vsel %vm53, %v786, 0
    %v836 = vsel %vm53, %v787, 0
    %v839 = vsel %vm53, %v788, 0
    %841 = vmatpush.msra.mxu0 0.0
    %842 = vmatpush.msra.mxu0 0.0
    %843 = vmatpush.msra.mxu0 0.0
    %844 = vmatpush.msra.mxu0 0.0
    %845 = vmatpush.msra.mxu0 0.0
    %846 = vmatpush.msra.mxu0 0.0
    %847 = vmatpush.msra.mxu0 0.0
    %848 = vmatpush.msra.mxu0 0.0
    %849 = vmatpush.msra.mxu0 0.0
    %850 = vmatpush.msra.mxu0 0.0
    %851 = vmatpush.msra.mxu0 0.0
    %852 = vmatpush.msra.mxu0 0.0
    %853 = vmatpush.msra.mxu0 %v792
    %854 = vmatpush.msra.mxu0 %v791
    %855 = vmatpush.msra.mxu0 %v790
    %856 = vmatpush.msra.mxu0 %v789
    %857 = vmatmul.f32.gmra.mxu0 %v794
    %v858 = vpop.f32.mrf.mxu0
    %v859 = vadd.f32 0.0, %v858
    %860 = vmatmul.f32.gmra.mxu0 %v797
    %v861 = vpop.f32.mrf.mxu0
    %v862 = vadd.f32 0.0, %v861
    %863 = vmatmul.f32.gmra.mxu0 %v800
    %v864 = vpop.f32.mrf.mxu0
    %v865 = vadd.f32 0.0, %v864
    %866 = vmatmul.f32.gmra.mxu0 %v803
    %v867 = vpop.f32.mrf.mxu0
    %v868 = vadd.f32 0.0, %v867
    %869 = vmatmul.f32.gmra.mxu0 %v806
    %v870 = vpop.f32.mrf.mxu0
    %v871 = vadd.f32 0.0, %v870
    %872 = vmatmul.f32.gmra.mxu0 %v809
    %v873 = vpop.f32.mrf.mxu0
    %v874 = vadd.f32 0.0, %v873
    %875 = vmatmul.f32.gmra.mxu0 %v812
    %v876 = vpop.f32.mrf.mxu0
    %v877 = vadd.f32 0.0, %v876
    %878 = vmatmul.f32.gmra.mxu0 %v815
    %v879 = vpop.f32.mrf.mxu0
    %v880 = vadd.f32 0.0, %v879
    %881 = vmatmul.f32.gmra.mxu0 %v818
    %v882 = vpop.f32.mrf.mxu0
    %v883 = vadd.f32 0.0, %v882
    %884 = vmatmul.f32.gmra.mxu0 %v821
    %v885 = vpop.f32.mrf.mxu0
    %v886 = vadd.f32 0.0, %v885
    %887 = vmatmul.f32.gmra.mxu0 %v824
    %v888 = vpop.f32.mrf.mxu0
    %v889 = vadd.f32 0.0, %v888
    %890 = vmatmul.f32.gmra.mxu0 %v827
    %v891 = vpop.f32.mrf.mxu0
    %v892 = vadd.f32 0.0, %v891
    %893 = vmatmul.f32.gmra.mxu0 %v830
    %v894 = vpop.f32.mrf.mxu0
    %v895 = vadd.f32 0.0, %v894
    %896 = vmatmul.f32.gmra.mxu0 %v833
    %v897 = vpop.f32.mrf.mxu0
    %v898 = vadd.f32 0.0, %v897
    %899 = vmatmul.f32.gmra.mxu0 %v836
    %v900 = vpop.f32.mrf.mxu0
    %v901 = vadd.f32 0.0, %v900
    %902 = vmatmul.f32.gmra.mxu0 %v839
    %v903 = vpop.f32.mrf.mxu0
    %v904 = vadd.f32 0.0, %v903
    %905 = vdwg.mxu0
    %vm906 = vcmask 130048
    %907 = vst.msk [vmem:[#allocation2] sm:$0xff] %vm906, %v859
    %908 = vst.msk [vmem:[#allocation2 + $0x8] sm:$0xff] %vm906, %v862
    %909 = vst.msk [vmem:[#allocation2 + $0x10] sm:$0xff] %vm906, %v865
    %910 = vst.msk [vmem:[#allocation2 + $0x18] sm:$0xff] %vm906, %v868
    %911 = vst.msk [vmem:[#allocation2 + $0x20] sm:$0xff] %vm906, %v871
    %912 = vst.msk [vmem:[#allocation2 + $0x28] sm:$0xff] %vm906, %v874
    %913 = vst.msk [vmem:[#allocation2 + $0x30] sm:$0xff] %vm906, %v877
    %914 = vst.msk [vmem:[#allocation2 + $0x38] sm:$0xff] %vm906, %v880
    %915 = vst.msk [vmem:[#allocation2 + $0x40] sm:$0xff] %vm906, %v883
    %916 = vst.msk [vmem:[#allocation2 + $0x48] sm:$0xff] %vm906, %v886
    %917 = vst.msk [vmem:[#allocation2 + $0x50] sm:$0xff] %vm906, %v889
    %918 = vst.msk [vmem:[#allocation2 + $0x58] sm:$0xff] %vm906, %v892
    %919 = vst.msk [vmem:[#allocation2 + $0x60] sm:$0xff] %vm906, %v895
    %920 = vst.msk [vmem:[#allocation2 + $0x68] sm:$0xff] %vm906, %v898
    %921 = vst.msk [vmem:[#allocation2 + $0x70] sm:$0xff] %vm906, %v901
    %922 = vst.msk [vmem:[#allocation2 + $0x78] sm:$0xff] %vm906, %v904
    // Predicated region
    $region22: #{ss2d_forward.9} parent=1 // pred_check
      _
    $region23: #{ss2d_forward.9} parent=1 // pred_check_branch
      %924 = sbr.rel (0) target = $region25
    $region24: #{ss2d_forward.9} parent=1 // pred_region
      %926 = vsyncadd [#allocation3], 0
      %s927 = sshll.u32 [#allocation2], 4
      %s928 = int_to_ptr.vmem [resolvable:$true] %s927
      %s929 = sshll.u32 %s5, 4
      %s930 = int_to_ptr.hbm [resolvable:$true] %s929
      %935 = dma.vmem_to_hbm [thread:$0]  %s928, 2048, %s930, [#allocation3], 128, 128, 8
    $region25: #{ss2d_forward.9} parent=1 // pred_fallthru
      _
    // Predicated region
    $region26: #{ss2d_forward.9} parent=1 // pred_check
      _
    $region27: #{ss2d_forward.9} parent=1 // pred_check_branch
      %937 = sbr.rel (0) target = $region29
    $region28: #{ss2d_forward.9} parent=1 // pred_region
      %939 = dma.done [#allocation3], 2048
    $region29: #{ss2d_forward.9} parent=1 // pred_fallthru
      _
    %940 = vsyncpa [#allocation3], 1

// kernel: ss2d_forward.8
$region0: #{ss2d_forward.8}
  #allocation0 [shape = 'u32[]', space=smem, size = 0x4, offset = 0x4, fixed_abs, tag = 'smem constant byte address 0x4 - core index']
  #allocation1 [shape = 'u32[72,128]{1,0:T(1,128)}', space=vmem, size = 0x9000, scoped, tag = 'internal scratch']
  %s0 = inlined_call_operand.vmem [shape: f32[2,64,128], index: 0, kind: input, shape index: {}]
  %s1 = inlined_call_operand.vmem [shape: f32[2,64,128], index: 1, kind: input, shape index: {}]
  %s2 = inlined_call_operand.vmem [shape: f32[16,128], index: 2, kind: input, shape index: {}]
  %s3 = inlined_call_operand.vmem [shape: f32[2,64,16,4], index: 3, kind: input, shape index: {}]
  %s4 = inlined_call_operand.vmem [shape: f32[2,64,16,4], index: 4, kind: input, shape index: {}]
  %s5 = inlined_call_operand.vmem [shape: f32[1,128], index: 5, kind: input, shape index: {}]
  %s6 = inlined_call_operand.vmem [shape: f32[1,128], index: 6, kind: input, shape index: {}]
  %s7 = inlined_call_operand.vmem [shape: f32[4,128], index: 7, kind: input, shape index: {}]
  %s8 = inlined_call_operand.vmem [shape: f32[2,64,128], index: 8, kind: output, shape index: {}]
  %s9 = sld [smem:[#allocation0]]
  $region72: #{ss2d_forward.8} parent=0
    _
  %s11 = ssub.s32 1, %s9
  %s12 = scalar_select 0, %s11, %s9
  loop: start=0, step=1, limit=4
  $region2: #{ss2d_forward.8} parent=0 // loop_pre_header
    _
  $region3: #{ss2d_forward.8} parent=0 // loop_header
    %s14 = sphi 0, %s18
    %p15 = scmp.ge.s32.totalorder %s14, 4
    %s24 = sphi 0, %s26
    %s27 = sphi 0, %s24
    %s28 = sphi 0, %s27
    %s44 = sphi 0, %s28
    %s50 = sphi 0, %s52
    %s53 = sphi 0, %s50
    %s54 = sphi 0, %s53
    %s70 = sphi 0, %s54
    %s74 = sphi 0, %s74
    %s76 = sphi 0, %s74
    %s77 = sphi 0, %s76
    %s91 = sphi 0, %s77
    %s97 = sphi 0, %s99
    %s100 = sphi 0, %s97
    %s101 = sphi 0, %s100
    %s117 = sphi 0, %s101
    %s123 = sphi 0, %s125
    %s126 = sphi 0, %s123
    %s127 = sphi 0, %s126
    %s143 = sphi 0, %s127
    %s147 = sphi 0, %s147
    %s149 = sphi 0, %s147
    %s150 = sphi 0, %s149
    %s164 = sphi 0, %s150
    %s168 = sphi 0, %s168
    %s170 = sphi 0, %s168
    %s171 = sphi 0, %s170
    %s185 = sphi 0, %s171
    %s189 = sphi 0, %s189
    %s191 = sphi 0, %s189
    %s192 = sphi 0, %s191
    %s206 = sphi 0, %s192
    %s212 = sphi 0, %s214
    %s215 = sphi 0, %s212
    %s216 = sphi 0, %s215
    %s232 = sphi 0, %s216
  $region4: #{ss2d_forward.8} parent=0 // loop_header_branch
    %17 = sbr.rel (%p15) target = $region8
  $region5: #{ss2d_forward.8} parent=0 // loop_body
    %s19 = ssub.s32 %s14, 1
    %s20 = ssub.s32 %s14, 2
    %s21 = sadd.s32 %s14, 1
    %s22 = ssub.s32 %s14, %s21
    %p23 = scmp.eq.s32.totalorder %s22, 0
    %s25 = sadd.s32 %s24, 1
    %s26 = scalar_select %p23, %s24, %s25
    %p29 = pneg %p23
    %p30 = scmp.eq.s32.totalorder %s14, 1
    %p31 = por %p29, %p30
    %p32 = scmp.ne.s32.totalorder %s24, %s27
    %p33 = scmp.eq.s32.totalorder %s14, 0
    %p34 = por %p32, %p33
    %p35 = scmp.ne.s32.totalorder %s24, %s27
    %p36 = scmp.eq.s32.totalorder %s19, 1
    %p37 = por %p35, %p36
    %p38 = scmp.ne.s32.totalorder %s27, %s28
    %p39 = scmp.eq.s32.totalorder %s19, 0
    %p40 = por %p38, %p39
    %p41 = scmp.ne.s32.totalorder %s27, %s28
    %p42 = scmp.eq.s32.totalorder %s20, 1
    %p43 = por %p41, %p42
    %p45 = scmp.ne.s32.totalorder %s28, %s44
    %p46 = scmp.eq.s32.totalorder %s20, 0
    %p47 = por %p45, %p46
    %s48 = ssub.s32 %s14, %s21
    %p49 = scmp.eq.s32.totalorder %s48, 0
    %s51 = sadd.s32 %s50, 1
    %s52 = scalar_select %p49, %s50, %s51
    %p55 = pneg %p49
    %p56 = scmp.eq.s32.totalorder %s14, 1
    %p57 = por %p55, %p56
    %p58 = scmp.ne.s32.totalorder %s50, %s53
    %p59 = scmp.eq.s32.totalorder %s14, 0
    %p60 = por %p58, %p59
    %p61 = scmp.ne.s32.totalorder %s50, %s53
    %p62 = scmp.eq.s32.totalorder %s19, 1
    %p63 = por %p61, %p62
    %p64 = scmp.ne.s32.totalorder %s53, %s54
    %p65 = scmp.eq.s32.totalorder %s19, 0
    %p66 = por %p64, %p65
    %p67 = scmp.ne.s32.totalorder %s53, %s54
    %p68 = scmp.eq.s32.totalorder %s20, 1
    %p69 = por %p67, %p68
    %p71 = scmp.ne.s32.totalorder %s54, %s70
    %p72 = scmp.eq.s32.totalorder %s20, 0
    %p73 = por %p71, %p72
    %s75 = sadd.s32 %s74, 1
    %p78 = scmp.eq.s32.totalorder %s14, 1
    %p79 = scmp.ne.s32.totalorder %s74, %s76
    %p80 = scmp.eq.s32.totalorder %s14, 0
    %p81 = por %p79, %p80
    %p82 = scmp.ne.s32.totalorder %s74, %s76
    %p83 = scmp.eq.s32.totalorder %s19, 1
    %p84 = por %p82, %p83
    %p85 = scmp.ne.s32.totalorder %s76, %s77
    %p86 = scmp.eq.s32.totalorder %s19, 0
    %p87 = por %p85, %p86
    %p88 = scmp.ne.s32.totalorder %s76, %s77
    %p89 = scmp.eq.s32.totalorder %s20, 1
    %p90 = por %p88, %p89
    %p92 = scmp.ne.s32.totalorder %s77, %s91
    %p93 = scmp.eq.s32.totalorder %s20, 0
    %p94 = por %p92, %p93
    %s95 = ssub.s32 %s14, %s21
    %p96 = scmp.eq.s32.totalorder %s95, 0
    %s98 = sadd.s32 %s97, 1
    %s99 = scalar_select %p96, %s97, %s98
    %p102 = pneg %p96
    %p103 = scmp.eq.s32.totalorder %s14, 1
    %p104 = por %p102, %p103
    %p105 = scmp.ne.s32.totalorder %s97, %s100
    %p106 = scmp.eq.s32.totalorder %s14, 0
    %p107 = por %p105, %p106
    %p108 = scmp.ne.s32.totalorder %s97, %s100
    %p109 = scmp.eq.s32.totalorder %s19, 1
    %p110 = por %p108, %p109
    %p111 = scmp.ne.s32.totalorder %s100, %s101
    %p112 = scmp.eq.s32.totalorder %s19, 0
    %p113 = por %p111, %p112
    %p114 = scmp.ne.s32.totalorder %s100, %s101
    %p115 = scmp.eq.s32.totalorder %s20, 1
    %p116 = por %p114, %p115
    %p118 = scmp.ne.s32.totalorder %s101, %s117
    %p119 = scmp.eq.s32.totalorder %s20, 0
    %p120 = por %p118, %p119
    %s121 = ssub.s32 %s14, %s21
    %p122 = scmp.eq.s32.totalorder %s121, 0
    %s124 = sadd.s32 %s123, 1
    %s125 = scalar_select %p122, %s123, %s124
    %p128 = pneg %p122
    %p129 = scmp.eq.s32.totalorder %s14, 1
    %p130 = por %p128, %p129
    %p131 = scmp.ne.s32.totalorder %s123, %s126
    %p132 = scmp.eq.s32.totalorder %s14, 0
    %p133 = por %p131, %p132
    %p134 = scmp.ne.s32.totalorder %s123, %s126
    %p135 = scmp.eq.s32.totalorder %s19, 1
    %p136 = por %p134, %p135
    %p137 = scmp.ne.s32.totalorder %s126, %s127
    %p138 = scmp.eq.s32.totalorder %s19, 0
    %p139 = por %p137, %p138
    %p140 = scmp.ne.s32.totalorder %s126, %s127
    %p141 = scmp.eq.s32.totalorder %s20, 1
    %p142 = por %p140, %p141
    %p144 = scmp.ne.s32.totalorder %s127, %s143
    %p145 = scmp.eq.s32.totalorder %s20, 0
    %p146 = por %p144, %p145
    %s148 = sadd.s32 %s147, 1
    %p151 = scmp.eq.s32.totalorder %s14, 1
    %p152 = scmp.ne.s32.totalorder %s147, %s149
    %p153 = scmp.eq.s32.totalorder %s14, 0
    %p154 = por %p152, %p153
    %p155 = scmp.ne.s32.totalorder %s147, %s149
    %p156 = scmp.eq.s32.totalorder %s19, 1
    %p157 = por %p155, %p156
    %p158 = scmp.ne.s32.totalorder %s149, %s150
    %p159 = scmp.eq.s32.totalorder %s19, 0
    %p160 = por %p158, %p159
    %p161 = scmp.ne.s32.totalorder %s149, %s150
    %p162 = scmp.eq.s32.totalorder %s20, 1
    %p163 = por %p161, %p162
    %p165 = scmp.ne.s32.totalorder %s150, %s164
    %p166 = scmp.eq.s32.totalorder %s20, 0
    %p167 = por %p165, %p166
    %s169 = sadd.s32 %s168, 1
    %p172 = scmp.eq.s32.totalorder %s14, 1
    %p173 = scmp.ne.s32.totalorder %s168, %s170
    %p174 = scmp.eq.s32.totalorder %s14, 0
    %p175 = por %p173, %p174
    %p176 = scmp.ne.s32.totalorder %s168, %s170
    %p177 = scmp.eq.s32.totalorder %s19, 1
    %p178 = por %p176, %p177
    %p179 = scmp.ne.s32.totalorder %s170, %s171
    %p180 = scmp.eq.s32.totalorder %s19, 0
    %p181 = por %p179, %p180
    %p182 = scmp.ne.s32.totalorder %s170, %s171
    %p183 = scmp.eq.s32.totalorder %s20, 1
    %p184 = por %p182, %p183
    %p186 = scmp.ne.s32.totalorder %s171, %s185
    %p187 = scmp.eq.s32.totalorder %s20, 0
    %p188 = por %p186, %p187
    %s190 = sadd.s32 %s189, 1
    %p193 = scmp.eq.s32.totalorder %s14, 1
    %p194 = scmp.ne.s32.totalorder %s189, %s191
    %p195 = scmp.eq.s32.totalorder %s14, 0
    %p196 = por %p194, %p195
    %p197 = scmp.ne.s32.totalorder %s189, %s191
    %p198 = scmp.eq.s32.totalorder %s19, 1
    %p199 = por %p197, %p198
    %p200 = scmp.ne.s32.totalorder %s191, %s192
    %p201 = scmp.eq.s32.totalorder %s19, 0
    %p202 = por %p200, %p201
    %p203 = scmp.ne.s32.totalorder %s191, %s192
    %p204 = scmp.eq.s32.totalorder %s20, 1
    %p205 = por %p203, %p204
    %p207 = scmp.ne.s32.totalorder %s192, %s206
    %p208 = scmp.eq.s32.totalorder %s20, 0
    %p209 = por %p207, %p208
    %s210 = ssub.s32 %s14, %s21
    %p211 = scmp.eq.s32.totalorder %s210, 0
    %s213 = sadd.s32 %s212, 1
    %s214 = scalar_select %p211, %s212, %s213
    %p217 = pneg %p211
    %p218 = scmp.eq.s32.totalorder %s14, 1
    %p219 = por %p217, %p218
    %p220 = scmp.ne.s32.totalorder %s212, %s215
    %p221 = scmp.eq.s32.totalorder %s14, 0
    %p222 = por %p220, %p221
    %p223 = scmp.ne.s32.totalorder %s212, %s215
    %p224 = scmp.eq.s32.totalorder %s19, 1
    %p225 = por %p223, %p224
    %p226 = scmp.ne.s32.totalorder %s215, %s216
    %p227 = scmp.eq.s32.totalorder %s19, 0
    %p228 = por %p226, %p227
    %p229 = scmp.ne.s32.totalorder %s215, %s216
    %p230 = scmp.eq.s32.totalorder %s20, 1
    %p231 = por %p229, %p230
    %p233 = scmp.ne.s32.totalorder %s216, %s232
    %p234 = scmp.eq.s32.totalorder %s20, 0
    %p235 = por %p233, %p234
    %p236 = scmp.le.s32.totalorder 1, %s14
    %p237 = scmp.lt.s32.totalorder %s14, 3
    %p238 = pnand %p236, %p237
    %p239 = pneg %p238
    // Predicated region
    $region9: #{ss2d_forward.8} parent=5 // pred_check
      _
    $region10: #{ss2d_forward.8} parent=5 // pred_check_branch
      %241 = sbr.rel (%p238) target = $region12
    $region11: #{ss2d_forward.8} parent=5 // pred_region
      %s242 = ssub.s32 %s14, 1
      // Predicated region
      $region13: #{ss2d_forward.8} parent=11 // pred_check
        %p243 = pneg %p87
      $region14: #{ss2d_forward.8} parent=11 // pred_check_branch
        %245 = sbr.rel (%p243) target = $region16
      $region15: #{ss2d_forward.8} parent=11 // pred_region
        _
      $region16: #{ss2d_forward.8} parent=11 // pred_fallthru
        _
      // Predicated region
      $region17: #{ss2d_forward.8} parent=11 // pred_check
        %p246 = pneg %p160
      $region18: #{ss2d_forward.8} parent=11 // pred_check_branch
        %248 = sbr.rel (%p246) target = $region20
      $region19: #{ss2d_forward.8} parent=11 // pred_region
        _
      $region20: #{ss2d_forward.8} parent=11 // pred_fallthru
        _
      // Predicated region
      $region21: #{ss2d_forward.8} parent=11 // pred_check
        %p249 = pneg %p181
      $region22: #{ss2d_forward.8} parent=11 // pred_check_branch
        %251 = sbr.rel (%p249) target = $region24
      $region23: #{ss2d_forward.8} parent=11 // pred_region
        _
      $region24: #{ss2d_forward.8} parent=11 // pred_fallthru
        _
      // Predicated region
      $region25: #{ss2d_forward.8} parent=11 // pred_check
        %p252 = pneg %p202
      $region26: #{ss2d_forward.8} parent=11 // pred_check_branch
        %254 = sbr.rel (%p252) target = $region28
      $region27: #{ss2d_forward.8} parent=11 // pred_region
        _
      $region28: #{ss2d_forward.8} parent=11 // pred_fallthru
        _
    $region12: #{ss2d_forward.8} parent=5 // pred_fallthru
      _
    %p255 = scmp.lt.s32.totalorder %s14, 2
    // Predicated region
    $region29: #{ss2d_forward.8} parent=5 // pred_check
      %p256 = pneg %p255
    $region30: #{ss2d_forward.8} parent=5 // pred_check_branch
      %258 = sbr.rel (%p256) target = $region32
    $region31: #{ss2d_forward.8} parent=5 // pred_region
      // Predicated region
      $region33: #{ss2d_forward.8} parent=31 // pred_check
        %p259 = pneg %p34
      $region34: #{ss2d_forward.8} parent=31 // pred_check_branch
        %261 = sbr.rel (%p259) target = $region36
      $region35: #{ss2d_forward.8} parent=31 // pred_region
        %p262 = scmp.lt.s32.totalorder %s14, 1
        %s263 = scalar_select %p262, %s14, 1
        %s264 = smul.addr %s263, 8
        %s265 = smul.addr %s264, 8
        %s266 = scalar_lea.vmem %s0, %s265
      $region36: #{ss2d_forward.8} parent=31 // pred_fallthru
        _
      // Predicated region
      $region37: #{ss2d_forward.8} parent=31 // pred_check
        %p267 = pneg %p60
      $region38: #{ss2d_forward.8} parent=31 // pred_check_branch
        %269 = sbr.rel (%p267) target = $region40
      $region39: #{ss2d_forward.8} parent=31 // pred_region
        %p270 = scmp.lt.s32.totalorder %s14, 1
        %s271 = scalar_select %p270, %s14, 1
        %s272 = smul.addr %s271, 8
        %s273 = smul.addr %s272, 8
        %s274 = scalar_lea.vmem %s1, %s273
      $region40: #{ss2d_forward.8} parent=31 // pred_fallthru
        _
      // Predicated region
      $region41: #{ss2d_forward.8} parent=31 // pred_check
        %p275 = pneg %p107
      $region42: #{ss2d_forward.8} parent=31 // pred_check_branch
        %277 = sbr.rel (%p275) target = $region44
      $region43: #{ss2d_forward.8} parent=31 // pred_region
        %p278 = scmp.lt.s32.totalorder %s14, 1
        %s279 = scalar_select %p278, %s14, 1
        %s280 = smul.addr %s279, 128
        %s281 = smul.addr %s280, 8
        %s282 = scalar_lea.vmem %s3, %s281
      $region44: #{ss2d_forward.8} parent=31 // pred_fallthru
        _
      // Predicated region
      $region45: #{ss2d_forward.8} parent=31 // pred_check
        %p283 = pneg %p133
      $region46: #{ss2d_forward.8} parent=31 // pred_check_branch
        %285 = sbr.rel (%p283) target = $region48
      $region47: #{ss2d_forward.8} parent=31 // pred_region
        %p286 = scmp.lt.s32.totalorder %s14, 1
        %s287 = scalar_select %p286, %s14, 1
        %s288 = smul.addr %s287, 128
        %s289 = smul.addr %s288, 8
        %s290 = scalar_lea.vmem %s4, %s289
      $region48: #{ss2d_forward.8} parent=31 // pred_fallthru
        _
    $region32: #{ss2d_forward.8} parent=5 // pred_fallthru
      _
    %p291 = scmp.le.s32.totalorder 1, %s14
    %p292 = scmp.lt.s32.totalorder %s14, 3
    %p293 = pnand %p291, %p292
    %p294 = pneg %p293
    // Predicated region
    $region49: #{ss2d_forward.8} parent=5 // pred_check
      _
    $region50: #{ss2d_forward.8} parent=5 // pred_check_branch
      %296 = sbr.rel (%p293) target = $region52
    $region51: #{ss2d_forward.8} parent=5 // pred_region
      %s297 = ssub.s32 %s14, 1
      %p298 = scmp.lt.s32.totalorder %s19, 1
      %s299 = scalar_select %p298, %s19, 1
      %s300 = smul.addr %s299, 8
      %s301 = smul.addr %s300, 8
      %s302 = scalar_lea.vmem %s0, %s301
      %p303 = pneg %p40
      %p304 = pneg %p37
      %p305 = scmp.lt.s32.totalorder %s19, 1
      %s306 = scalar_select %p305, %s19, 1
      %s307 = smul.addr %s306, 8
      %s308 = smul.addr %s307, 8
      %s309 = scalar_lea.vmem %s1, %s308
      %p310 = pneg %p66
      %p311 = pneg %p63
      %p312 = pneg %p87
      %p313 = pneg %p84
      %p314 = scmp.lt.s32.totalorder %s19, 1
      %s315 = scalar_select %p314, %s19, 1
      %s316 = smul.addr %s315, 128
      %s317 = smul.addr %s316, 8
      %s318 = scalar_lea.vmem %s3, %s317
      %p319 = pneg %p113
      %p320 = pneg %p110
      %p321 = scmp.lt.s32.totalorder %s19, 1
      %s322 = scalar_select %p321, %s19, 1
      %s323 = smul.addr %s322, 128
      %s324 = smul.addr %s323, 8
      %s325 = scalar_lea.vmem %s4, %s324
      %p326 = pneg %p139
      %p327 = pneg %p136
      %p328 = pneg %p160
      %p329 = pneg %p157
      %p330 = pneg %p181
      %p331 = pneg %p178
      %p332 = pneg %p202
      %p333 = pneg %p199
      %p334 = pneg %p228
      %p335 = pneg %p225
      %p336 = scmp.lt.s32.totalorder %s19, 1
      %s337 = scalar_select %p336, %s19, 1
      %s338 = smul.addr %s337, 8
      %s339 = smul.addr %s338, 8
      %s340 = scalar_lea.vmem %s8, %s339
      %p341 = scmp.lt.s32.totalorder %s19, 1
      %s342 = scalar_select %p341, %s19, 1
      %s343 = smul.addr %s342, 8
      %s344 = smul.addr %s343, 8
      %s345 = scalar_lea.vmem %s0, %s344
      %p346 = scmp.lt.s32.totalorder %s19, 1
      %s347 = scalar_select %p346, %s19, 1
      %s348 = smul.addr %s347, 8
      %s349 = smul.addr %s348, 8
      %s350 = scalar_lea.vmem %s1, %s349
      %p351 = scmp.lt.s32.totalorder %s19, 1
      %s352 = scalar_select %p351, %s19, 1
      %s353 = smul.addr %s352, 128
      %s354 = smul.addr %s353, 8
      %s355 = scalar_lea.vmem %s3, %s354
      %p356 = scmp.lt.s32.totalorder %s19, 1
      %s357 = scalar_select %p356, %s19, 1
      %s358 = smul.addr %s357, 128
      %s359 = smul.addr %s358, 8
      %s360 = scalar_lea.vmem %s4, %s359
      %p361 = scmp.lt.s32.totalorder %s19, 1
      %s362 = scalar_select %p361, %s19, 1
      %s363 = smul.addr %s362, 8
      %s364 = smul.addr %s363, 8
      %s365 = scalar_lea.vmem %s8, %s364
      %v366 = vld [vmem:[%s2] sm:$0xff]
      %v367 = vld [vmem:[%s2 + $0x8] sm:$0xff]
      %v368 = vld [vmem:[%s5] sm:$0x1]
      %v369 = vld [vmem:[%s6] sm:$0x1]
      %v370 = vld [vmem:[%s7] sm:$0xf]
      loop: start=0, step=1, limit=8
      $region53: #{ss2d_forward.8} parent=51 // loop_pre_header
        _
      $region54: #{ss2d_forward.8} parent=51 // loop_header
        %s372 = sphi 0, %s376
        %p373 = scmp.ge.s32.totalorder %s372, 8
        %v377 = vphi 0.0, %v1453
        %v378 = vphi 0.0, %v1454
      $region55: #{ss2d_forward.8} parent=51 // loop_header_branch
        %375 = sbr.rel (%p373) target = $region59
      $region56: #{ss2d_forward.8} parent=51 // loop_body
        %s379 = smul.u32 %s372, 8
        %s380 = scalar_lea.vmem %s345, %s379
        %v381 = vld [vmem:[%s380] sm:$0xff]
        %s382 = scalar_lea.vmem %s350, %s379
        %v383 = vld [vmem:[%s382] sm:$0xff]
        %v385 = vperm.slane %v369, 0
        %v387 = vadd.f32 %v383, %v385
        %v388 = vmax.f32 %v387, 0.0
        %v389 = vand.u32 2147483647, %v387
        %v390 = vsub.f32 0.0, %v389
        %v391 = vmul.f32 %v390, 1.442695
        %v392 = vpow.pop %v391
        %v393 = vadd.f32 %v392, 1.0
        %v394 = vlog2.pop %v393
        %v395 = vmul.f32 %v394, 0.6931472
        %v396 = vadd.f32 %v388, %v395
        %v397 = vmul.f32 %v396, %v381
        %v399 = vrot.slane %v396, 1
        %v400 = vrot.slane %v396, 2
        %v401 = vrot.slane %v396, 3
        %v402 = vrot.slane %v396, 4
        %v403 = vrot.slane %v396, 5
        %v404 = vrot.slane %v396, 6
        %v405 = vrot.slane %v396, 7
        %v406 = vperm.slane %v396, 0
        %v407 = vperm.slane %v399, 0
        %v408 = vperm.slane %v400, 0
        %v409 = vperm.slane %v401, 0
        %v410 = vperm.slane %v402, 0
        %v411 = vperm.slane %v403, 0
        %v412 = vperm.slane %v404, 0
        %v413 = vperm.slane %v405, 0
        %v422 = vmul.f32 %v406, %v366
        %v423 = vmul.f32 %v406, %v367
        %v424 = vmul.f32 %v407, %v366
        %v425 = vmul.f32 %v407, %v367
        %v426 = vmul.f32 %v408, %v366
        %v427 = vmul.f32 %v408, %v367
        %v428 = vmul.f32 %v409, %v366
        %v429 = vmul.f32 %v409, %v367
        %v430 = vmul.f32 %v410, %v366
        %v431 = vmul.f32 %v410, %v367
        %v432 = vmul.f32 %v411, %v366
        %v433 = vmul.f32 %v411, %v367
        %v434 = vmul.f32 %v412, %v366
        %v435 = vmul.f32 %v412, %v367
        %v436 = vmul.f32 %v413, %v366
        %v437 = vmul.f32 %v413, %v367
        %v438 = vmul.f32 %v422, 1.442695
        %v439 = vpow.pop %v438
        %v440 = vmul.f32 %v423, 1.442695
        %v441 = vpow.pop %v440
        %v442 = vmul.f32 %v424, 1.442695
        %v443 = vpow.pop %v442
        %v444 = vmul.f32 %v425, 1.442695
        %v445 = vpow.pop %v444
        %v446 = vmul.f32 %v426, 1.442695
        %v447 = vpow.pop %v446
        %v448 = vmul.f32 %v427, 1.442695
        %v449 = vpow.pop %v448
        %v450 = vmul.f32 %v428, 1.442695
        %v451 = vpow.pop %v450
        %v452 = vmul.f32 %v429, 1.442695
        %v453 = vpow.pop %v452
        %v454 = vmul.f32 %v430, 1.442695
        %v455 = vpow.pop %v454
        %v456 = vmul.f32 %v431, 1.442695
        %v457 = vpow.pop %v456
        %v458 = vmul.f32 %v432, 1.442695
        %v459 = vpow.pop %v458
        %v460 = vmul.f32 %v433, 1.442695
        %v461 = vpow.pop %v460
        %v462 = vmul.f32 %v434, 1.442695
        %v463 = vpow.pop %v462
        %v464 = vmul.f32 %v435, 1.442695
        %v465 = vpow.pop %v464
        %v466 = vmul.f32 %v436, 1.442695
        %v467 = vpow.pop %v466
        %v468 = vmul.f32 %v437, 1.442695
        %v469 = vpow.pop %v468
        %s470 = smul.u32 %s379, 16
        %s471 = scalar_lea.vmem %s355, %s470
        %v472 = vld [vmem:[%s471] sm:$0xff]
        %v473 = vld [vmem:[%s471 + $0x8] sm:$0xff]
        %v474 = vld [vmem:[%s471 + $0x10] sm:$0xff]
        %v475 = vld [vmem:[%s471 + $0x18] sm:$0xff]
        %v476 = vld [vmem:[%s471 + $0x20] sm:$0xff]
        %v477 = vld [vmem:[%s471 + $0x28] sm:$0xff]
        %v478 = vld [vmem:[%s471 + $0x30] sm:$0xff]
        %v479 = vld [vmem:[%s471 + $0x38] sm:$0xff]
        %v480 = vld [vmem:[%s471 + $0x40] sm:$0xff]
        %v481 = vld [vmem:[%s471 + $0x48] sm:$0xff]
        %v482 = vld [vmem:[%s471 + $0x50] sm:$0xff]
        %v483 = vld [vmem:[%s471 + $0x58] sm:$0xff]
        %v484 = vld [vmem:[%s471 + $0x60] sm:$0xff]
        %v485 = vld [vmem:[%s471 + $0x68] sm:$0xff]
        %v486 = vld [vmem:[%s471 + $0x70] sm:$0xff]
        %v487 = vld [vmem:[%s471 + $0x78] sm:$0xff]
        %s488 = scalar_lea.vmem %s360, %s470
        %v489 = vld [vmem:[%s488] sm:$0xff]
        %v490 = vld [vmem:[%s488 + $0x8] sm:$0xff]
        %v491 = vld [vmem:[%s488 + $0x10] sm:$0xff]
        %v492 = vld [vmem:[%s488 + $0x18] sm:$0xff]
        %v493 = vld [vmem:[%s488 + $0x20] sm:$0xff]
        %v494 = vld [vmem:[%s488 + $0x28] sm:$0xff]
        %v495 = vld [vmem:[%s488 + $0x30] sm:$0xff]
        %v496 = vld [vmem:[%s488 + $0x38] sm:$0xff]
        %v497 = vld [vmem:[%s488 + $0x40] sm:$0xff]
        %v498 = vld [vmem:[%s488 + $0x48] sm:$0xff]
        %v499 = vld [vmem:[%s488 + $0x50] sm:$0xff]
        %v500 = vld [vmem:[%s488 + $0x58] sm:$0xff]
        %v501 = vld [vmem:[%s488 + $0x60] sm:$0xff]
        %v502 = vld [vmem:[%s488 + $0x68] sm:$0xff]
        %v503 = vld [vmem:[%s488 + $0x70] sm:$0xff]
        %v504 = vld [vmem:[%s488 + $0x78] sm:$0xff]
        %506 = vset.pattern.permute.xlu0 0
        %507 = vperm.xlu0 %506, %v472
        %v508 = vpop.permute.xlu0 %507
        %511 = vset.pattern.permute.xlu0 0
        %512 = vperm.xlu0 %511, %v473
        %v513 = vpop.permute.xlu0 %512
        %516 = vset.pattern.permute.xlu0 0
        %517 = vperm.xlu0 %516, %v474
        %v518 = vpop.permute.xlu0 %517
        %521 = vset.pattern.permute.xlu0 0
        %522 = vperm.xlu0 %521, %v475
        %v523 = vpop.permute.xlu0 %522
        %526 = vset.pattern.permute.xlu0 0
        %527 = vperm.xlu0 %526, %v476
        %v528 = vpop.permute.xlu0 %527
        %531 = vset.pattern.permute.xlu0 0
        %532 = vperm.xlu0 %531, %v477
        %v533 = vpop.permute.xlu0 %532
        %536 = vset.pattern.permute.xlu0 0
        %537 = vperm.xlu0 %536, %v478
        %v538 = vpop.permute.xlu0 %537
        %541 = vset.pattern.permute.xlu0 0
        %542 = vperm.xlu0 %541, %v479
        %v543 = vpop.permute.xlu0 %542
        %546 = vset.pattern.permute.xlu0 0
        %547 = vperm.xlu0 %546, %v480
        %v548 = vpop.permute.xlu0 %547
        %551 = vset.pattern.permute.xlu0 0
        %552 = vperm.xlu0 %551, %v481
        %v553 = vpop.permute.xlu0 %552
        %556 = vset.pattern.permute.xlu0 0
        %557 = vperm.xlu0 %556, %v482
        %v558 = vpop.permute.xlu0 %557
        %561 = vset.pattern.permute.xlu0 0
        %562 = vperm.xlu0 %561, %v483
        %v563 = vpop.permute.xlu0 %562
        %566 = vset.pattern.permute.xlu0 0
        %567 = vperm.xlu0 %566, %v484
        %v568 = vpop.permute.xlu0 %567
        %571 = vset.pattern.permute.xlu0 0
        %572 = vperm.xlu0 %571, %v485
        %v573 = vpop.permute.xlu0 %572
        %576 = vset.pattern.permute.xlu0 0
        %577 = vperm.xlu0 %576, %v486
        %v578 = vpop.permute.xlu0 %577
        %581 = vset.pattern.permute.xlu0 0
        %582 = vperm.xlu0 %581, %v487
        %v583 = vpop.permute.xlu0 %582
        %v585 = vperm.slane %v370, 0
        %v586 = vmul.f32 %v508, %v585
        %v587 = vmul.f32 %v513, %v585
        %v588 = vmul.f32 %v518, %v585
        %v589 = vmul.f32 %v523, %v585
        %v590 = vmul.f32 %v528, %v585
        %v591 = vmul.f32 %v533, %v585
        %v592 = vmul.f32 %v538, %v585
        %v593 = vmul.f32 %v543, %v585
        %v594 = vmul.f32 %v548, %v585
        %v595 = vmul.f32 %v553, %v585
        %v596 = vmul.f32 %v558, %v585
        %v597 = vmul.f32 %v563, %v585
        %v598 = vmul.f32 %v568, %v585
        %v599 = vmul.f32 %v573, %v585
        %v600 = vmul.f32 %v578, %v585
        %v601 = vmul.f32 %v583, %v585
        %v602 = vadd.f32 %v586, 0.0
        %v603 = vadd.f32 %v587, 0.0
        %v604 = vadd.f32 %v588, 0.0
        %v605 = vadd.f32 %v589, 0.0
        %v606 = vadd.f32 %v590, 0.0
        %v607 = vadd.f32 %v591, 0.0
        %v608 = vadd.f32 %v592, 0.0
        %v609 = vadd.f32 %v593, 0.0
        %v610 = vadd.f32 %v594, 0.0
        %v611 = vadd.f32 %v595, 0.0
        %v612 = vadd.f32 %v596, 0.0
        %v613 = vadd.f32 %v597, 0.0
        %v614 = vadd.f32 %v598, 0.0
        %v615 = vadd.f32 %v599, 0.0
        %v616 = vadd.f32 %v600, 0.0
        %v617 = vadd.f32 %v601, 0.0
        %619 = vset.pattern.permute.xlu0 0
        %620 = vperm.xlu0 %619, %v489
        %v621 = vpop.permute.xlu0 %620
        %624 = vset.pattern.permute.xlu0 0
        %625 = vperm.xlu0 %624, %v490
        %v626 = vpop.permute.xlu0 %625
        %629 = vset.pattern.permute.xlu0 0
        %630 = vperm.xlu0 %629, %v491
        %v631 = vpop.permute.xlu0 %630
        %634 = vset.pattern.permute.xlu0 0
        %635 = vperm.xlu0 %634, %v492
        %v636 = vpop.permute.xlu0 %635
        %639 = vset.pattern.permute.xlu0 0
        %640 = vperm.xlu0 %639, %v493
        %v641 = vpop.permute.xlu0 %640
        %644 = vset.pattern.permute.xlu0 0
        %645 = vperm.xlu0 %644, %v494
        %v646 = vpop.permute.xlu0 %645
        %649 = vset.pattern.permute.xlu0 0
        %650 = vperm.xlu0 %649, %v495
        %v651 = vpop.permute.xlu0 %650
        %654 = vset.pattern.permute.xlu0 0
        %655 = vperm.xlu0 %654, %v496
        %v656 = vpop.permute.xlu0 %655
        %659 = vset.pattern.permute.xlu0 0
        %660 = vperm.xlu0 %659, %v497
        %v661 = vpop.permute.xlu0 %660
        %664 = vset.pattern.permute.xlu0 0
        %665 = vperm.xlu0 %664, %v498
        %v666 = vpop.permute.xlu0 %665
        %669 = vset.pattern.permute.xlu0 0
        %670 = vperm.xlu0 %669, %v499
        %v671 = vpop.permute.xlu0 %670
        %674 = vset.pattern.permute.xlu0 0
        %675 = vperm.xlu0 %674, %v500
        %v676 = vpop.permute.xlu0 %675
        %679 = vset.pattern.permute.xlu0 0
        %680 = vperm.xlu0 %679, %v501
        %v681 = vpop.permute.xlu0 %680
        %684 = vset.pattern.permute.xlu0 0
        %685 = vperm.xlu0 %684, %v502
        %v686 = vpop.permute.xlu0 %685
        %689 = vset.pattern.permute.xlu0 0
        %690 = vperm.xlu0 %689, %v503
        %v691 = vpop.permute.xlu0 %690
        %694 = vset.pattern.permute.xlu0 0
        %695 = vperm.xlu0 %694, %v504
        %v696 = vpop.permute.xlu0 %695
        %v698 = vmul.f32 %v621, %v585
        %v699 = vmul.f32 %v626, %v585
        %v700 = vmul.f32 %v631, %v585
        %v701 = vmul.f32 %v636, %v585
        %v702 = vmul.f32 %v641, %v585
        %v703 = vmul.f32 %v646, %v585
        %v704 = vmul.f32 %v651, %v585
        %v705 = vmul.f32 %v656, %v585
        %v706 = vmul.f32 %v661, %v585
        %v707 = vmul.f32 %v666, %v585
        %v708 = vmul.f32 %v671, %v585
        %v709 = vmul.f32 %v676, %v585
        %v710 = vmul.f32 %v681, %v585
        %v711 = vmul.f32 %v686, %v585
        %v712 = vmul.f32 %v691, %v585
        %v713 = vmul.f32 %v696, %v585
        %v714 = vadd.f32 %v698, 0.0
        %v715 = vadd.f32 %v699, 0.0
        %v716 = vadd.f32 %v700, 0.0
        %v717 = vadd.f32 %v701, 0.0
        %v718 = vadd.f32 %v702, 0.0
        %v719 = vadd.f32 %v703, 0.0
        %v720 = vadd.f32 %v704, 0.0
        %v721 = vadd.f32 %v705, 0.0
        %v722 = vadd.f32 %v706, 0.0
        %v723 = vadd.f32 %v707, 0.0
        %v724 = vadd.f32 %v708, 0.0
        %v725 = vadd.f32 %v709, 0.0
        %v726 = vadd.f32 %v710, 0.0
        %v727 = vadd.f32 %v711, 0.0
        %v728 = vadd.f32 %v712, 0.0
        %v729 = vadd.f32 %v713, 0.0
        %730 = vset.pattern.permute.xlu0 1
        %731 = vperm.xlu0 %730, %v472
        %v732 = vpop.permute.xlu0 %731
        %734 = vset.pattern.permute.xlu0 1
        %735 = vperm.xlu0 %734, %v473
        %v736 = vpop.permute.xlu0 %735
        %738 = vset.pattern.permute.xlu0 1
        %739 = vperm.xlu0 %738, %v474
        %v740 = vpop.permute.xlu0 %739
        %742 = vset.pattern.permute.xlu0 1
        %743 = vperm.xlu0 %742, %v475
        %v744 = vpop.permute.xlu0 %743
        %746 = vset.pattern.permute.xlu0 1
        %747 = vperm.xlu0 %746, %v476
        %v748 = vpop.permute.xlu0 %747
        %750 = vset.pattern.permute.xlu0 1
        %751 = vperm.xlu0 %750, %v477
        %v752 = vpop.permute.xlu0 %751
        %754 = vset.pattern.permute.xlu0 1
        %755 = vperm.xlu0 %754, %v478
        %v756 = vpop.permute.xlu0 %755
        %758 = vset.pattern.permute.xlu0 1
        %759 = vperm.xlu0 %758, %v479
        %v760 = vpop.permute.xlu0 %759
        %762 = vset.pattern.permute.xlu0 1
        %763 = vperm.xlu0 %762, %v480
        %v764 = vpop.permute.xlu0 %763
        %766 = vset.pattern.permute.xlu0 1
        %767 = vperm.xlu0 %766, %v481
        %v768 = vpop.permute.xlu0 %767
        %770 = vset.pattern.permute.xlu0 1
        %771 = vperm.xlu0 %770, %v482
        %v772 = vpop.permute.xlu0 %771
        %774 = vset.pattern.permute.xlu0 1
        %775 = vperm.xlu0 %774, %v483
        %v776 = vpop.permute.xlu0 %775
        %778 = vset.pattern.permute.xlu0 1
        %779 = vperm.xlu0 %778, %v484
        %v780 = vpop.permute.xlu0 %779
        %782 = vset.pattern.permute.xlu0 1
        %783 = vperm.xlu0 %782, %v485
        %v784 = vpop.permute.xlu0 %783
        %786 = vset.pattern.permute.xlu0 1
        %787 = vperm.xlu0 %786, %v486
        %v788 = vpop.permute.xlu0 %787
        %790 = vset.pattern.permute.xlu0 1
        %791 = vperm.xlu0 %790, %v487
        %v792 = vpop.permute.xlu0 %791
        %v794 = vperm.slane %v370, 1
        %v795 = vmul.f32 %v732, %v794
        %v796 = vmul.f32 %v736, %v794
        %v797 = vmul.f32 %v740, %v794
        %v798 = vmul.f32 %v744, %v794
        %v799 = vmul.f32 %v748, %v794
        %v800 = vmul.f32 %v752, %v794
        %v801 = vmul.f32 %v756, %v794
        %v802 = vmul.f32 %v760, %v794
        %v803 = vmul.f32 %v764, %v794
        %v804 = vmul.f32 %v768, %v794
        %v805 = vmul.f32 %v772, %v794
        %v806 = vmul.f32 %v776, %v794
        %v807 = vmul.f32 %v780, %v794
        %v808 = vmul.f32 %v784, %v794
        %v809 = vmul.f32 %v788, %v794
        %v810 = vmul.f32 %v792, %v794
        %v811 = vadd.f32 %v602, %v795
        %v812 = vadd.f32 %v603, %v796
        %v813 = vadd.f32 %v604, %v797
        %v814 = vadd.f32 %v605, %v798
        %v815 = vadd.f32 %v606, %v799
        %v816 = vadd.f32 %v607, %v800
        %v817 = vadd.f32 %v608, %v801
        %v818 = vadd.f32 %v609, %v802
        %v819 = vadd.f32 %v610, %v803
        %v820 = vadd.f32 %v611, %v804
        %v821 = vadd.f32 %v612, %v805
        %v822 = vadd.f32 %v613, %v806
        %v823 = vadd.f32 %v614, %v807
        %v824 = vadd.f32 %v615, %v808
        %v825 = vadd.f32 %v616, %v809
        %v826 = vadd.f32 %v617, %v810
        %827 = vset.pattern.permute.xlu0 1
        %828 = vperm.xlu0 %827, %v489
        %v829 = vpop.permute.xlu0 %828
        %831 = vset.pattern.permute.xlu0 1
        %832 = vperm.xlu0 %831, %v490
        %v833 = vpop.permute.xlu0 %832
        %835 = vset.pattern.permute.xlu0 1
        %836 = vperm.xlu0 %835, %v491
        %v837 = vpop.permute.xlu0 %836
        %839 = vset.pattern.permute.xlu0 1
        %840 = vperm.xlu0 %839, %v492
        %v841 = vpop.permute.xlu0 %840
        %843 = vset.pattern.permute.xlu0 1
        %844 = vperm.xlu0 %843, %v493
        %v845 = vpop.permute.xlu0 %844
        %847 = vset.pattern.permute.xlu0 1
        %848 = vperm.xlu0 %847, %v494
        %v849 = vpop.permute.xlu0 %848
        %851 = vset.pattern.permute.xlu0 1
        %852 = vperm.xlu0 %851, %v495
        %v853 = vpop.permute.xlu0 %852
        %855 = vset.pattern.permute.xlu0 1
        %856 = vperm.xlu0 %855, %v496
        %v857 = vpop.permute.xlu0 %856
        %859 = vset.pattern.permute.xlu0 1
        %860 = vperm.xlu0 %859, %v497
        %v861 = vpop.permute.xlu0 %860
        %863 = vset.pattern.permute.xlu0 1
        %864 = vperm.xlu0 %863, %v498
        %v865 = vpop.permute.xlu0 %864
        %867 = vset.pattern.permute.xlu0 1
        %868 = vperm.xlu0 %867, %v499
        %v869 = vpop.permute.xlu0 %868
        %871 = vset.pattern.permute.xlu0 1
        %872 = vperm.xlu0 %871, %v500
        %v873 = vpop.permute.xlu0 %872
        %875 = vset.pattern.permute.xlu0 1
        %876 = vperm.xlu0 %875, %v501
        %v877 = vpop.permute.xlu0 %876
        %879 = vset.pattern.permute.xlu0 1
        %880 = vperm.xlu0 %879, %v502
        %v881 = vpop.permute.xlu0 %880
        %883 = vset.pattern.permute.xlu0 1
        %884 = vperm.xlu0 %883, %v503
        %v885 = vpop.permute.xlu0 %884
        %887 = vset.pattern.permute.xlu0 1
        %888 = vperm.xlu0 %887, %v504
        %v889 = vpop.permute.xlu0 %888
        %v891 = vmul.f32 %v829, %v794
        %v892 = vmul.f32 %v833, %v794
        %v893 = vmul.f32 %v837, %v794
        %v894 = vmul.f32 %v841, %v794
        %v895 = vmul.f32 %v845, %v794
        %v896 = vmul.f32 %v849, %v794
        %v897 = vmul.f32 %v853, %v794
        %v898 = vmul.f32 %v857, %v794
        %v899 = vmul.f32 %v861, %v794
        %v900 = vmul.f32 %v865, %v794
        %v901 = vmul.f32 %v869, %v794
        %v902 = vmul.f32 %v873, %v794
        %v903 = vmul.f32 %v877, %v794
        %v904 = vmul.f32 %v881, %v794
        %v905 = vmul.f32 %v885, %v794
        %v906 = vmul.f32 %v889, %v794
        %v907 = vadd.f32 %v714, %v891
        %v908 = vadd.f32 %v715, %v892
        %v909 = vadd.f32 %v716, %v893
        %v910 = vadd.f32 %v717, %v894
        %v911 = vadd.f32 %v718, %v895
        %v912 = vadd.f32 %v719, %v896
        %v913 = vadd.f32 %v720, %v897
        %v914 = vadd.f32 %v721, %v898
        %v915 = vadd.f32 %v722, %v899
        %v916 = vadd.f32 %v723, %v900
        %v917 = vadd.f32 %v724, %v901
        %v918 = vadd.f32 %v725, %v902
        %v919 = vadd.f32 %v726, %v903
        %v920 = vadd.f32 %v727, %v904
        %v921 = vadd.f32 %v728, %v905
        %v922 = vadd.f32 %v729, %v906
        %923 = vset.pattern.permute.xlu0 2
        %924 = vperm.xlu0 %923, %v472
        %v925 = vpop.permute.xlu0 %924
        %927 = vset.pattern.permute.xlu0 2
        %928 = vperm.xlu0 %927, %v473
        %v929 = vpop.permute.xlu0 %928
        %931 = vset.pattern.permute.xlu0 2
        %932 = vperm.xlu0 %931, %v474
        %v933 = vpop.permute.xlu0 %932
        %935 = vset.pattern.permute.xlu0 2
        %936 = vperm.xlu0 %935, %v475
        %v937 = vpop.permute.xlu0 %936
        %939 = vset.pattern.permute.xlu0 2
        %940 = vperm.xlu0 %939, %v476
        %v941 = vpop.permute.xlu0 %940
        %943 = vset.pattern.permute.xlu0 2
        %944 = vperm.xlu0 %943, %v477
        %v945 = vpop.permute.xlu0 %944
        %947 = vset.pattern.permute.xlu0 2
        %948 = vperm.xlu0 %947, %v478
        %v949 = vpop.permute.xlu0 %948
        %951 = vset.pattern.permute.xlu0 2
        %952 = vperm.xlu0 %951, %v479
        %v953 = vpop.permute.xlu0 %952
        %955 = vset.pattern.permute.xlu0 2
        %956 = vperm.xlu0 %955, %v480
        %v957 = vpop.permute.xlu0 %956
        %959 = vset.pattern.permute.xlu0 2
        %960 = vperm.xlu0 %959, %v481
        %v961 = vpop.permute.xlu0 %960
        %963 = vset.pattern.permute.xlu0 2
        %964 = vperm.xlu0 %963, %v482
        %v965 = vpop.permute.xlu0 %964
        %967 = vset.pattern.permute.xlu0 2
        %968 = vperm.xlu0 %967, %v483
        %v969 = vpop.permute.xlu0 %968
        %971 = vset.pattern.permute.xlu0 2
        %972 = vperm.xlu0 %971, %v484
        %v973 = vpop.permute.xlu0 %972
        %975 = vset.pattern.permute.xlu0 2
        %976 = vperm.xlu0 %975, %v485
        %v977 = vpop.permute.xlu0 %976
        %979 = vset.pattern.permute.xlu0 2
        %980 = vperm.xlu0 %979, %v486
        %v981 = vpop.permute.xlu0 %980
        %983 = vset.pattern.permute.xlu0 2
        %984 = vperm.xlu0 %983, %v487
        %v985 = vpop.permute.xlu0 %984
        %v987 = vperm.slane %v370, 2
        %v988 = vmul.f32 %v925, %v987
        %v989 = vmul.f32 %v929, %v987
        %v990 = vmul.f32 %v933, %v987
        %v991 = vmul.f32 %v937, %v987
        %v992 = vmul.f32 %v941, %v987
        %v993 = vmul.f32 %v945, %v987
        %v994 = vmul.f32 %v949, %v987
        %v995 = vmul.f32 %v953, %v987
        %v996 = vmul.f32 %v957, %v987
        %v997 = vmul.f32 %v961, %v987
        %v998 = vmul.f32 %v965, %v987
        %v999 = vmul.f32 %v969, %v987
        %v1000 = vmul.f32 %v973, %v987
        %v1001 = vmul.f32 %v977, %v987
        %v1002 = vmul.f32 %v981, %v987
        %v1003 = vmul.f32 %v985, %v987
        %v1004 = vadd.f32 %v811, %v988
        %v1005 = vadd.f32 %v812, %v989
        %v1006 = vadd.f32 %v813, %v990
        %v1007 = vadd.f32 %v814, %v991
        %v1008 = vadd.f32 %v815, %v992
        %v1009 = vadd.f32 %v816, %v993
        %v1010 = vadd.f32 %v817, %v994
        %v1011 = vadd.f32 %v818, %v995
        %v1012 = vadd.f32 %v819, %v996
        %v1013 = vadd.f32 %v820, %v997
        %v1014 = vadd.f32 %v821, %v998
        %v1015 = vadd.f32 %v822, %v999
        %v1016 = vadd.f32 %v823, %v1000
        %v1017 = vadd.f32 %v824, %v1001
        %v1018 = vadd.f32 %v825, %v1002
        %v1019 = vadd.f32 %v826, %v1003
        %1020 = vset.pattern.permute.xlu0 2
        %1021 = vperm.xlu0 %1020, %v489
        %v1022 = vpop.permute.xlu0 %1021
        %1024 = vset.pattern.permute.xlu0 2
        %1025 = vperm.xlu0 %1024, %v490
        %v1026 = vpop.permute.xlu0 %1025
        %1028 = vset.pattern.permute.xlu0 2
        %1029 = vperm.xlu0 %1028, %v491
        %v1030 = vpop.permute.xlu0 %1029
        %1032 = vset.pattern.permute.xlu0 2
        %1033 = vperm.xlu0 %1032, %v492
        %v1034 = vpop.permute.xlu0 %1033
        %1036 = vset.pattern.permute.xlu0 2
        %1037 = vperm.xlu0 %1036, %v493
        %v1038 = vpop.permute.xlu0 %1037
        %1040 = vset.pattern.permute.xlu0 2
        %1041 = vperm.xlu0 %1040, %v494
        %v1042 = vpop.permute.xlu0 %1041
        %1044 = vset.pattern.permute.xlu0 2
        %1045 = vperm.xlu0 %1044, %v495
        %v1046 = vpop.permute.xlu0 %1045
        %1048 = vset.pattern.permute.xlu0 2
        %1049 = vperm.xlu0 %1048, %v496
        %v1050 = vpop.permute.xlu0 %1049
        %1052 = vset.pattern.permute.xlu0 2
        %1053 = vperm.xlu0 %1052, %v497
        %v1054 = vpop.permute.xlu0 %1053
        %1056 = vset.pattern.permute.xlu0 2
        %1057 = vperm.xlu0 %1056, %v498
        %v1058 = vpop.permute.xlu0 %1057
        %1060 = vset.pattern.permute.xlu0 2
        %1061 = vperm.xlu0 %1060, %v499
        %v1062 = vpop.permute.xlu0 %1061
        %1064 = vset.pattern.permute.xlu0 2
        %1065 = vperm.xlu0 %1064, %v500
        %v1066 = vpop.permute.xlu0 %1065
        %1068 = vset.pattern.permute.xlu0 2
        %1069 = vperm.xlu0 %1068, %v501
        %v1070 = vpop.permute.xlu0 %1069
        %1072 = vset.pattern.permute.xlu0 2
        %1073 = vperm.xlu0 %1072, %v502
        %v1074 = vpop.permute.xlu0 %1073
        %1076 = vset.pattern.permute.xlu0 2
        %1077 = vperm.xlu0 %1076, %v503
        %v1078 = vpop.permute.xlu0 %1077
        %1080 = vset.pattern.permute.xlu0 2
        %1081 = vperm.xlu0 %1080, %v504
        %v1082 = vpop.permute.xlu0 %1081
        %v1084 = vmul.f32 %v1022, %v987
        %v1085 = vmul.f32 %v1026, %v987
        %v1086 = vmul.f32 %v1030, %v987
        %v1087 = vmul.f32 %v1034, %v987
        %v1088 = vmul.f32 %v1038, %v987
        %v1089 = vmul.f32 %v1042, %v987
        %v1090 = vmul.f32 %v1046, %v987
        %v1091 = vmul.f32 %v1050, %v987
        %v1092 = vmul.f32 %v1054, %v987
        %v1093 = vmul.f32 %v1058, %v987
        %v1094 = vmul.f32 %v1062, %v987
        %v1095 = vmul.f32 %v1066, %v987
        %v1096 = vmul.f32 %v1070, %v987
        %v1097 = vmul.f32 %v1074, %v987
        %v1098 = vmul.f32 %v1078, %v987
        %v1099 = vmul.f32 %v1082, %v987
        %v1100 = vadd.f32 %v907, %v1084
        %v1101 = vadd.f32 %v908, %v1085
        %v1102 = vadd.f32 %v909, %v1086
        %v1103 = vadd.f32 %v910, %v1087
        %v1104 = vadd.f32 %v911, %v1088
        %v1105 = vadd.f32 %v912, %v1089
        %v1106 = vadd.f32 %v913, %v1090
        %v1107 = vadd.f32 %v914, %v1091
        %v1108 = vadd.f32 %v915, %v1092
        %v1109 = vadd.f32 %v916, %v1093
        %v1110 = vadd.f32 %v917, %v1094
        %v1111 = vadd.f32 %v918, %v1095
        %v1112 = vadd.f32 %v919, %v1096
        %v1113 = vadd.f32 %v920, %v1097
        %v1114 = vadd.f32 %v921, %v1098
        %v1115 = vadd.f32 %v922, %v1099
        %1116 = vset.pattern.permute.xlu0 3
        %1117 = vperm.xlu0 %1116, %v472
        %v1118 = vpop.permute.xlu0 %1117
        %1120 = vset.pattern.permute.xlu0 3
        %1121 = vperm.xlu0 %1120, %v473
        %v1122 = vpop.permute.xlu0 %1121
        %1124 = vset.pattern.permute.xlu0 3
        %1125 = vperm.xlu0 %1124, %v474
        %v1126 = vpop.permute.xlu0 %1125
        %1128 = vset.pattern.permute.xlu0 3
        %1129 = vperm.xlu0 %1128, %v475
        %v1130 = vpop.permute.xlu0 %1129
        %1132 = vset.pattern.permute.xlu0 3
        %1133 = vperm.xlu0 %1132, %v476
        %v1134 = vpop.permute.xlu0 %1133
        %1136 = vset.pattern.permute.xlu0 3
        %1137 = vperm.xlu0 %1136, %v477
        %v1138 = vpop.permute.xlu0 %1137
        %1140 = vset.pattern.permute.xlu0 3
        %1141 = vperm.xlu0 %1140, %v478
        %v1142 = vpop.permute.xlu0 %1141
        %1144 = vset.pattern.permute.xlu0 3
        %1145 = vperm.xlu0 %1144, %v479
        %v1146 = vpop.permute.xlu0 %1145
        %1148 = vset.pattern.permute.xlu0 3
        %1149 = vperm.xlu0 %1148, %v480
        %v1150 = vpop.permute.xlu0 %1149
        %1152 = vset.pattern.permute.xlu0 3
        %1153 = vperm.xlu0 %1152, %v481
        %v1154 = vpop.permute.xlu0 %1153
        %1156 = vset.pattern.permute.xlu0 3
        %1157 = vperm.xlu0 %1156, %v482
        %v1158 = vpop.permute.xlu0 %1157
        %1160 = vset.pattern.permute.xlu0 3
        %1161 = vperm.xlu0 %1160, %v483
        %v1162 = vpop.permute.xlu0 %1161
        %1164 = vset.pattern.permute.xlu0 3
        %1165 = vperm.xlu0 %1164, %v484
        %v1166 = vpop.permute.xlu0 %1165
        %1168 = vset.pattern.permute.xlu0 3
        %1169 = vperm.xlu0 %1168, %v485
        %v1170 = vpop.permute.xlu0 %1169
        %1172 = vset.pattern.permute.xlu0 3
        %1173 = vperm.xlu0 %1172, %v486
        %v1174 = vpop.permute.xlu0 %1173
        %1176 = vset.pattern.permute.xlu0 3
        %1177 = vperm.xlu0 %1176, %v487
        %v1178 = vpop.permute.xlu0 %1177
        %v1180 = vperm.slane %v370, 3
        %v1181 = vmul.f32 %v1118, %v1180
        %v1182 = vmul.f32 %v1122, %v1180
        %v1183 = vmul.f32 %v1126, %v1180
        %v1184 = vmul.f32 %v1130, %v1180
        %v1185 = vmul.f32 %v1134, %v1180
        %v1186 = vmul.f32 %v1138, %v1180
        %v1187 = vmul.f32 %v1142, %v1180
        %v1188 = vmul.f32 %v1146, %v1180
        %v1189 = vmul.f32 %v1150, %v1180
        %v1190 = vmul.f32 %v1154, %v1180
        %v1191 = vmul.f32 %v1158, %v1180
        %v1192 = vmul.f32 %v1162, %v1180
        %v1193 = vmul.f32 %v1166, %v1180
        %v1194 = vmul.f32 %v1170, %v1180
        %v1195 = vmul.f32 %v1174, %v1180
        %v1196 = vmul.f32 %v1178, %v1180
        %v1197 = vadd.f32 %v1004, %v1181
        %v1198 = vadd.f32 %v1005, %v1182
        %v1199 = vadd.f32 %v1006, %v1183
        %v1200 = vadd.f32 %v1007, %v1184
        %v1201 = vadd.f32 %v1008, %v1185
        %v1202 = vadd.f32 %v1009, %v1186
        %v1203 = vadd.f32 %v1010, %v1187
        %v1204 = vadd.f32 %v1011, %v1188
        %v1205 = vadd.f32 %v1012, %v1189
        %v1206 = vadd.f32 %v1013, %v1190
        %v1207 = vadd.f32 %v1014, %v1191
        %v1208 = vadd.f32 %v1015, %v1192
        %v1209 = vadd.f32 %v1016, %v1193
        %v1210 = vadd.f32 %v1017, %v1194
        %v1211 = vadd.f32 %v1018, %v1195
        %v1212 = vadd.f32 %v1019, %v1196
        %1213 = vset.pattern.permute.xlu0 3
        %1214 = vperm.xlu0 %1213, %v489
        %v1215 = vpop.permute.xlu0 %1214
        %1217 = vset.pattern.permute.xlu0 3
        %1218 = vperm.xlu0 %1217, %v490
        %v1219 = vpop.permute.xlu0 %1218
        %1221 = vset.pattern.permute.xlu0 3
        %1222 = vperm.xlu0 %1221, %v491
        %v1223 = vpop.permute.xlu0 %1222
        %1225 = vset.pattern.permute.xlu0 3
        %1226 = vperm.xlu0 %1225, %v492
        %v1227 = vpop.permute.xlu0 %1226
        %1229 = vset.pattern.permute.xlu0 3
        %1230 = vperm.xlu0 %1229, %v493
        %v1231 = vpop.permute.xlu0 %1230
        %1233 = vset.pattern.permute.xlu0 3
        %1234 = vperm.xlu0 %1233, %v494
        %v1235 = vpop.permute.xlu0 %1234
        %1237 = vset.pattern.permute.xlu0 3
        %1238 = vperm.xlu0 %1237, %v495
        %v1239 = vpop.permute.xlu0 %1238
        %1241 = vset.pattern.permute.xlu0 3
        %1242 = vperm.xlu0 %1241, %v496
        %v1243 = vpop.permute.xlu0 %1242
        %1245 = vset.pattern.permute.xlu0 3
        %1246 = vperm.xlu0 %1245, %v497
        %v1247 = vpop.permute.xlu0 %1246
        %1249 = vset.pattern.permute.xlu0 3
        %1250 = vperm.xlu0 %1249, %v498
        %v1251 = vpop.permute.xlu0 %1250
        %1253 = vset.pattern.permute.xlu0 3
        %1254 = vperm.xlu0 %1253, %v499
        %v1255 = vpop.permute.xlu0 %1254
        %1257 = vset.pattern.permute.xlu0 3
        %1258 = vperm.xlu0 %1257, %v500
        %v1259 = vpop.permute.xlu0 %1258
        %1261 = vset.pattern.permute.xlu0 3
        %1262 = vperm.xlu0 %1261, %v501
        %v1263 = vpop.permute.xlu0 %1262
        %1265 = vset.pattern.permute.xlu0 3
        %1266 = vperm.xlu0 %1265, %v502
        %v1267 = vpop.permute.xlu0 %1266
        %1269 = vset.pattern.permute.xlu0 3
        %1270 = vperm.xlu0 %1269, %v503
        %v1271 = vpop.permute.xlu0 %1270
        %1273 = vset.pattern.permute.xlu0 3
        %1274 = vperm.xlu0 %1273, %v504
        %v1275 = vpop.permute.xlu0 %1274
        %v1277 = vmul.f32 %v1215, %v1180
        %v1278 = vmul.f32 %v1219, %v1180
        %v1279 = vmul.f32 %v1223, %v1180
        %v1280 = vmul.f32 %v1227, %v1180
        %v1281 = vmul.f32 %v1231, %v1180
        %v1282 = vmul.f32 %v1235, %v1180
        %v1283 = vmul.f32 %v1239, %v1180
        %v1284 = vmul.f32 %v1243, %v1180
        %v1285 = vmul.f32 %v1247, %v1180
        %v1286 = vmul.f32 %v1251, %v1180
        %v1287 = vmul.f32 %v1255, %v1180
        %v1288 = vmul.f32 %v1259, %v1180
        %v1289 = vmul.f32 %v1263, %v1180
        %v1290 = vmul.f32 %v1267, %v1180
        %v1291 = vmul.f32 %v1271, %v1180
        %v1292 = vmul.f32 %v1275, %v1180
        %v1293 = vadd.f32 %v1100, %v1277
        %v1294 = vadd.f32 %v1101, %v1278
        %v1295 = vadd.f32 %v1102, %v1279
        %v1296 = vadd.f32 %v1103, %v1280
        %v1297 = vadd.f32 %v1104, %v1281
        %v1298 = vadd.f32 %v1105, %v1282
        %v1299 = vadd.f32 %v1106, %v1283
        %v1300 = vadd.f32 %v1107, %v1284
        %v1301 = vadd.f32 %v1108, %v1285
        %v1302 = vadd.f32 %v1109, %v1286
        %v1303 = vadd.f32 %v1110, %v1287
        %v1304 = vadd.f32 %v1111, %v1288
        %v1305 = vadd.f32 %v1112, %v1289
        %v1306 = vadd.f32 %v1113, %v1290
        %v1307 = vadd.f32 %v1114, %v1291
        %v1308 = vadd.f32 %v1115, %v1292
        %v1310 = vrot.slane %v397, 1
        %v1311 = vrot.slane %v397, 2
        %v1312 = vrot.slane %v397, 3
        %v1313 = vrot.slane %v397, 4
        %v1314 = vrot.slane %v397, 5
        %v1315 = vrot.slane %v397, 6
        %v1316 = vrot.slane %v397, 7
        %v1317 = vperm.slane %v397, 0
        %v1318 = vperm.slane %v1310, 0
        %v1319 = vperm.slane %v1311, 0
        %v1320 = vperm.slane %v1312, 0
        %v1321 = vperm.slane %v1313, 0
        %v1322 = vperm.slane %v1314, 0
        %v1323 = vperm.slane %v1315, 0
        %v1324 = vperm.slane %v1316, 0
        %v1333 = vmul.f32 %v1197, %v1317
        %v1334 = vmul.f32 %v1198, %v1317
        %v1335 = vmul.f32 %v1199, %v1318
        %v1336 = vmul.f32 %v1200, %v1318
        %v1337 = vmul.f32 %v1201, %v1319
        %v1338 = vmul.f32 %v1202, %v1319
        %v1339 = vmul.f32 %v1203, %v1320
        %v1340 = vmul.f32 %v1204, %v1320
        %v1341 = vmul.f32 %v1205, %v1321
        %v1342 = vmul.f32 %v1206, %v1321
        %v1343 = vmul.f32 %v1207, %v1322
        %v1344 = vmul.f32 %v1208, %v1322
        %v1345 = vmul.f32 %v1209, %v1323
        %v1346 = vmul.f32 %v1210, %v1323
        %v1347 = vmul.f32 %v1211, %v1324
        %v1348 = vmul.f32 %v1212, %v1324
        %v1350 = vperm.slane %v368, 0
        %v1352 = vmul.f32 %v1350, %v381
        %v1353 = vmul.f32 %v439, %v377
        %v1354 = vmul.f32 %v441, %v378
        %v1355 = vadd.f32 %v1353, %v1333
        %v1356 = vadd.f32 %v1354, %v1334
        %v1357 = vmul.f32 %v1293, %v1355
        %v1358 = vmul.f32 %v1294, %v1356
        %v1359 = vadd.f32 %v1357, %v1358
        %v1360 = vrot.slane %v1359, 4
        %v1361 = vadd.f32 %v1359, %v1360
        %v1362 = vrot.slane %v1361, 2
        %v1363 = vadd.f32 %v1361, %v1362
        %v1364 = vrot.slane %v1363, 1
        %v1365 = vadd.f32 %v1363, %v1364
        %v1366 = vadd.f32 %v1365, %v1352
        %v1367 = vmul.f32 %v443, %v1355
        %v1368 = vmul.f32 %v445, %v1356
        %v1369 = vadd.f32 %v1367, %v1335
        %v1370 = vadd.f32 %v1368, %v1336
        %v1371 = vmul.f32 %v1295, %v1369
        %v1372 = vmul.f32 %v1296, %v1370
        %v1373 = vadd.f32 %v1371, %v1372
        %v1374 = vrot.slane %v1373, 4
        %v1375 = vadd.f32 %v1373, %v1374
        %v1376 = vrot.slane %v1375, 2
        %v1377 = vadd.f32 %v1375, %v1376
        %v1378 = vrot.slane %v1377, 1
        %v1379 = vadd.f32 %v1377, %v1378
        %v1380 = vadd.f32 %v1379, %v1352
        %v1381 = vmul.f32 %v447, %v1369
        %v1382 = vmul.f32 %v449, %v1370
        %v1383 = vadd.f32 %v1381, %v1337
        %v1384 = vadd.f32 %v1382, %v1338
        %v1385 = vmul.f32 %v1297, %v1383
        %v1386 = vmul.f32 %v1298, %v1384
        %v1387 = vadd.f32 %v1385, %v1386
        %v1388 = vrot.slane %v1387, 4
        %v1389 = vadd.f32 %v1387, %v1388
        %v1390 = vrot.slane %v1389, 2
        %v1391 = vadd.f32 %v1389, %v1390
        %v1392 = vrot.slane %v1391, 1
        %v1393 = vadd.f32 %v1391, %v1392
        %v1394 = vadd.f32 %v1393, %v1352
        %v1395 = vmul.f32 %v451, %v1383
        %v1396 = vmul.f32 %v453, %v1384
        %v1397 = vadd.f32 %v1395, %v1339
        %v1398 = vadd.f32 %v1396, %v1340
        %v1399 = vmul.f32 %v1299, %v1397
        %v1400 = vmul.f32 %v1300, %v1398
        %v1401 = vadd.f32 %v1399, %v1400
        %v1402 = vrot.slane %v1401, 4
        %v1403 = vadd.f32 %v1401, %v1402
        %v1404 = vrot.slane %v1403, 2
        %v1405 = vadd.f32 %v1403, %v1404
        %v1406 = vrot.slane %v1405, 1
        %v1407 = vadd.f32 %v1405, %v1406
        %v1408 = vadd.f32 %v1407, %v1352
        %v1409 = vmul.f32 %v455, %v1397
        %v1410 = vmul.f32 %v457, %v1398
        %v1411 = vadd.f32 %v1409, %v1341
        %v1412 = vadd.f32 %v1410, %v1342
        %v1413 = vmul.f32 %v1301, %v1411
        %v1414 = vmul.f32 %v1302, %v1412
        %v1415 = vadd.f32 %v1413, %v1414
        %v1416 = vrot.slane %v1415, 4
        %v1417 = vadd.f32 %v1415, %v1416
        %v1418 = vrot.slane %v1417, 2
        %v1419 = vadd.f32 %v1417, %v1418
        %v1420 = vrot.slane %v1419, 1
        %v1421 = vadd.f32 %v1419, %v1420
        %v1422 = vadd.f32 %v1421, %v1352
        %v1423 = vmul.f32 %v459, %v1411
        %v1424 = vmul.f32 %v461, %v1412
        %v1425 = vadd.f32 %v1423, %v1343
        %v1426 = vadd.f32 %v1424, %v1344
        %v1427 = vmul.f32 %v1303, %v1425
        %v1428 = vmul.f32 %v1304, %v1426
        %v1429 = vadd.f32 %v1427, %v1428
        %v1430 = vrot.slane %v1429, 4
        %v1431 = vadd.f32 %v1429, %v1430
        %v1432 = vrot.slane %v1431, 2
        %v1433 = vadd.f32 %v1431, %v1432
        %v1434 = vrot.slane %v1433, 1
        %v1435 = vadd.f32 %v1433, %v1434
        %v1436 = vadd.f32 %v1435, %v1352
        %v1437 = vmul.f32 %v463, %v1425
        %v1438 = vmul.f32 %v465, %v1426
        %v1439 = vadd.f32 %v1437, %v1345
        %v1440 = vadd.f32 %v1438, %v1346
        %v1441 = vmul.f32 %v1305, %v1439
        %v1442 = vmul.f32 %v1306, %v1440
        %v1443 = vadd.f32 %v1441, %v1442
        %v1444 = vrot.slane %v1443, 4
        %v1445 = vadd.f32 %v1443, %v1444
        %v1446 = vrot.slane %v1445, 2
        %v1447 = vadd.f32 %v1445, %v1446
        %v1448 = vrot.slane %v1447, 1
        %v1449 = vadd.f32 %v1447, %v1448
        %v1450 = vadd.f32 %v1449, %v1352
        %v1451 = vmul.f32 %v467, %v1439
        %v1452 = vmul.f32 %v469, %v1440
        %v1453 = vadd.f32 %v1451, %v1347
        %v1454 = vadd.f32 %v1452, %v1348
        %v1455 = vmul.f32 %v1307, %v1453
        %v1456 = vmul.f32 %v1308, %v1454
        %v1457 = vadd.f32 %v1455, %v1456
        %v1458 = vrot.slane %v1457, 4
        %v1459 = vadd.f32 %v1457, %v1458
        %v1460 = vrot.slane %v1459, 2
        %v1461 = vadd.f32 %v1459, %v1460
        %v1462 = vrot.slane %v1461, 1
        %v1463 = vadd.f32 %v1461, %v1462
        %v1464 = vadd.f32 %v1463, %v1352
        %vm1465 = vcmask 1040384
        %v1466 = vsel %vm1465, %v1366, %v1380
        %vm1467 = vcmask 1041408
        %v1468 = vsel %vm1467, %v1466, %v1394
        %vm1469 = vcmask 1042432
        %v1470 = vsel %vm1469, %v1468, %v1408
        %vm1471 = vcmask 1043456
        %v1472 = vsel %vm1471, %v1470, %v1422
        %vm1473 = vcmask 1044480
        %v1474 = vsel %vm1473, %v1472, %v1436
        %vm1475 = vcmask 1045504
        %v1476 = vsel %vm1475, %v1474, %v1450
        %vm1477 = vcmask 1046528
        %v1478 = vsel %vm1477, %v1476, %v1464
        %s1479 = scalar_lea.vmem %s365, %s379
        %1480 = vst [vmem:[%s1479] sm:$0xff] %v1478
      $region57: #{ss2d_forward.8} parent=51 // loop_footer
        %s376 = sadd.s32 1, %s372
      $region58: #{ss2d_forward.8} parent=51 // loop_footer_branch
        %371 = sbr.rel target = $region54
      $region59: #{ss2d_forward.8} parent=51 // loop_exit
        _
      %p1481 = scmp.lt.s32.totalorder %s19, 1
      %s1482 = scalar_select %p1481, %s19, 1
      %s1483 = smul.addr %s1482, 8
      %s1484 = smul.addr %s1483, 8
      %s1485 = scalar_lea.vmem %s8, %s1484
      // Predicated region
      $region60: #{ss2d_forward.8} parent=51 // pred_check
        %p1486 = pneg %p225
      $region61: #{ss2d_forward.8} parent=51 // pred_check_branch
        %1488 = sbr.rel (%p1486) target = $region63
      $region62: #{ss2d_forward.8} parent=51 // pred_region
        _
      $region63: #{ss2d_forward.8} parent=51 // pred_fallthru
        _
    $region52: #{ss2d_forward.8} parent=5 // pred_fallthru
      _
    %p1489 = scmp.le.s32.totalorder 2, %s14
    // Predicated region
    $region64: #{ss2d_forward.8} parent=5 // pred_check
      %p1490 = pneg %p1489
    $region65: #{ss2d_forward.8} parent=5 // pred_check_branch
      %1492 = sbr.rel (%p1490) target = $region67
    $region66: #{ss2d_forward.8} parent=5 // pred_region
      %s1493 = ssub.s32 %s14, 2
      // Predicated region
      $region68: #{ss2d_forward.8} parent=66 // pred_check
        %p1494 = pneg %p231
      $region69: #{ss2d_forward.8} parent=66 // pred_check_branch
        %1496 = sbr.rel (%p1494) target = $region71
      $region70: #{ss2d_forward.8} parent=66 // pred_region
        %p1497 = scmp.lt.s32.totalorder %s20, 1
        %s1498 = scalar_select %p1497, %s20, 1
        %s1499 = smul.addr %s1498, 8
        %s1500 = smul.addr %s1499, 8
        %s1501 = scalar_lea.vmem %s8, %s1500
      $region71: #{ss2d_forward.8} parent=66 // pred_fallthru
        _
    $region67: #{ss2d_forward.8} parent=5 // pred_fallthru
      _
  $region6: #{ss2d_forward.8} parent=0 // loop_footer
    %s18 = sadd.s32 1, %s14
  $region7: #{ss2d_forward.8} parent=0 // loop_footer_branch
    %13 = sbr.rel target = $region3
  $region8: #{ss2d_forward.8} parent=0 // loop_exit
    _

</llo_original>
